<compile_context>
chip_gen: v5e
topology: v5e:2x2
jax: 0.10.0
libtpu: 0.0.40
codegen_flags: <defaults>
</compile_context>

<pallas_src>
import jax
import jax.numpy as jnp
from jax import lax
from jax.experimental import pallas as pl
from jax.experimental.pallas import tpu as pltpu

# Sizes implied by the torch module (fc1 expects 45*32 input features).
C_IN, L_IN = 4, 180            # input:  (N, 4, 180)
C1, L1 = 16, 90                # conv1:  k=5, stride=2, circular pad=2
C2, L2 = 32, 45                # conv2:  k=5, stride=2, circular pad=2
C3, L3 = 32, 45                # conv3:  k=5, stride=1, circular pad=2
KSZ = 5
PAD = 2
H = 128                        # fc hidden width
OUT = 2                        # "wheels"
BN_EPS = 1e-5


def _circular_conv_relu(pad_ref, h, w_ref, b_ref, l_in, l_out, stride):
    """One circular Conv1d + bias + ReLU for a single sample.

    h       : (l_in, c_in) f32 value, channels last.
    pad_ref : (l_in + 2*PAD, c_in) f32 VMEM scratch for the circular padding.
    w_ref   : (KSZ, c_in, c_out) f32 tap weights, w_ref[j][ci, co] = w_torch[co, ci, j].
    b_ref   : (1, c_out) f32 bias.
    Returns (l_out, c_out) f32.
    """
    # circular pad: padded[i] = h[(i - PAD) % l_in]
    pad_ref[PAD:PAD + l_in, :] = h
    pad_ref[0:PAD, :] = h[l_in - PAD:l_in, :]
    pad_ref[PAD + l_in:PAD + l_in + PAD, :] = h[0:PAD, :]

    acc = None
    for j in range(KSZ):
        if stride == 1:
            tap = pad_ref[j:j + l_out, :]                    # (l_out, c_in)
        else:
            tap = pad_ref[pl.ds(j, l_out, stride), :]        # strided sublane read
        part = jnp.dot(tap, w_ref[j], preferred_element_type=jnp.float32)
        acc = part if acc is None else acc + part            # first tap seeds the acc
    return jnp.maximum(acc + b_ref[...], 0.0)


def convnet_kernel(x_ref, w1_ref, b1_ref, w2_ref, b2_ref, w3_ref, b3_ref,
                   wf1_ref, bf1_ref, wf2_ref, bf2_ref, wf3_ref, bf3_ref,
                   out_ref, pad1_ref, pad2_ref, pad3_ref, flat_ref):
    n = x_ref.shape[0] // L_IN

    # --- BatchNorm1d, training-mode batch statistics (biased variance). --------
    # gamma/beta were folded into conv1's weights/bias at prep time, so only the
    # standardization happens in-kernel.
    x = x_ref[...]                                           # (N*L_IN, C_IN) f32
    inv = 1.0 / x.shape[0]
    mean = jnp.sum(x, axis=0, keepdims=True) * inv           # (1, C_IN)
    xc = x - mean
    var = jnp.sum(xc * xc, axis=0, keepdims=True) * inv
    rstd = lax.rsqrt(var + BN_EPS)                           # (1, C_IN)

    # --- conv stack, one (tiny) sample at a time; pad scratch is reused. -------
    for i in range(n):
        h = (x_ref[i * L_IN:(i + 1) * L_IN, :] - mean) * rstd          # (L_IN, C_IN)
        h = _circular_conv_relu(pad1_ref, h, w1_ref, b1_ref, L_IN, L1, 2)  # (L1, C1)
        h = _circular_conv_relu(pad2_ref, h, w2_ref, b2_ref, L1, L2, 2)    # (L2, C2)
        h = _circular_conv_relu(pad3_ref, h, w3_ref, b3_ref, L2, L3, 1)    # (L3, C3)
        # Flatten (L3, C3) into lanes t*C3 + c of row i; fc1's columns were
        # permuted at prep time to match (torch flattens channel-major c*L3 + t).
        for t in range(L3):
            flat_ref[i:i + 1, t * C3:(t + 1) * C3] = h[t:t + 1, :]

    # --- fc1 -> fc2 -> fc3 (dropout=0 -> Identity); bf16 weights, f32 accum. ---
    f = flat_ref[...].astype(jnp.bfloat16)                   # (N, L3*C3)
    h1 = jnp.maximum(
        jnp.dot(f, wf1_ref[...], preferred_element_type=jnp.float32)
        + bf1_ref[...], 0.0)                                 # (N, H) f32
    h2 = jnp.maximum(
        jnp.dot(h1.astype(jnp.bfloat16), wf2_ref[...],
                preferred_element_type=jnp.float32) + bf2_ref[...], 0.0)
    out_ref[...] = (
        jnp.dot(h2.astype(jnp.bfloat16), wf3_ref[...],
                preferred_element_type=jnp.float32) + bf3_ref[...])


# ------------------------------- parameters ----------------------------------
def init_params(key):
    ks = jax.random.split(key, 14)

    def rnd(k, shape, scale):
        return scale * jax.random.normal(k, shape, jnp.float32)

    # torch-layout parameters (conv: (C_out, C_in, k); linear: (out, in)).
    return {
        "bn_gamma": 1.0 + 0.1 * jax.random.normal(ks[0], (C_IN,), jnp.float32),
        "bn_beta": rnd(ks[1], (C_IN,), 0.1),
        "w1": rnd(ks[2], (C1, C_IN, KSZ), 0.20), "b1": rnd(ks[3], (C1,), 0.1),
        "w2": rnd(ks[4], (C2, C1, KSZ), 0.10),   "b2": rnd(ks[5], (C2,), 0.1),
        "w3": rnd(ks[6], (C3, C2, KSZ), 0.10),   "b3": rnd(ks[7], (C3,), 0.1),
        "wf1": rnd(ks[8], (H, C3 * L3), 0.05),   "bf1": rnd(ks[9], (H,), 0.05),
        "wf2": rnd(ks[10], (H, H), 0.05),        "bf2": rnd(ks[11], (H,), 0.05),
        "wf3": rnd(ks[12], (OUT, H), 0.05),      "bf3": rnd(ks[13], (OUT,), 0.05),
    }


def prepare_params(p):
    """One-time parameter prep (hoisted out of the per-forward hot path)."""
    w1 = p["w1"].astype(jnp.float32)
    gamma = p["bn_gamma"].astype(jnp.float32)
    beta = p["bn_beta"].astype(jnp.float32)
    # Fold BN's affine into conv1 (conv1 is linear in its input):
    #   conv1(gamma*xhat + beta) = conv1_{w*gamma}(xhat) + bias_shift(w, beta)
    w1_taps = jnp.transpose(w1, (2, 1, 0)) * gamma[None, :, None]     # (K, C_IN, C1)
    b1 = p["b1"] + jnp.einsum("oik,i->o", w1, beta)
    # fc1 columns permuted from torch's c*L3+t flatten to the kernel's t*C3+c.
    wf1 = p["wf1"].T.reshape(C3, L3, H).transpose(1, 0, 2).reshape(L3 * C3, H)
    return {
        "w1": w1_taps,                           "b1": b1[None, :],
        "w2": jnp.transpose(p["w2"], (2, 1, 0)), "b2": p["b2"][None, :],
        "w3": jnp.transpose(p["w3"], (2, 1, 0)), "b3": p["b3"][None, :],
        "wf1": wf1.astype(jnp.bfloat16),         "bf1": p["bf1"][None, :],
        "wf2": p["wf2"].T.astype(jnp.bfloat16),  "bf2": p["bf2"][None, :],
        "wf3": p["wf3"].T.astype(jnp.bfloat16),  "bf3": p["bf3"][None, :],
    }


# -------------------------------- forward ------------------------------------
@jax.jit
def convnet_forward(x, prep):
    n = x.shape[0]
    # NCL -> channels-last, (batch*length, channels) rows (tiny; done once in XLA).
    x2d = jnp.transpose(x.astype(jnp.float32), (0, 2, 1)).reshape(n * L_IN, C_IN)
    args = (x2d,
            prep["w1"], prep["b1"], prep["w2"], prep["b2"], prep["w3"], prep["b3"],
            prep["wf1"], prep["bf1"], prep["wf2"], prep["bf2"],
            prep["wf3"], prep["bf3"])
    vmem = pl.BlockSpec(memory_space=pltpu.MemorySpace.VMEM)
    return pl.pallas_call(
        convnet_kernel,
        out_shape=jax.ShapeDtypeStruct((n, OUT), jnp.float32),
        # Footprint is <1 MiB: no grid (single invocation), whole arrays in VMEM,
        # and no vmem_limit override (the old 100 MiB ask would exceed v7x VMEM).
        in_specs=[vmem] * len(args),
        out_specs=vmem,
        scratch_shapes=[
            pltpu.VMEM((L_IN + 2 * PAD, C_IN), jnp.float32),   # conv1 circular pad
            pltpu.VMEM((L1 + 2 * PAD, C1), jnp.float32),       # conv2 circular pad
            pltpu.VMEM((L2 + 2 * PAD, C2), jnp.float32),       # conv3 circular pad
            pltpu.VMEM((n, L3 * C3), jnp.float32),             # flattened fc input
        ],
    )(*args)


if __name__ == "__main__":
    key = jax.random.PRNGKey(0)
    kx, kp = jax.random.split(key)
    # samples x channels x angles; L=180 is forced by fc1 expecting 45*32 features.
    x = jax.random.normal(kx, (2, C_IN, L_IN), jnp.float32)
    params = init_params(kp)
    prep = prepare_params(params)            # one-time weight prep (not per call)

    out = convnet_forward(x, prep)
    jax.block_until_ready(out)
    assert out.shape == (2, OUT) and out.dtype == jnp.float32
    assert bool(jnp.all(jnp.isfinite(out)))
    print("KERNEL_OK")
</pallas_src>

<mosaic_0001>
module attributes {stable_mosaic.version = 11 : i64} {
  func.func @convnet_kernel(%arg0: memref<360x4xf32, #tpu.memory_space<vmem>>, %arg1: memref<5x4x16xf32, #tpu.memory_space<vmem>>, %arg2: memref<1x16xf32, #tpu.memory_space<vmem>>, %arg3: memref<5x16x32xf32, #tpu.memory_space<vmem>>, %arg4: memref<1x32xf32, #tpu.memory_space<vmem>>, %arg5: memref<5x32x32xf32, #tpu.memory_space<vmem>>, %arg6: memref<1x32xf32, #tpu.memory_space<vmem>>, %arg7: memref<1440x128xbf16, #tpu.memory_space<vmem>>, %arg8: memref<1x128xf32, #tpu.memory_space<vmem>>, %arg9: memref<128x128xbf16, #tpu.memory_space<vmem>>, %arg10: memref<1x128xf32, #tpu.memory_space<vmem>>, %arg11: memref<128x2xbf16, #tpu.memory_space<vmem>>, %arg12: memref<1x2xf32, #tpu.memory_space<vmem>>, %arg13: memref<2x2xf32, #tpu.memory_space<vmem>>, %arg14: memref<184x4xf32, #tpu.memory_space<vmem>>, %arg15: memref<94x16xf32, #tpu.memory_space<vmem>>, %arg16: memref<49x32xf32, #tpu.memory_space<vmem>>, %arg17: memref<2x1440xf32, #tpu.memory_space<vmem>>) attributes {dimension_semantics = [], scalar_prefetch = 0 : i64, scratch_operands = 4 : i64, tpu.core_type = #tpu.core_type<tc>} {
    %c0 = arith.constant 0 : index
    %c0_0 = arith.constant 0 : index
    %0 = vector.load %arg0[%c0, %c0_0] : memref<360x4xf32, #tpu.memory_space<vmem>>, vector<360x4xf32>
    %cst = arith.constant dense<0.000000e+00> : vector<4xf32>
    %1 = vector.multi_reduction <add>, %0, %cst [0] : vector<360x4xf32> to vector<4xf32>
    %2 = vector.shape_cast %1 : vector<4xf32> to vector<1x4xf32>
    %cst_1 = arith.constant 0.00277777785 : f32
    %3 = vector.broadcast %cst_1 : f32 to vector<1x4xf32>
    %4 = arith.mulf %2, %3 : vector<1x4xf32>
    %5 = vector.broadcast %4 : vector<1x4xf32> to vector<360x4xf32>
    %6 = arith.subf %0, %5 : vector<360x4xf32>
    %7 = arith.mulf %6, %6 : vector<360x4xf32>
    %cst_2 = arith.constant dense<0.000000e+00> : vector<4xf32>
    %8 = vector.multi_reduction <add>, %7, %cst_2 [0] : vector<360x4xf32> to vector<4xf32>
    %9 = vector.shape_cast %8 : vector<4xf32> to vector<1x4xf32>
    %cst_3 = arith.constant 0.00277777785 : f32
    %10 = vector.broadcast %cst_3 : f32 to vector<1x4xf32>
    %11 = arith.mulf %9, %10 : vector<1x4xf32>
    %cst_4 = arith.constant 9.99999974E-6 : f32
    %12 = vector.broadcast %cst_4 : f32 to vector<1x4xf32>
    %13 = arith.addf %11, %12 : vector<1x4xf32>
    %14 = math.rsqrt %13 : vector<1x4xf32>
    %c0_5 = arith.constant 0 : index
    %c0_6 = arith.constant 0 : index
    %15 = vector.load %arg0[%c0_5, %c0_6] : memref<360x4xf32, #tpu.memory_space<vmem>>, vector<180x4xf32>
    %16 = vector.broadcast %4 : vector<1x4xf32> to vector<180x4xf32>
    %17 = arith.subf %15, %16 : vector<180x4xf32>
    %18 = vector.broadcast %14 : vector<1x4xf32> to vector<180x4xf32>
    %19 = arith.mulf %17, %18 : vector<180x4xf32>
    %c2 = arith.constant 2 : index
    %c0_7 = arith.constant 0 : index
    %20 = vector.load %arg14[%c2, %c0_7] : memref<184x4xf32, #tpu.memory_space<vmem>>, vector<180x4xf32>
    tpu.vector_store %arg14[%c2, %c0_7], %19 {strides = array<i32>} : memref<184x4xf32, #tpu.memory_space<vmem>>, vector<180x4xf32>,
    %21 = vector.extract_strided_slice %19 {offsets = [178, 0], sizes = [2, 4], strides = [1, 1]} : vector<180x4xf32> to vector<2x4xf32>
    %c0_8 = arith.constant 0 : index
    %c0_9 = arith.constant 0 : index
    %22 = vector.load %arg14[%c0_8, %c0_9] : memref<184x4xf32, #tpu.memory_space<vmem>>, vector<2x4xf32>
    tpu.vector_store %arg14[%c0_8, %c0_9], %21 {strides = array<i32>} : memref<184x4xf32, #tpu.memory_space<vmem>>, vector<2x4xf32>,
    %23 = vector.extract_strided_slice %19 {offsets = [0, 0], sizes = [2, 4], strides = [1, 1]} : vector<180x4xf32> to vector<2x4xf32>
    %c182 = arith.constant 182 : index
    %c0_10 = arith.constant 0 : index
    %24 = vector.load %arg14[%c182, %c0_10] : memref<184x4xf32, #tpu.memory_space<vmem>>, vector<2x4xf32>
    tpu.vector_store %arg14[%c182, %c0_10], %23 {strides = array<i32>} : memref<184x4xf32, #tpu.memory_space<vmem>>, vector<2x4xf32>,
    %c0_11 = arith.constant 0 : index
    %c0_12 = arith.constant 0 : index
    %25 = tpu.strided_load %arg14[%c0_11, %c0_12] {strides = array<i32: 2, 1>} : memref<184x4xf32, #tpu.memory_space<vmem>>, vector<90x4xf32>
    %c0_13 = arith.constant 0 : index
    %c0_14 = arith.constant 0 : index
    %c0_15 = arith.constant 0 : index
    %26 = vector.load %arg1[%c0_13, %c0_14, %c0_15] : memref<5x4x16xf32, #tpu.memory_space<vmem>>, vector<1x4x16xf32>
    %27 = vector.shape_cast %26 : vector<1x4x16xf32> to vector<4x16xf32>
    %cst_16 = arith.constant dense<0.000000e+00> : vector<90x16xf32>
    %28 = tpu.matmul %25, %27, %cst_16 {dimension_numbers = #tpu.dot_dimension_numbers<[1], [0], [0], [1], [0, 0, 1, 1], [], []>} : vector<90x4xf32>, vector<4x16xf32>, vector<90x16xf32> -> vector<90x16xf32>
    %c1 = arith.constant 1 : index
    %c0_17 = arith.constant 0 : index
    %29 = tpu.strided_load %arg14[%c1, %c0_17] {strides = array<i32: 2, 1>} : memref<184x4xf32, #tpu.memory_space<vmem>>, vector<90x4xf32>
    %c1_18 = arith.constant 1 : index
    %c0_19 = arith.constant 0 : index
    %c0_20 = arith.constant 0 : index
    %30 = vector.load %arg1[%c1_18, %c0_19, %c0_20] : memref<5x4x16xf32, #tpu.memory_space<vmem>>, vector<1x4x16xf32>
    %31 = vector.shape_cast %30 : vector<1x4x16xf32> to vector<4x16xf32>
    %cst_21 = arith.constant dense<0.000000e+00> : vector<90x16xf32>
    %32 = tpu.matmul %29, %31, %cst_21 {dimension_numbers = #tpu.dot_dimension_numbers<[1], [0], [0], [1], [0, 0, 1, 1], [], []>} : vector<90x4xf32>, vector<4x16xf32>, vector<90x16xf32> -> vector<90x16xf32>
    %33 = arith.addf %28, %32 : vector<90x16xf32>
    %c2_22 = arith.constant 2 : index
    %c0_23 = arith.constant 0 : index
    %34 = tpu.strided_load %arg14[%c2_22, %c0_23] {strides = array<i32: 2, 1>} : memref<184x4xf32, #tpu.memory_space<vmem>>, vector<90x4xf32>
    %c2_24 = arith.constant 2 : index
    %c0_25 = arith.constant 0 : index
    %c0_26 = arith.constant 0 : index
    %35 = vector.load %arg1[%c2_24, %c0_25, %c0_26] : memref<5x4x16xf32, #tpu.memory_space<vmem>>, vector<1x4x16xf32>
    %36 = vector.shape_cast %35 : vector<1x4x16xf32> to vector<4x16xf32>
    %cst_27 = arith.constant dense<0.000000e+00> : vector<90x16xf32>
    %37 = tpu.matmul %34, %36, %cst_27 {dimension_numbers = #tpu.dot_dimension_numbers<[1], [0], [0], [1], [0, 0, 1, 1], [], []>} : vector<90x4xf32>, vector<4x16xf32>, vector<90x16xf32> -> vector<90x16xf32>
    %38 = arith.addf %33, %37 : vector<90x16xf32>
    %c3 = arith.constant 3 : index
    %c0_28 = arith.constant 0 : index
    %39 = tpu.strided_load %arg14[%c3, %c0_28] {strides = array<i32: 2, 1>} : memref<184x4xf32, #tpu.memory_space<vmem>>, vector<90x4xf32>
    %c3_29 = arith.constant 3 : index
    %c0_30 = arith.constant 0 : index
    %c0_31 = arith.constant 0 : index
    %40 = vector.load %arg1[%c3_29, %c0_30, %c0_31] : memref<5x4x16xf32, #tpu.memory_space<vmem>>, vector<1x4x16xf32>
    %41 = vector.shape_cast %40 : vector<1x4x16xf32> to vector<4x16xf32>
    %cst_32 = arith.constant dense<0.000000e+00> : vector<90x16xf32>
    %42 = tpu.matmul %39, %41, %cst_32 {dimension_numbers = #tpu.dot_dimension_numbers<[1], [0], [0], [1], [0, 0, 1, 1], [], []>} : vector<90x4xf32>, vector<4x16xf32>, vector<90x16xf32> -> vector<90x16xf32>
    %43 = arith.addf %38, %42 : vector<90x16xf32>
    %c4 = arith.constant 4 : index
    %c0_33 = arith.constant 0 : index
    %44 = tpu.strided_load %arg14[%c4, %c0_33] {strides = array<i32: 2, 1>} : memref<184x4xf32, #tpu.memory_space<vmem>>, vector<90x4xf32>
    %c4_34 = arith.constant 4 : index
    %c0_35 = arith.constant 0 : index
    %c0_36 = arith.constant 0 : index
    %45 = vector.load %arg1[%c4_34, %c0_35, %c0_36] : memref<5x4x16xf32, #tpu.memory_space<vmem>>, vector<1x4x16xf32>
    %46 = vector.shape_cast %45 : vector<1x4x16xf32> to vector<4x16xf32>
    %cst_37 = arith.constant dense<0.000000e+00> : vector<90x16xf32>
    %47 = tpu.matmul %44, %46, %cst_37 {dimension_numbers = #tpu.dot_dimension_numbers<[1], [0], [0], [1], [0, 0, 1, 1], [], []>} : vector<90x4xf32>, vector<4x16xf32>, vector<90x16xf32> -> vector<90x16xf32>
    %48 = arith.addf %43, %47 : vector<90x16xf32>
    %c0_38 = arith.constant 0 : index
    %c0_39 = arith.constant 0 : index
    %49 = vector.load %arg2[%c0_38, %c0_39] : memref<1x16xf32, #tpu.memory_space<vmem>>, vector<1x16xf32>
    %50 = vector.broadcast %49 : vector<1x16xf32> to vector<90x16xf32>
    %51 = arith.addf %48, %50 : vector<90x16xf32>
    %cst_40 = arith.constant 0.000000e+00 : f32
    %52 = vector.broadcast %cst_40 : f32 to vector<90x16xf32>
    %53 = arith.maximumf %51, %52 : vector<90x16xf32>
    %c2_41 = arith.constant 2 : index
    %c0_42 = arith.constant 0 : index
    %54 = vector.load %arg15[%c2_41, %c0_42] : memref<94x16xf32, #tpu.memory_space<vmem>>, vector<90x16xf32>
    tpu.vector_store %arg15[%c2_41, %c0_42], %53 {strides = array<i32>} : memref<94x16xf32, #tpu.memory_space<vmem>>, vector<90x16xf32>,
    %55 = vector.extract_strided_slice %53 {offsets = [88, 0], sizes = [2, 16], strides = [1, 1]} : vector<90x16xf32> to vector<2x16xf32>
    %c0_43 = arith.constant 0 : index
    %c0_44 = arith.constant 0 : index
    %56 = vector.load %arg15[%c0_43, %c0_44] : memref<94x16xf32, #tpu.memory_space<vmem>>, vector<2x16xf32>
    tpu.vector_store %arg15[%c0_43, %c0_44], %55 {strides = array<i32>} : memref<94x16xf32, #tpu.memory_space<vmem>>, vector<2x16xf32>,
    %57 = vector.extract_strided_slice %53 {offsets = [0, 0], sizes = [2, 16], strides = [1, 1]} : vector<90x16xf32> to vector<2x16xf32>
    %c92 = arith.constant 92 : index
    %c0_45 = arith.constant 0 : index
    %58 = vector.load %arg15[%c92, %c0_45] : memref<94x16xf32, #tpu.memory_space<vmem>>, vector<2x16xf32>
    tpu.vector_store %arg15[%c92, %c0_45], %57 {strides = array<i32>} : memref<94x16xf32, #tpu.memory_space<vmem>>, vector<2x16xf32>,
    %c0_46 = arith.constant 0 : index
    %c0_47 = arith.constant 0 : index
    %59 = tpu.strided_load %arg15[%c0_46, %c0_47] {strides = array<i32: 2, 1>} : memref<94x16xf32, #tpu.memory_space<vmem>>, vector<45x16xf32>
    %c0_48 = arith.constant 0 : index
    %c0_49 = arith.constant 0 : index
    %c0_50 = arith.constant 0 : index
    %60 = vector.load %arg3[%c0_48, %c0_49, %c0_50] : memref<5x16x32xf32, #tpu.memory_space<vmem>>, vector<1x16x32xf32>
    %61 = vector.shape_cast %60 : vector<1x16x32xf32> to vector<16x32xf32>
    %cst_51 = arith.constant dense<0.000000e+00> : vector<45x32xf32>
    %62 = tpu.matmul %59, %61, %cst_51 {dimension_numbers = #tpu.dot_dimension_numbers<[1], [0], [0], [1], [0, 0, 1, 1], [], []>} : vector<45x16xf32>, vector<16x32xf32>, vector<45x32xf32> -> vector<45x32xf32>
    %c1_52 = arith.constant 1 : index
    %c0_53 = arith.constant 0 : index
    %63 = tpu.strided_load %arg15[%c1_52, %c0_53] {strides = array<i32: 2, 1>} : memref<94x16xf32, #tpu.memory_space<vmem>>, vector<45x16xf32>
    %c1_54 = arith.constant 1 : index
    %c0_55 = arith.constant 0 : index
    %c0_56 = arith.constant 0 : index
    %64 = vector.load %arg3[%c1_54, %c0_55, %c0_56] : memref<5x16x32xf32, #tpu.memory_space<vmem>>, vector<1x16x32xf32>
    %65 = vector.shape_cast %64 : vector<1x16x32xf32> to vector<16x32xf32>
    %cst_57 = arith.constant dense<0.000000e+00> : vector<45x32xf32>
    %66 = tpu.matmul %63, %65, %cst_57 {dimension_numbers = #tpu.dot_dimension_numbers<[1], [0], [0], [1], [0, 0, 1, 1], [], []>} : vector<45x16xf32>, vector<16x32xf32>, vector<45x32xf32> -> vector<45x32xf32>
    %67 = arith.addf %62, %66 : vector<45x32xf32>
    %c2_58 = arith.constant 2 : index
    %c0_59 = arith.constant 0 : index
    %68 = tpu.strided_load %arg15[%c2_58, %c0_59] {strides = array<i32: 2, 1>} : memref<94x16xf32, #tpu.memory_space<vmem>>, vector<45x16xf32>
    %c2_60 = arith.constant 2 : index
    %c0_61 = arith.constant 0 : index
    %c0_62 = arith.constant 0 : index
    %69 = vector.load %arg3[%c2_60, %c0_61, %c0_62] : memref<5x16x32xf32, #tpu.memory_space<vmem>>, vector<1x16x32xf32>
    %70 = vector.shape_cast %69 : vector<1x16x32xf32> to vector<16x32xf32>
    %cst_63 = arith.constant dense<0.000000e+00> : vector<45x32xf32>
    %71 = tpu.matmul %68, %70, %cst_63 {dimension_numbers = #tpu.dot_dimension_numbers<[1], [0], [0], [1], [0, 0, 1, 1], [], []>} : vector<45x16xf32>, vector<16x32xf32>, vector<45x32xf32> -> vector<45x32xf32>
    %72 = arith.addf %67, %71 : vector<45x32xf32>
    %c3_64 = arith.constant 3 : index
    %c0_65 = arith.constant 0 : index
    %73 = tpu.strided_load %arg15[%c3_64, %c0_65] {strides = array<i32: 2, 1>} : memref<94x16xf32, #tpu.memory_space<vmem>>, vector<45x16xf32>
    %c3_66 = arith.constant 3 : index
    %c0_67 = arith.constant 0 : index
    %c0_68 = arith.constant 0 : index
    %74 = vector.load %arg3[%c3_66, %c0_67, %c0_68] : memref<5x16x32xf32, #tpu.memory_space<vmem>>, vector<1x16x32xf32>
    %75 = vector.shape_cast %74 : vector<1x16x32xf32> to vector<16x32xf32>
    %cst_69 = arith.constant dense<0.000000e+00> : vector<45x32xf32>
    %76 = tpu.matmul %73, %75, %cst_69 {dimension_numbers = #tpu.dot_dimension_numbers<[1], [0], [0], [1], [0, 0, 1, 1], [], []>} : vector<45x16xf32>, vector<16x32xf32>, vector<45x32xf32> -> vector<45x32xf32>
    %77 = arith.addf %72, %76 : vector<45x32xf32>
    %c4_70 = arith.constant 4 : index
    %c0_71 = arith.constant 0 : index
    %78 = tpu.strided_load %arg15[%c4_70, %c0_71] {strides = array<i32: 2, 1>} : memref<94x16xf32, #tpu.memory_space<vmem>>, vector<45x16xf32>
    %c4_72 = arith.constant 4 : index
    %c0_73 = arith.constant 0 : index
    %c0_74 = arith.constant 0 : index
    %79 = vector.load %arg3[%c4_72, %c0_73, %c0_74] : memref<5x16x32xf32, #tpu.memory_space<vmem>>, vector<1x16x32xf32>
    %80 = vector.shape_cast %79 : vector<1x16x32xf32> to vector<16x32xf32>
    %cst_75 = arith.constant dense<0.000000e+00> : vector<45x32xf32>
    %81 = tpu.matmul %78, %80, %cst_75 {dimension_numbers = #tpu.dot_dimension_numbers<[1], [0], [0], [1], [0, 0, 1, 1], [], []>} : vector<45x16xf32>, vector<16x32xf32>, vector<45x32xf32> -> vector<45x32xf32>
    %82 = arith.addf %77, %81 : vector<45x32xf32>
    %c0_76 = arith.constant 0 : index
    %c0_77 = arith.constant 0 : index
    %83 = vector.load %arg4[%c0_76, %c0_77] : memref<1x32xf32, #tpu.memory_space<vmem>>, vector<1x32xf32>
    %84 = vector.broadcast %83 : vector<1x32xf32> to vector<45x32xf32>
    %85 = arith.addf %82, %84 : vector<45x32xf32>
    %cst_78 = arith.constant 0.000000e+00 : f32
    %86 = vector.broadcast %cst_78 : f32 to vector<45x32xf32>
    %87 = arith.maximumf %85, %86 : vector<45x32xf32>
    %c2_79 = arith.constant 2 : index
    %c0_80 = arith.constant 0 : index
    %88 = vector.load %arg16[%c2_79, %c0_80] : memref<49x32xf32, #tpu.memory_space<vmem>>, vector<45x32xf32>
    tpu.vector_store %arg16[%c2_79, %c0_80], %87 {strides = array<i32>} : memref<49x32xf32, #tpu.memory_space<vmem>>, vector<45x32xf32>,
    %89 = vector.extract_strided_slice %87 {offsets = [43, 0], sizes = [2, 32], strides = [1, 1]} : vector<45x32xf32> to vector<2x32xf32>
    %c0_81 = arith.constant 0 : index
    %c0_82 = arith.constant 0 : index
    %90 = vector.load %arg16[%c0_81, %c0_82] : memref<49x32xf32, #tpu.memory_space<vmem>>, vector<2x32xf32>
    tpu.vector_store %arg16[%c0_81, %c0_82], %89 {strides = array<i32>} : memref<49x32xf32, #tpu.memory_space<vmem>>, vector<2x32xf32>,
    %91 = vector.extract_strided_slice %87 {offsets = [0, 0], sizes = [2, 32], strides = [1, 1]} : vector<45x32xf32> to vector<2x32xf32>
    %c47 = arith.constant 47 : index
    %c0_83 = arith.constant 0 : index
    %92 = vector.load %arg16[%c47, %c0_83] : memref<49x32xf32, #tpu.memory_space<vmem>>, vector<2x32xf32>
    tpu.vector_store %arg16[%c47, %c0_83], %91 {strides = array<i32>} : memref<49x32xf32, #tpu.memory_space<vmem>>, vector<2x32xf32>,
    %c0_84 = arith.constant 0 : index
    %c0_85 = arith.constant 0 : index
    %93 = vector.load %arg16[%c0_84, %c0_85] : memref<49x32xf32, #tpu.memory_space<vmem>>, vector<45x32xf32>
    %c0_86 = arith.constant 0 : index
    %c0_87 = arith.constant 0 : index
    %c0_88 = arith.constant 0 : index
    %94 = vector.load %arg5[%c0_86, %c0_87, %c0_88] : memref<5x32x32xf32, #tpu.memory_space<vmem>>, vector<1x32x32xf32>
    %95 = vector.shape_cast %94 : vector<1x32x32xf32> to vector<32x32xf32>
    %cst_89 = arith.constant dense<0.000000e+00> : vector<45x32xf32>
    %96 = tpu.matmul %93, %95, %cst_89 {dimension_numbers = #tpu.dot_dimension_numbers<[1], [0], [0], [1], [0, 0, 1, 1], [], []>} : vector<45x32xf32>, vector<32x32xf32>, vector<45x32xf32> -> vector<45x32xf32>
    %c1_90 = arith.constant 1 : index
    %c0_91 = arith.constant 0 : index
    %97 = vector.load %arg16[%c1_90, %c0_91] : memref<49x32xf32, #tpu.memory_space<vmem>>, vector<45x32xf32>
    %c1_92 = arith.constant 1 : index
    %c0_93 = arith.constant 0 : index
    %c0_94 = arith.constant 0 : index
    %98 = vector.load %arg5[%c1_92, %c0_93, %c0_94] : memref<5x32x32xf32, #tpu.memory_space<vmem>>, vector<1x32x32xf32>
    %99 = vector.shape_cast %98 : vector<1x32x32xf32> to vector<32x32xf32>
    %cst_95 = arith.constant dense<0.000000e+00> : vector<45x32xf32>
    %100 = tpu.matmul %97, %99, %cst_95 {dimension_numbers = #tpu.dot_dimension_numbers<[1], [0], [0], [1], [0, 0, 1, 1], [], []>} : vector<45x32xf32>, vector<32x32xf32>, vector<45x32xf32> -> vector<45x32xf32>
    %101 = arith.addf %96, %100 : vector<45x32xf32>
    %c2_96 = arith.constant 2 : index
    %c0_97 = arith.constant 0 : index
    %102 = vector.load %arg16[%c2_96, %c0_97] : memref<49x32xf32, #tpu.memory_space<vmem>>, vector<45x32xf32>
    %c2_98 = arith.constant 2 : index
    %c0_99 = arith.constant 0 : index
    %c0_100 = arith.constant 0 : index
    %103 = vector.load %arg5[%c2_98, %c0_99, %c0_100] : memref<5x32x32xf32, #tpu.memory_space<vmem>>, vector<1x32x32xf32>
    %104 = vector.shape_cast %103 : vector<1x32x32xf32> to vector<32x32xf32>
    %cst_101 = arith.constant dense<0.000000e+00> : vector<45x32xf32>
    %105 = tpu.matmul %102, %104, %cst_101 {dimension_numbers = #tpu.dot_dimension_numbers<[1], [0], [0], [1], [0, 0, 1, 1], [], []>} : vector<45x32xf32>, vector<32x32xf32>, vector<45x32xf32> -> vector<45x32xf32>
    %106 = arith.addf %101, %105 : vector<45x32xf32>
    %c3_102 = arith.constant 3 : index
    %c0_103 = arith.constant 0 : index
    %107 = vector.load %arg16[%c3_102, %c0_103] : memref<49x32xf32, #tpu.memory_space<vmem>>, vector<45x32xf32>
    %c3_104 = arith.constant 3 : index
    %c0_105 = arith.constant 0 : index
    %c0_106 = arith.constant 0 : index
    %108 = vector.load %arg5[%c3_104, %c0_105, %c0_106] : memref<5x32x32xf32, #tpu.memory_space<vmem>>, vector<1x32x32xf32>
    %109 = vector.shape_cast %108 : vector<1x32x32xf32> to vector<32x32xf32>
    %cst_107 = arith.constant dense<0.000000e+00> : vector<45x32xf32>
    %110 = tpu.matmul %107, %109, %cst_107 {dimension_numbers = #tpu.dot_dimension_numbers<[1], [0], [0], [1], [0, 0, 1, 1], [], []>} : vector<45x32xf32>, vector<32x32xf32>, vector<45x32xf32> -> vector<45x32xf32>
    %111 = arith.addf %106, %110 : vector<45x32xf32>
    %c4_108 = arith.constant 4 : index
    %c0_109 = arith.constant 0 : index
    %112 = vector.load %arg16[%c4_108, %c0_109] : memref<49x32xf32, #tpu.memory_space<vmem>>, vector<45x32xf32>
    %c4_110 = arith.constant 4 : index
    %c0_111 = arith.constant 0 : index
    %c0_112 = arith.constant 0 : index
    %113 = vector.load %arg5[%c4_110, %c0_111, %c0_112] : memref<5x32x32xf32, #tpu.memory_space<vmem>>, vector<1x32x32xf32>
    %114 = vector.shape_cast %113 : vector<1x32x32xf32> to vector<32x32xf32>
    %cst_113 = arith.constant dense<0.000000e+00> : vector<45x32xf32>
    %115 = tpu.matmul %112, %114, %cst_113 {dimension_numbers = #tpu.dot_dimension_numbers<[1], [0], [0], [1], [0, 0, 1, 1], [], []>} : vector<45x32xf32>, vector<32x32xf32>, vector<45x32xf32> -> vector<45x32xf32>
    %116 = arith.addf %111, %115 : vector<45x32xf32>
    %c0_114 = arith.constant 0 : index
    %c0_115 = arith.constant 0 : index
    %117 = vector.load %arg6[%c0_114, %c0_115] : memref<1x32xf32, #tpu.memory_space<vmem>>, vector<1x32xf32>
    %118 = vector.broadcast %117 : vector<1x32xf32> to vector<45x32xf32>
    %119 = arith.addf %116, %118 : vector<45x32xf32>
    %cst_116 = arith.constant 0.000000e+00 : f32
    %120 = vector.broadcast %cst_116 : f32 to vector<45x32xf32>
    %121 = arith.maximumf %119, %120 : vector<45x32xf32>
    %122 = vector.extract_strided_slice %121 {offsets = [0, 0], sizes = [1, 32], strides = [1, 1]} : vector<45x32xf32> to vector<1x32xf32>
    %c0_117 = arith.constant 0 : index
    %c0_118 = arith.constant 0 : index
    %123 = vector.load %arg17[%c0_117, %c0_118] : memref<2x1440xf32, #tpu.memory_space<vmem>>, vector<1x32xf32>
    tpu.vector_store %arg17[%c0_117, %c0_118], %122 {strides = array<i32>} : memref<2x1440xf32, #tpu.memory_space<vmem>>, vector<1x32xf32>,
    %124 = vector.extract_strided_slice %121 {offsets = [1, 0], sizes = [1, 32], strides = [1, 1]} : vector<45x32xf32> to vector<1x32xf32>
    %c0_119 = arith.constant 0 : index
    %c32 = arith.constant 32 : index
    %125 = vector.load %arg17[%c0_119, %c32] : memref<2x1440xf32, #tpu.memory_space<vmem>>, vector<1x32xf32>
    tpu.vector_store %arg17[%c0_119, %c32], %124 {strides = array<i32>} : memref<2x1440xf32, #tpu.memory_space<vmem>>, vector<1x32xf32>,
    %126 = vector.extract_strided_slice %121 {offsets = [2, 0], sizes = [1, 32], strides = [1, 1]} : vector<45x32xf32> to vector<1x32xf32>
    %c0_120 = arith.constant 0 : index
    %c64 = arith.constant 64 : index
    %127 = vector.load %arg17[%c0_120, %c64] : memref<2x1440xf32, #tpu.memory_space<vmem>>, vector<1x32xf32>
    tpu.vector_store %arg17[%c0_120, %c64], %126 {strides = array<i32>} : memref<2x1440xf32, #tpu.memory_space<vmem>>, vector<1x32xf32>,
    %128 = vector.extract_strided_slice %121 {offsets = [3, 0], sizes = [1, 32], strides = [1, 1]} : vector<45x32xf32> to vector<1x32xf32>
    %c0_121 = arith.constant 0 : index
    %c96 = arith.constant 96 : index
    %129 = vector.load %arg17[%c0_121, %c96] : memref<2x1440xf32, #tpu.memory_space<vmem>>, vector<1x32xf32>
    tpu.vector_store %arg17[%c0_121, %c96], %128 {strides = array<i32>} : memref<2x1440xf32, #tpu.memory_space<vmem>>, vector<1x32xf32>,
    %130 = vector.extract_strided_slice %121 {offsets = [4, 0], sizes = [1, 32], strides = [1, 1]} : vector<45x32xf32> to vector<1x32xf32>
    %c0_122 = arith.constant 0 : index
    %c128 = arith.constant 128 : index
    %131 = vector.load %arg17[%c0_122, %c128] : memref<2x1440xf32, #tpu.memory_space<vmem>>, vector<1x32xf32>
    tpu.vector_store %arg17[%c0_122, %c128], %130 {strides = array<i32>} : memref<2x1440xf32, #tpu.memory_space<vmem>>, vector<1x32xf32>,
    %132 = vector.extract_strided_slice %121 {offsets = [5, 0], sizes = [1, 32], strides = [1, 1]} : vector<45x32xf32> to vector<1x32xf32>
    %c0_123 = arith.constant 0 : index
    %c160 = arith.constant 160 : index
    %133 = vector.load %arg17[%c0_123, %c160] : memref<2x1440xf32, #tpu.memory_space<vmem>>, vector<1x32xf32>
    tpu.vector_store %arg17[%c0_123, %c160], %132 {strides = array<i32>} : memref<2x1440xf32, #tpu.memory_space<vmem>>, vector<1x32xf32>,
    %134 = vector.extract_strided_slice %121 {offsets = [6, 0], sizes = [1, 32], strides = [1, 1]} : vector<45x32xf32> to vector<1x32xf32>
    %c0_124 = arith.constant 0 : index
    %c192 = arith.constant 192 : index
    %135 = vector.load %arg17[%c0_124, %c192] : memref<2x1440xf32, #tpu.memory_space<vmem>>, vector<1x32xf32>
    tpu.vector_store %arg17[%c0_124, %c192], %134 {strides = array<i32>} : memref<2x1440xf32, #tpu.memory_space<vmem>>, vector<1x32xf32>,
    %136 = vector.extract_strided_slice %121 {offsets = [7, 0], sizes = [1, 32], strides = [1, 1]} : vector<45x32xf32> to vector<1x32xf32>
    %c0_125 = arith.constant 0 : index
    %c224 = arith.constant 224 : index
    %137 = vector.load %arg17[%c0_125, %c224] : memref<2x1440xf32, #tpu.memory_space<vmem>>, vector<1x32xf32>
    tpu.vector_store %arg17[%c0_125, %c224], %136 {strides = array<i32>} : memref<2x1440xf32, #tpu.memory_space<vmem>>, vector<1x32xf32>,
    %138 = vector.extract_strided_slice %121 {offsets = [8, 0], sizes = [1, 32], strides = [1, 1]} : vector<45x32xf32> to vector<1x32xf32>
    %c0_126 = arith.constant 0 : index
    %c256 = arith.constant 256 : index
    %139 = vector.load %arg17[%c0_126, %c256] : memref<2x1440xf32, #tpu.memory_space<vmem>>, vector<1x32xf32>
    tpu.vector_store %arg17[%c0_126, %c256], %138 {strides = array<i32>} : memref<2x1440xf32, #tpu.memory_space<vmem>>, vector<1x32xf32>,
    %140 = vector.extract_strided_slice %121 {offsets = [9, 0], sizes = [1, 32], strides = [1, 1]} : vector<45x32xf32> to vector<1x32xf32>
    %c0_127 = arith.constant 0 : index
    %c288 = arith.constant 288 : index
    %141 = vector.load %arg17[%c0_127, %c288] : memref<2x1440xf32, #tpu.memory_space<vmem>>, vector<1x32xf32>
    tpu.vector_store %arg17[%c0_127, %c288], %140 {strides = array<i32>} : memref<2x1440xf32, #tpu.memory_space<vmem>>, vector<1x32xf32>,
    %142 = vector.extract_strided_slice %121 {offsets = [10, 0], sizes = [1, 32], strides = [1, 1]} : vector<45x32xf32> to vector<1x32xf32>
    %c0_128 = arith.constant 0 : index
    %c320 = arith.constant 320 : index
    %143 = vector.load %arg17[%c0_128, %c320] : memref<2x1440xf32, #tpu.memory_space<vmem>>, vector<1x32xf32>
    tpu.vector_store %arg17[%c0_128, %c320], %142 {strides = array<i32>} : memref<2x1440xf32, #tpu.memory_space<vmem>>, vector<1x32xf32>,
    %144 = vector.extract_strided_slice %121 {offsets = [11, 0], sizes = [1, 32], strides = [1, 1]} : vector<45x32xf32> to vector<1x32xf32>
    %c0_129 = arith.constant 0 : index
    %c352 = arith.constant 352 : index
    %145 = vector.load %arg17[%c0_129, %c352] : memref<2x1440xf32, #tpu.memory_space<vmem>>, vector<1x32xf32>
    tpu.vector_store %arg17[%c0_129, %c352], %144 {strides = array<i32>} : memref<2x1440xf32, #tpu.memory_space<vmem>>, vector<1x32xf32>,
    %146 = vector.extract_strided_slice %121 {offsets = [12, 0], sizes = [1, 32], strides = [1, 1]} : vector<45x32xf32> to vector<1x32xf32>
    %c0_130 = arith.constant 0 : index
    %c384 = arith.constant 384 : index
    %147 = vector.load %arg17[%c0_130, %c384] : memref<2x1440xf32, #tpu.memory_space<vmem>>, vector<1x32xf32>
    tpu.vector_store %arg17[%c0_130, %c384], %146 {strides = array<i32>} : memref<2x1440xf32, #tpu.memory_space<vmem>>, vector<1x32xf32>,
    %148 = vector.extract_strided_slice %121 {offsets = [13, 0], sizes = [1, 32], strides = [1, 1]} : vector<45x32xf32> to vector<1x32xf32>
    %c0_131 = arith.constant 0 : index
    %c416 = arith.constant 416 : index
    %149 = vector.load %arg17[%c0_131, %c416] : memref<2x1440xf32, #tpu.memory_space<vmem>>, vector<1x32xf32>
    tpu.vector_store %arg17[%c0_131, %c416], %148 {strides = array<i32>} : memref<2x1440xf32, #tpu.memory_space<vmem>>, vector<1x32xf32>,
    %150 = vector.extract_strided_slice %121 {offsets = [14, 0], sizes = [1, 32], strides = [1, 1]} : vector<45x32xf32> to vector<1x32xf32>
    %c0_132 = arith.constant 0 : index
    %c448 = arith.constant 448 : index
    %151 = vector.load %arg17[%c0_132, %c448] : memref<2x1440xf32, #tpu.memory_space<vmem>>, vector<1x32xf32>
    tpu.vector_store %arg17[%c0_132, %c448], %150 {strides = array<i32>} : memref<2x1440xf32, #tpu.memory_space<vmem>>, vector<1x32xf32>,
    %152 = vector.extract_strided_slice %121 {offsets = [15, 0], sizes = [1, 32], strides = [1, 1]} : vector<45x32xf32> to vector<1x32xf32>
    %c0_133 = arith.constant 0 : index
    %c480 = arith.constant 480 : index
    %153 = vector.load %arg17[%c0_133, %c480] : memref<2x1440xf32, #tpu.memory_space<vmem>>, vector<1x32xf32>
    tpu.vector_store %arg17[%c0_133, %c480], %152 {strides = array<i32>} : memref<2x1440xf32, #tpu.memory_space<vmem>>, vector<1x32xf32>,
    %154 = vector.extract_strided_slice %121 {offsets = [16, 0], sizes = [1, 32], strides = [1, 1]} : vector<45x32xf32> to vector<1x32xf32>
    %c0_134 = arith.constant 0 : index
    %c512 = arith.constant 512 : index
    %155 = vector.load %arg17[%c0_134, %c512] : memref<2x1440xf32, #tpu.memory_space<vmem>>, vector<1x32xf32>
    tpu.vector_store %arg17[%c0_134, %c512], %154 {strides = array<i32>} : memref<2x1440xf32, #tpu.memory_space<vmem>>, vector<1x32xf32>,
    %156 = vector.extract_strided_slice %121 {offsets = [17, 0], sizes = [1, 32], strides = [1, 1]} : vector<45x32xf32> to vector<1x32xf32>
    %c0_135 = arith.constant 0 : index
    %c544 = arith.constant 544 : index
    %157 = vector.load %arg17[%c0_135, %c544] : memref<2x1440xf32, #tpu.memory_space<vmem>>, vector<1x32xf32>
    tpu.vector_store %arg17[%c0_135, %c544], %156 {strides = array<i32>} : memref<2x1440xf32, #tpu.memory_space<vmem>>, vector<1x32xf32>,
    %158 = vector.extract_strided_slice %121 {offsets = [18, 0], sizes = [1, 32], strides = [1, 1]} : vector<45x32xf32> to vector<1x32xf32>
    %c0_136 = arith.constant 0 : index
    %c576 = arith.constant 576 : index
    %159 = vector.load %arg17[%c0_136, %c576] : memref<2x1440xf32, #tpu.memory_space<vmem>>, vector<1x32xf32>
    tpu.vector_store %arg17[%c0_136, %c576], %158 {strides = array<i32>} : memref<2x1440xf32, #tpu.memory_space<vmem>>, vector<1x32xf32>,
    %160 = vector.extract_strided_slice %121 {offsets = [19, 0], sizes = [1, 32], strides = [1, 1]} : vector<45x32xf32> to vector<1x32xf32>
    %c0_137 = arith.constant 0 : index
    %c608 = arith.constant 608 : index
    %161 = vector.load %arg17[%c0_137, %c608] : memref<2x1440xf32, #tpu.memory_space<vmem>>, vector<1x32xf32>
    tpu.vector_store %arg17[%c0_137, %c608], %160 {strides = array<i32>} : memref<2x1440xf32, #tpu.memory_space<vmem>>, vector<1x32xf32>,
    %162 = vector.extract_strided_slice %121 {offsets = [20, 0], sizes = [1, 32], strides = [1, 1]} : vector<45x32xf32> to vector<1x32xf32>
    %c0_138 = arith.constant 0 : index
    %c640 = arith.constant 640 : index
    %163 = vector.load %arg17[%c0_138, %c640] : memref<2x1440xf32, #tpu.memory_space<vmem>>, vector<1x32xf32>
    tpu.vector_store %arg17[%c0_138, %c640], %162 {strides = array<i32>} : memref<2x1440xf32, #tpu.memory_space<vmem>>, vector<1x32xf32>,
    %164 = vector.extract_strided_slice %121 {offsets = [21, 0], sizes = [1, 32], strides = [1, 1]} : vector<45x32xf32> to vector<1x32xf32>
    %c0_139 = arith.constant 0 : index
    %c672 = arith.constant 672 : index
    %165 = vector.load %arg17[%c0_139, %c672] : memref<2x1440xf32, #tpu.memory_space<vmem>>, vector<1x32xf32>
    tpu.vector_store %arg17[%c0_139, %c672], %164 {strides = array<i32>} : memref<2x1440xf32, #tpu.memory_space<vmem>>, vector<1x32xf32>,
    %166 = vector.extract_strided_slice %121 {offsets = [22, 0], sizes = [1, 32], strides = [1, 1]} : vector<45x32xf32> to vector<1x32xf32>
    %c0_140 = arith.constant 0 : index
    %c704 = arith.constant 704 : index
    %167 = vector.load %arg17[%c0_140, %c704] : memref<2x1440xf32, #tpu.memory_space<vmem>>, vector<1x32xf32>
    tpu.vector_store %arg17[%c0_140, %c704], %166 {strides = array<i32>} : memref<2x1440xf32, #tpu.memory_space<vmem>>, vector<1x32xf32>,
    %168 = vector.extract_strided_slice %121 {offsets = [23, 0], sizes = [1, 32], strides = [1, 1]} : vector<45x32xf32> to vector<1x32xf32>
    %c0_141 = arith.constant 0 : index
    %c736 = arith.constant 736 : index
    %169 = vector.load %arg17[%c0_141, %c736] : memref<2x1440xf32, #tpu.memory_space<vmem>>, vector<1x32xf32>
    tpu.vector_store %arg17[%c0_141, %c736], %168 {strides = array<i32>} : memref<2x1440xf32, #tpu.memory_space<vmem>>, vector<1x32xf32>,
    %170 = vector.extract_strided_slice %121 {offsets = [24, 0], sizes = [1, 32], strides = [1, 1]} : vector<45x32xf32> to vector<1x32xf32>
    %c0_142 = arith.constant 0 : index
    %c768 = arith.constant 768 : index
    %171 = vector.load %arg17[%c0_142, %c768] : memref<2x1440xf32, #tpu.memory_space<vmem>>, vector<1x32xf32>
    tpu.vector_store %arg17[%c0_142, %c768], %170 {strides = array<i32>} : memref<2x1440xf32, #tpu.memory_space<vmem>>, vector<1x32xf32>,
    %172 = vector.extract_strided_slice %121 {offsets = [25, 0], sizes = [1, 32], strides = [1, 1]} : vector<45x32xf32> to vector<1x32xf32>
    %c0_143 = arith.constant 0 : index
    %c800 = arith.constant 800 : index
    %173 = vector.load %arg17[%c0_143, %c800] : memref<2x1440xf32, #tpu.memory_space<vmem>>, vector<1x32xf32>
    tpu.vector_store %arg17[%c0_143, %c800], %172 {strides = array<i32>} : memref<2x1440xf32, #tpu.memory_space<vmem>>, vector<1x32xf32>,
    %174 = vector.extract_strided_slice %121 {offsets = [26, 0], sizes = [1, 32], strides = [1, 1]} : vector<45x32xf32> to vector<1x32xf32>
    %c0_144 = arith.constant 0 : index
    %c832 = arith.constant 832 : index
    %175 = vector.load %arg17[%c0_144, %c832] : memref<2x1440xf32, #tpu.memory_space<vmem>>, vector<1x32xf32>
    tpu.vector_store %arg17[%c0_144, %c832], %174 {strides = array<i32>} : memref<2x1440xf32, #tpu.memory_space<vmem>>, vector<1x32xf32>,
    %176 = vector.extract_strided_slice %121 {offsets = [27, 0], sizes = [1, 32], strides = [1, 1]} : vector<45x32xf32> to vector<1x32xf32>
    %c0_145 = arith.constant 0 : index
    %c864 = arith.constant 864 : index
    %177 = vector.load %arg17[%c0_145, %c864] : memref<2x1440xf32, #tpu.memory_space<vmem>>, vector<1x32xf32>
    tpu.vector_store %arg17[%c0_145, %c864], %176 {strides = array<i32>} : memref<2x1440xf32, #tpu.memory_space<vmem>>, vector<1x32xf32>,
    %178 = vector.extract_strided_slice %121 {offsets = [28, 0], sizes = [1, 32], strides = [1, 1]} : vector<45x32xf32> to vector<1x32xf32>
    %c0_146 = arith.constant 0 : index
    %c896 = arith.constant 896 : index
    %179 = vector.load %arg17[%c0_146, %c896] : memref<2x1440xf32, #tpu.memory_space<vmem>>, vector<1x32xf32>
    tpu.vector_store %arg17[%c0_146, %c896], %178 {strides = array<i32>} : memref<2x1440xf32, #tpu.memory_space<vmem>>, vector<1x32xf32>,
    %180 = vector.extract_strided_slice %121 {offsets = [29, 0], sizes = [1, 32], strides = [1, 1]} : vector<45x32xf32> to vector<1x32xf32>
    %c0_147 = arith.constant 0 : index
    %c928 = arith.constant 928 : index
    %181 = vector.load %arg17[%c0_147, %c928] : memref<2x1440xf32, #tpu.memory_space<vmem>>, vector<1x32xf32>
    tpu.vector_store %arg17[%c0_147, %c928], %180 {strides = array<i32>} : memref<2x1440xf32, #tpu.memory_space<vmem>>, vector<1x32xf32>,
    %182 = vector.extract_strided_slice %121 {offsets = [30, 0], sizes = [1, 32], strides = [1, 1]} : vector<45x32xf32> to vector<1x32xf32>
    %c0_148 = arith.constant 0 : index
    %c960 = arith.constant 960 : index
    %183 = vector.load %arg17[%c0_148, %c960] : memref<2x1440xf32, #tpu.memory_space<vmem>>, vector<1x32xf32>
    tpu.vector_store %arg17[%c0_148, %c960], %182 {strides = array<i32>} : memref<2x1440xf32, #tpu.memory_space<vmem>>, vector<1x32xf32>,
    %184 = vector.extract_strided_slice %121 {offsets = [31, 0], sizes = [1, 32], strides = [1, 1]} : vector<45x32xf32> to vector<1x32xf32>
    %c0_149 = arith.constant 0 : index
    %c992 = arith.constant 992 : index
    %185 = vector.load %arg17[%c0_149, %c992] : memref<2x1440xf32, #tpu.memory_space<vmem>>, vector<1x32xf32>
    tpu.vector_store %arg17[%c0_149, %c992], %184 {strides = array<i32>} : memref<2x1440xf32, #tpu.memory_space<vmem>>, vector<1x32xf32>,
    %186 = vector.extract_strided_slice %121 {offsets = [32, 0], sizes = [1, 32], strides = [1, 1]} : vector<45x32xf32> to vector<1x32xf32>
    %c0_150 = arith.constant 0 : index
    %c1024 = arith.constant 1024 : index
    %187 = vector.load %arg17[%c0_150, %c1024] : memref<2x1440xf32, #tpu.memory_space<vmem>>, vector<1x32xf32>
    tpu.vector_store %arg17[%c0_150, %c1024], %186 {strides = array<i32>} : memref<2x1440xf32, #tpu.memory_space<vmem>>, vector<1x32xf32>,
    %188 = vector.extract_strided_slice %121 {offsets = [33, 0], sizes = [1, 32], strides = [1, 1]} : vector<45x32xf32> to vector<1x32xf32>
    %c0_151 = arith.constant 0 : index
    %c1056 = arith.constant 1056 : index
    %189 = vector.load %arg17[%c0_151, %c1056] : memref<2x1440xf32, #tpu.memory_space<vmem>>, vector<1x32xf32>
    tpu.vector_store %arg17[%c0_151, %c1056], %188 {strides = array<i32>} : memref<2x1440xf32, #tpu.memory_space<vmem>>, vector<1x32xf32>,
    %190 = vector.extract_strided_slice %121 {offsets = [34, 0], sizes = [1, 32], strides = [1, 1]} : vector<45x32xf32> to vector<1x32xf32>
    %c0_152 = arith.constant 0 : index
    %c1088 = arith.constant 1088 : index
    %191 = vector.load %arg17[%c0_152, %c1088] : memref<2x1440xf32, #tpu.memory_space<vmem>>, vector<1x32xf32>
    tpu.vector_store %arg17[%c0_152, %c1088], %190 {strides = array<i32>} : memref<2x1440xf32, #tpu.memory_space<vmem>>, vector<1x32xf32>,
    %192 = vector.extract_strided_slice %121 {offsets = [35, 0], sizes = [1, 32], strides = [1, 1]} : vector<45x32xf32> to vector<1x32xf32>
    %c0_153 = arith.constant 0 : index
    %c1120 = arith.constant 1120 : index
    %193 = vector.load %arg17[%c0_153, %c1120] : memref<2x1440xf32, #tpu.memory_space<vmem>>, vector<1x32xf32>
    tpu.vector_store %arg17[%c0_153, %c1120], %192 {strides = array<i32>} : memref<2x1440xf32, #tpu.memory_space<vmem>>, vector<1x32xf32>,
    %194 = vector.extract_strided_slice %121 {offsets = [36, 0], sizes = [1, 32], strides = [1, 1]} : vector<45x32xf32> to vector<1x32xf32>
    %c0_154 = arith.constant 0 : index
    %c1152 = arith.constant 1152 : index
    %195 = vector.load %arg17[%c0_154, %c1152] : memref<2x1440xf32, #tpu.memory_space<vmem>>, vector<1x32xf32>
    tpu.vector_store %arg17[%c0_154, %c1152], %194 {strides = array<i32>} : memref<2x1440xf32, #tpu.memory_space<vmem>>, vector<1x32xf32>,
    %196 = vector.extract_strided_slice %121 {offsets = [37, 0], sizes = [1, 32], strides = [1, 1]} : vector<45x32xf32> to vector<1x32xf32>
    %c0_155 = arith.constant 0 : index
    %c1184 = arith.constant 1184 : index
    %197 = vector.load %arg17[%c0_155, %c1184] : memref<2x1440xf32, #tpu.memory_space<vmem>>, vector<1x32xf32>
    tpu.vector_store %arg17[%c0_155, %c1184], %196 {strides = array<i32>} : memref<2x1440xf32, #tpu.memory_space<vmem>>, vector<1x32xf32>,
    %198 = vector.extract_strided_slice %121 {offsets = [38, 0], sizes = [1, 32], strides = [1, 1]} : vector<45x32xf32> to vector<1x32xf32>
    %c0_156 = arith.constant 0 : index
    %c1216 = arith.constant 1216 : index
    %199 = vector.load %arg17[%c0_156, %c1216] : memref<2x1440xf32, #tpu.memory_space<vmem>>, vector<1x32xf32>
    tpu.vector_store %arg17[%c0_156, %c1216], %198 {strides = array<i32>} : memref<2x1440xf32, #tpu.memory_space<vmem>>, vector<1x32xf32>,
    %200 = vector.extract_strided_slice %121 {offsets = [39, 0], sizes = [1, 32], strides = [1, 1]} : vector<45x32xf32> to vector<1x32xf32>
    %c0_157 = arith.constant 0 : index
    %c1248 = arith.constant 1248 : index
    %201 = vector.load %arg17[%c0_157, %c1248] : memref<2x1440xf32, #tpu.memory_space<vmem>>, vector<1x32xf32>
    tpu.vector_store %arg17[%c0_157, %c1248], %200 {strides = array<i32>} : memref<2x1440xf32, #tpu.memory_space<vmem>>, vector<1x32xf32>,
    %202 = vector.extract_strided_slice %121 {offsets = [40, 0], sizes = [1, 32], strides = [1, 1]} : vector<45x32xf32> to vector<1x32xf32>
    %c0_158 = arith.constant 0 : index
    %c1280 = arith.constant 1280 : index
    %203 = vector.load %arg17[%c0_158, %c1280] : memref<2x1440xf32, #tpu.memory_space<vmem>>, vector<1x32xf32>
    tpu.vector_store %arg17[%c0_158, %c1280], %202 {strides = array<i32>} : memref<2x1440xf32, #tpu.memory_space<vmem>>, vector<1x32xf32>,
    %204 = vector.extract_strided_slice %121 {offsets = [41, 0], sizes = [1, 32], strides = [1, 1]} : vector<45x32xf32> to vector<1x32xf32>
    %c0_159 = arith.constant 0 : index
    %c1312 = arith.constant 1312 : index
    %205 = vector.load %arg17[%c0_159, %c1312] : memref<2x1440xf32, #tpu.memory_space<vmem>>, vector<1x32xf32>
    tpu.vector_store %arg17[%c0_159, %c1312], %204 {strides = array<i32>} : memref<2x1440xf32, #tpu.memory_space<vmem>>, vector<1x32xf32>,
    %206 = vector.extract_strided_slice %121 {offsets = [42, 0], sizes = [1, 32], strides = [1, 1]} : vector<45x32xf32> to vector<1x32xf32>
    %c0_160 = arith.constant 0 : index
    %c1344 = arith.constant 1344 : index
    %207 = vector.load %arg17[%c0_160, %c1344] : memref<2x1440xf32, #tpu.memory_space<vmem>>, vector<1x32xf32>
    tpu.vector_store %arg17[%c0_160, %c1344], %206 {strides = array<i32>} : memref<2x1440xf32, #tpu.memory_space<vmem>>, vector<1x32xf32>,
    %208 = vector.extract_strided_slice %121 {offsets = [43, 0], sizes = [1, 32], strides = [1, 1]} : vector<45x32xf32> to vector<1x32xf32>
    %c0_161 = arith.constant 0 : index
    %c1376 = arith.constant 1376 : index
    %209 = vector.load %arg17[%c0_161, %c1376] : memref<2x1440xf32, #tpu.memory_space<vmem>>, vector<1x32xf32>
    tpu.vector_store %arg17[%c0_161, %c1376], %208 {strides = array<i32>} : memref<2x1440xf32, #tpu.memory_space<vmem>>, vector<1x32xf32>,
    %210 = vector.extract_strided_slice %121 {offsets = [44, 0], sizes = [1, 32], strides = [1, 1]} : vector<45x32xf32> to vector<1x32xf32>
    %c0_162 = arith.constant 0 : index
    %c1408 = arith.constant 1408 : index
    %211 = vector.load %arg17[%c0_162, %c1408] : memref<2x1440xf32, #tpu.memory_space<vmem>>, vector<1x32xf32>
    tpu.vector_store %arg17[%c0_162, %c1408], %210 {strides = array<i32>} : memref<2x1440xf32, #tpu.memory_space<vmem>>, vector<1x32xf32>,
    %c180 = arith.constant 180 : index
    %c0_163 = arith.constant 0 : index
    %212 = vector.load %arg0[%c180, %c0_163] : memref<360x4xf32, #tpu.memory_space<vmem>>, vector<180x4xf32>
    %213 = vector.broadcast %4 : vector<1x4xf32> to vector<180x4xf32>
    %214 = arith.subf %212, %213 : vector<180x4xf32>
    %215 = vector.broadcast %14 : vector<1x4xf32> to vector<180x4xf32>
    %216 = arith.mulf %214, %215 : vector<180x4xf32>
    %c2_164 = arith.constant 2 : index
    %c0_165 = arith.constant 0 : index
    %217 = vector.load %arg14[%c2_164, %c0_165] : memref<184x4xf32, #tpu.memory_space<vmem>>, vector<180x4xf32>
    tpu.vector_store %arg14[%c2_164, %c0_165], %216 {strides = array<i32>} : memref<184x4xf32, #tpu.memory_space<vmem>>, vector<180x4xf32>,
    %218 = vector.extract_strided_slice %216 {offsets = [178, 0], sizes = [2, 4], strides = [1, 1]} : vector<180x4xf32> to vector<2x4xf32>
    %c0_166 = arith.constant 0 : index
    %c0_167 = arith.constant 0 : index
    %219 = vector.load %arg14[%c0_166, %c0_167] : memref<184x4xf32, #tpu.memory_space<vmem>>, vector<2x4xf32>
    tpu.vector_store %arg14[%c0_166, %c0_167], %218 {strides = array<i32>} : memref<184x4xf32, #tpu.memory_space<vmem>>, vector<2x4xf32>,
    %220 = vector.extract_strided_slice %216 {offsets = [0, 0], sizes = [2, 4], strides = [1, 1]} : vector<180x4xf32> to vector<2x4xf32>
    %c182_168 = arith.constant 182 : index
    %c0_169 = arith.constant 0 : index
    %221 = vector.load %arg14[%c182_168, %c0_169] : memref<184x4xf32, #tpu.memory_space<vmem>>, vector<2x4xf32>
    tpu.vector_store %arg14[%c182_168, %c0_169], %220 {strides = array<i32>} : memref<184x4xf32, #tpu.memory_space<vmem>>, vector<2x4xf32>,
    %c0_170 = arith.constant 0 : index
    %c0_171 = arith.constant 0 : index
    %222 = tpu.strided_load %arg14[%c0_170, %c0_171] {strides = array<i32: 2, 1>} : memref<184x4xf32, #tpu.memory_space<vmem>>, vector<90x4xf32>
    %c0_172 = arith.constant 0 : index
    %c0_173 = arith.constant 0 : index
    %c0_174 = arith.constant 0 : index
    %223 = vector.load %arg1[%c0_172, %c0_173, %c0_174] : memref<5x4x16xf32, #tpu.memory_space<vmem>>, vector<1x4x16xf32>
    %224 = vector.shape_cast %223 : vector<1x4x16xf32> to vector<4x16xf32>
    %cst_175 = arith.constant dense<0.000000e+00> : vector<90x16xf32>
    %225 = tpu.matmul %222, %224, %cst_175 {dimension_numbers = #tpu.dot_dimension_numbers<[1], [0], [0], [1], [0, 0, 1, 1], [], []>} : vector<90x4xf32>, vector<4x16xf32>, vector<90x16xf32> -> vector<90x16xf32>
    %c1_176 = arith.constant 1 : index
    %c0_177 = arith.constant 0 : index
    %226 = tpu.strided_load %arg14[%c1_176, %c0_177] {strides = array<i32: 2, 1>} : memref<184x4xf32, #tpu.memory_space<vmem>>, vector<90x4xf32>
    %c1_178 = arith.constant 1 : index
    %c0_179 = arith.constant 0 : index
    %c0_180 = arith.constant 0 : index
    %227 = vector.load %arg1[%c1_178, %c0_179, %c0_180] : memref<5x4x16xf32, #tpu.memory_space<vmem>>, vector<1x4x16xf32>
    %228 = vector.shape_cast %227 : vector<1x4x16xf32> to vector<4x16xf32>
    %cst_181 = arith.constant dense<0.000000e+00> : vector<90x16xf32>
    %229 = tpu.matmul %226, %228, %cst_181 {dimension_numbers = #tpu.dot_dimension_numbers<[1], [0], [0], [1], [0, 0, 1, 1], [], []>} : vector<90x4xf32>, vector<4x16xf32>, vector<90x16xf32> -> vector<90x16xf32>
    %230 = arith.addf %225, %229 : vector<90x16xf32>
    %c2_182 = arith.constant 2 : index
    %c0_183 = arith.constant 0 : index
    %231 = tpu.strided_load %arg14[%c2_182, %c0_183] {strides = array<i32: 2, 1>} : memref<184x4xf32, #tpu.memory_space<vmem>>, vector<90x4xf32>
    %c2_184 = arith.constant 2 : index
    %c0_185 = arith.constant 0 : index
    %c0_186 = arith.constant 0 : index
    %232 = vector.load %arg1[%c2_184, %c0_185, %c0_186] : memref<5x4x16xf32, #tpu.memory_space<vmem>>, vector<1x4x16xf32>
    %233 = vector.shape_cast %232 : vector<1x4x16xf32> to vector<4x16xf32>
    %cst_187 = arith.constant dense<0.000000e+00> : vector<90x16xf32>
    %234 = tpu.matmul %231, %233, %cst_187 {dimension_numbers = #tpu.dot_dimension_numbers<[1], [0], [0], [1], [0, 0, 1, 1], [], []>} : vector<90x4xf32>, vector<4x16xf32>, vector<90x16xf32> -> vector<90x16xf32>
    %235 = arith.addf %230, %234 : vector<90x16xf32>
    %c3_188 = arith.constant 3 : index
    %c0_189 = arith.constant 0 : index
    %236 = tpu.strided_load %arg14[%c3_188, %c0_189] {strides = array<i32: 2, 1>} : memref<184x4xf32, #tpu.memory_space<vmem>>, vector<90x4xf32>
    %c3_190 = arith.constant 3 : index
    %c0_191 = arith.constant 0 : index
    %c0_192 = arith.constant 0 : index
    %237 = vector.load %arg1[%c3_190, %c0_191, %c0_192] : memref<5x4x16xf32, #tpu.memory_space<vmem>>, vector<1x4x16xf32>
    %238 = vector.shape_cast %237 : vector<1x4x16xf32> to vector<4x16xf32>
    %cst_193 = arith.constant dense<0.000000e+00> : vector<90x16xf32>
    %239 = tpu.matmul %236, %238, %cst_193 {dimension_numbers = #tpu.dot_dimension_numbers<[1], [0], [0], [1], [0, 0, 1, 1], [], []>} : vector<90x4xf32>, vector<4x16xf32>, vector<90x16xf32> -> vector<90x16xf32>
    %240 = arith.addf %235, %239 : vector<90x16xf32>
    %c4_194 = arith.constant 4 : index
    %c0_195 = arith.constant 0 : index
    %241 = tpu.strided_load %arg14[%c4_194, %c0_195] {strides = array<i32: 2, 1>} : memref<184x4xf32, #tpu.memory_space<vmem>>, vector<90x4xf32>
    %c4_196 = arith.constant 4 : index
    %c0_197 = arith.constant 0 : index
    %c0_198 = arith.constant 0 : index
    %242 = vector.load %arg1[%c4_196, %c0_197, %c0_198] : memref<5x4x16xf32, #tpu.memory_space<vmem>>, vector<1x4x16xf32>
    %243 = vector.shape_cast %242 : vector<1x4x16xf32> to vector<4x16xf32>
    %cst_199 = arith.constant dense<0.000000e+00> : vector<90x16xf32>
    %244 = tpu.matmul %241, %243, %cst_199 {dimension_numbers = #tpu.dot_dimension_numbers<[1], [0], [0], [1], [0, 0, 1, 1], [], []>} : vector<90x4xf32>, vector<4x16xf32>, vector<90x16xf32> -> vector<90x16xf32>
    %245 = arith.addf %240, %244 : vector<90x16xf32>
    %c0_200 = arith.constant 0 : index
    %c0_201 = arith.constant 0 : index
    %246 = vector.load %arg2[%c0_200, %c0_201] : memref<1x16xf32, #tpu.memory_space<vmem>>, vector<1x16xf32>
    %247 = vector.broadcast %246 : vector<1x16xf32> to vector<90x16xf32>
    %248 = arith.addf %245, %247 : vector<90x16xf32>
    %cst_202 = arith.constant 0.000000e+00 : f32
    %249 = vector.broadcast %cst_202 : f32 to vector<90x16xf32>
    %250 = arith.maximumf %248, %249 : vector<90x16xf32>
    %c2_203 = arith.constant 2 : index
    %c0_204 = arith.constant 0 : index
    %251 = vector.load %arg15[%c2_203, %c0_204] : memref<94x16xf32, #tpu.memory_space<vmem>>, vector<90x16xf32>
    tpu.vector_store %arg15[%c2_203, %c0_204], %250 {strides = array<i32>} : memref<94x16xf32, #tpu.memory_space<vmem>>, vector<90x16xf32>,
    %252 = vector.extract_strided_slice %250 {offsets = [88, 0], sizes = [2, 16], strides = [1, 1]} : vector<90x16xf32> to vector<2x16xf32>
    %c0_205 = arith.constant 0 : index
    %c0_206 = arith.constant 0 : index
    %253 = vector.load %arg15[%c0_205, %c0_206] : memref<94x16xf32, #tpu.memory_space<vmem>>, vector<2x16xf32>
    tpu.vector_store %arg15[%c0_205, %c0_206], %252 {strides = array<i32>} : memref<94x16xf32, #tpu.memory_space<vmem>>, vector<2x16xf32>,
    %254 = vector.extract_strided_slice %250 {offsets = [0, 0], sizes = [2, 16], strides = [1, 1]} : vector<90x16xf32> to vector<2x16xf32>
    %c92_207 = arith.constant 92 : index
    %c0_208 = arith.constant 0 : index
    %255 = vector.load %arg15[%c92_207, %c0_208] : memref<94x16xf32, #tpu.memory_space<vmem>>, vector<2x16xf32>
    tpu.vector_store %arg15[%c92_207, %c0_208], %254 {strides = array<i32>} : memref<94x16xf32, #tpu.memory_space<vmem>>, vector<2x16xf32>,
    %c0_209 = arith.constant 0 : index
    %c0_210 = arith.constant 0 : index
    %256 = tpu.strided_load %arg15[%c0_209, %c0_210] {strides = array<i32: 2, 1>} : memref<94x16xf32, #tpu.memory_space<vmem>>, vector<45x16xf32>
    %c0_211 = arith.constant 0 : index
    %c0_212 = arith.constant 0 : index
    %c0_213 = arith.constant 0 : index
    %257 = vector.load %arg3[%c0_211, %c0_212, %c0_213] : memref<5x16x32xf32, #tpu.memory_space<vmem>>, vector<1x16x32xf32>
    %258 = vector.shape_cast %257 : vector<1x16x32xf32> to vector<16x32xf32>
    %cst_214 = arith.constant dense<0.000000e+00> : vector<45x32xf32>
    %259 = tpu.matmul %256, %258, %cst_214 {dimension_numbers = #tpu.dot_dimension_numbers<[1], [0], [0], [1], [0, 0, 1, 1], [], []>} : vector<45x16xf32>, vector<16x32xf32>, vector<45x32xf32> -> vector<45x32xf32>
    %c1_215 = arith.constant 1 : index
    %c0_216 = arith.constant 0 : index
    %260 = tpu.strided_load %arg15[%c1_215, %c0_216] {strides = array<i32: 2, 1>} : memref<94x16xf32, #tpu.memory_space<vmem>>, vector<45x16xf32>
    %c1_217 = arith.constant 1 : index
    %c0_218 = arith.constant 0 : index
    %c0_219 = arith.constant 0 : index
    %261 = vector.load %arg3[%c1_217, %c0_218, %c0_219] : memref<5x16x32xf32, #tpu.memory_space<vmem>>, vector<1x16x32xf32>
    %262 = vector.shape_cast %261 : vector<1x16x32xf32> to vector<16x32xf32>
    %cst_220 = arith.constant dense<0.000000e+00> : vector<45x32xf32>
    %263 = tpu.matmul %260, %262, %cst_220 {dimension_numbers = #tpu.dot_dimension_numbers<[1], [0], [0], [1], [0, 0, 1, 1], [], []>} : vector<45x16xf32>, vector<16x32xf32>, vector<45x32xf32> -> vector<45x32xf32>
    %264 = arith.addf %259, %263 : vector<45x32xf32>
    %c2_221 = arith.constant 2 : index
    %c0_222 = arith.constant 0 : index
    %265 = tpu.strided_load %arg15[%c2_221, %c0_222] {strides = array<i32: 2, 1>} : memref<94x16xf32, #tpu.memory_space<vmem>>, vector<45x16xf32>
    %c2_223 = arith.constant 2 : index
    %c0_224 = arith.constant 0 : index
    %c0_225 = arith.constant 0 : index
    %266 = vector.load %arg3[%c2_223, %c0_224, %c0_225] : memref<5x16x32xf32, #tpu.memory_space<vmem>>, vector<1x16x32xf32>
    %267 = vector.shape_cast %266 : vector<1x16x32xf32> to vector<16x32xf32>
    %cst_226 = arith.constant dense<0.000000e+00> : vector<45x32xf32>
    %268 = tpu.matmul %265, %267, %cst_226 {dimension_numbers = #tpu.dot_dimension_numbers<[1], [0], [0], [1], [0, 0, 1, 1], [], []>} : vector<45x16xf32>, vector<16x32xf32>, vector<45x32xf32> -> vector<45x32xf32>
    %269 = arith.addf %264, %268 : vector<45x32xf32>
    %c3_227 = arith.constant 3 : index
    %c0_228 = arith.constant 0 : index
    %270 = tpu.strided_load %arg15[%c3_227, %c0_228] {strides = array<i32: 2, 1>} : memref<94x16xf32, #tpu.memory_space<vmem>>, vector<45x16xf32>
    %c3_229 = arith.constant 3 : index
    %c0_230 = arith.constant 0 : index
    %c0_231 = arith.constant 0 : index
    %271 = vector.load %arg3[%c3_229, %c0_230, %c0_231] : memref<5x16x32xf32, #tpu.memory_space<vmem>>, vector<1x16x32xf32>
    %272 = vector.shape_cast %271 : vector<1x16x32xf32> to vector<16x32xf32>
    %cst_232 = arith.constant dense<0.000000e+00> : vector<45x32xf32>
    %273 = tpu.matmul %270, %272, %cst_232 {dimension_numbers = #tpu.dot_dimension_numbers<[1], [0], [0], [1], [0, 0, 1, 1], [], []>} : vector<45x16xf32>, vector<16x32xf32>, vector<45x32xf32> -> vector<45x32xf32>
    %274 = arith.addf %269, %273 : vector<45x32xf32>
    %c4_233 = arith.constant 4 : index
    %c0_234 = arith.constant 0 : index
    %275 = tpu.strided_load %arg15[%c4_233, %c0_234] {strides = array<i32: 2, 1>} : memref<94x16xf32, #tpu.memory_space<vmem>>, vector<45x16xf32>
    %c4_235 = arith.constant 4 : index
    %c0_236 = arith.constant 0 : index
    %c0_237 = arith.constant 0 : index
    %276 = vector.load %arg3[%c4_235, %c0_236, %c0_237] : memref<5x16x32xf32, #tpu.memory_space<vmem>>, vector<1x16x32xf32>
    %277 = vector.shape_cast %276 : vector<1x16x32xf32> to vector<16x32xf32>
    %cst_238 = arith.constant dense<0.000000e+00> : vector<45x32xf32>
    %278 = tpu.matmul %275, %277, %cst_238 {dimension_numbers = #tpu.dot_dimension_numbers<[1], [0], [0], [1], [0, 0, 1, 1], [], []>} : vector<45x16xf32>, vector<16x32xf32>, vector<45x32xf32> -> vector<45x32xf32>
    %279 = arith.addf %274, %278 : vector<45x32xf32>
    %c0_239 = arith.constant 0 : index
    %c0_240 = arith.constant 0 : index
    %280 = vector.load %arg4[%c0_239, %c0_240] : memref<1x32xf32, #tpu.memory_space<vmem>>, vector<1x32xf32>
    %281 = vector.broadcast %280 : vector<1x32xf32> to vector<45x32xf32>
    %282 = arith.addf %279, %281 : vector<45x32xf32>
    %cst_241 = arith.constant 0.000000e+00 : f32
    %283 = vector.broadcast %cst_241 : f32 to vector<45x32xf32>
    %284 = arith.maximumf %282, %283 : vector<45x32xf32>
    %c2_242 = arith.constant 2 : index
    %c0_243 = arith.constant 0 : index
    %285 = vector.load %arg16[%c2_242, %c0_243] : memref<49x32xf32, #tpu.memory_space<vmem>>, vector<45x32xf32>
    tpu.vector_store %arg16[%c2_242, %c0_243], %284 {strides = array<i32>} : memref<49x32xf32, #tpu.memory_space<vmem>>, vector<45x32xf32>,
    %286 = vector.extract_strided_slice %284 {offsets = [43, 0], sizes = [2, 32], strides = [1, 1]} : vector<45x32xf32> to vector<2x32xf32>
    %c0_244 = arith.constant 0 : index
    %c0_245 = arith.constant 0 : index
    %287 = vector.load %arg16[%c0_244, %c0_245] : memref<49x32xf32, #tpu.memory_space<vmem>>, vector<2x32xf32>
    tpu.vector_store %arg16[%c0_244, %c0_245], %286 {strides = array<i32>} : memref<49x32xf32, #tpu.memory_space<vmem>>, vector<2x32xf32>,
    %288 = vector.extract_strided_slice %284 {offsets = [0, 0], sizes = [2, 32], strides = [1, 1]} : vector<45x32xf32> to vector<2x32xf32>
    %c47_246 = arith.constant 47 : index
    %c0_247 = arith.constant 0 : index
    %289 = vector.load %arg16[%c47_246, %c0_247] : memref<49x32xf32, #tpu.memory_space<vmem>>, vector<2x32xf32>
    tpu.vector_store %arg16[%c47_246, %c0_247], %288 {strides = array<i32>} : memref<49x32xf32, #tpu.memory_space<vmem>>, vector<2x32xf32>,
    %c0_248 = arith.constant 0 : index
    %c0_249 = arith.constant 0 : index
    %290 = vector.load %arg16[%c0_248, %c0_249] : memref<49x32xf32, #tpu.memory_space<vmem>>, vector<45x32xf32>
    %c0_250 = arith.constant 0 : index
    %c0_251 = arith.constant 0 : index
    %c0_252 = arith.constant 0 : index
    %291 = vector.load %arg5[%c0_250, %c0_251, %c0_252] : memref<5x32x32xf32, #tpu.memory_space<vmem>>, vector<1x32x32xf32>
    %292 = vector.shape_cast %291 : vector<1x32x32xf32> to vector<32x32xf32>
    %cst_253 = arith.constant dense<0.000000e+00> : vector<45x32xf32>
    %293 = tpu.matmul %290, %292, %cst_253 {dimension_numbers = #tpu.dot_dimension_numbers<[1], [0], [0], [1], [0, 0, 1, 1], [], []>} : vector<45x32xf32>, vector<32x32xf32>, vector<45x32xf32> -> vector<45x32xf32>
    %c1_254 = arith.constant 1 : index
    %c0_255 = arith.constant 0 : index
    %294 = vector.load %arg16[%c1_254, %c0_255] : memref<49x32xf32, #tpu.memory_space<vmem>>, vector<45x32xf32>
    %c1_256 = arith.constant 1 : index
    %c0_257 = arith.constant 0 : index
    %c0_258 = arith.constant 0 : index
    %295 = vector.load %arg5[%c1_256, %c0_257, %c0_258] : memref<5x32x32xf32, #tpu.memory_space<vmem>>, vector<1x32x32xf32>
    %296 = vector.shape_cast %295 : vector<1x32x32xf32> to vector<32x32xf32>
    %cst_259 = arith.constant dense<0.000000e+00> : vector<45x32xf32>
    %297 = tpu.matmul %294, %296, %cst_259 {dimension_numbers = #tpu.dot_dimension_numbers<[1], [0], [0], [1], [0, 0, 1, 1], [], []>} : vector<45x32xf32>, vector<32x32xf32>, vector<45x32xf32> -> vector<45x32xf32>
    %298 = arith.addf %293, %297 : vector<45x32xf32>
    %c2_260 = arith.constant 2 : index
    %c0_261 = arith.constant 0 : index
    %299 = vector.load %arg16[%c2_260, %c0_261] : memref<49x32xf32, #tpu.memory_space<vmem>>, vector<45x32xf32>
    %c2_262 = arith.constant 2 : index
    %c0_263 = arith.constant 0 : index
    %c0_264 = arith.constant 0 : index
    %300 = vector.load %arg5[%c2_262, %c0_263, %c0_264] : memref<5x32x32xf32, #tpu.memory_space<vmem>>, vector<1x32x32xf32>
    %301 = vector.shape_cast %300 : vector<1x32x32xf32> to vector<32x32xf32>
    %cst_265 = arith.constant dense<0.000000e+00> : vector<45x32xf32>
    %302 = tpu.matmul %299, %301, %cst_265 {dimension_numbers = #tpu.dot_dimension_numbers<[1], [0], [0], [1], [0, 0, 1, 1], [], []>} : vector<45x32xf32>, vector<32x32xf32>, vector<45x32xf32> -> vector<45x32xf32>
    %303 = arith.addf %298, %302 : vector<45x32xf32>
    %c3_266 = arith.constant 3 : index
    %c0_267 = arith.constant 0 : index
    %304 = vector.load %arg16[%c3_266, %c0_267] : memref<49x32xf32, #tpu.memory_space<vmem>>, vector<45x32xf32>
    %c3_268 = arith.constant 3 : index
    %c0_269 = arith.constant 0 : index
    %c0_270 = arith.constant 0 : index
    %305 = vector.load %arg5[%c3_268, %c0_269, %c0_270] : memref<5x32x32xf32, #tpu.memory_space<vmem>>, vector<1x32x32xf32>
    %306 = vector.shape_cast %305 : vector<1x32x32xf32> to vector<32x32xf32>
    %cst_271 = arith.constant dense<0.000000e+00> : vector<45x32xf32>
    %307 = tpu.matmul %304, %306, %cst_271 {dimension_numbers = #tpu.dot_dimension_numbers<[1], [0], [0], [1], [0, 0, 1, 1], [], []>} : vector<45x32xf32>, vector<32x32xf32>, vector<45x32xf32> -> vector<45x32xf32>
    %308 = arith.addf %303, %307 : vector<45x32xf32>
    %c4_272 = arith.constant 4 : index
    %c0_273 = arith.constant 0 : index
    %309 = vector.load %arg16[%c4_272, %c0_273] : memref<49x32xf32, #tpu.memory_space<vmem>>, vector<45x32xf32>
    %c4_274 = arith.constant 4 : index
    %c0_275 = arith.constant 0 : index
    %c0_276 = arith.constant 0 : index
    %310 = vector.load %arg5[%c4_274, %c0_275, %c0_276] : memref<5x32x32xf32, #tpu.memory_space<vmem>>, vector<1x32x32xf32>
    %311 = vector.shape_cast %310 : vector<1x32x32xf32> to vector<32x32xf32>
    %cst_277 = arith.constant dense<0.000000e+00> : vector<45x32xf32>
    %312 = tpu.matmul %309, %311, %cst_277 {dimension_numbers = #tpu.dot_dimension_numbers<[1], [0], [0], [1], [0, 0, 1, 1], [], []>} : vector<45x32xf32>, vector<32x32xf32>, vector<45x32xf32> -> vector<45x32xf32>
    %313 = arith.addf %308, %312 : vector<45x32xf32>
    %c0_278 = arith.constant 0 : index
    %c0_279 = arith.constant 0 : index
    %314 = vector.load %arg6[%c0_278, %c0_279] : memref<1x32xf32, #tpu.memory_space<vmem>>, vector<1x32xf32>
    %315 = vector.broadcast %314 : vector<1x32xf32> to vector<45x32xf32>
    %316 = arith.addf %313, %315 : vector<45x32xf32>
    %cst_280 = arith.constant 0.000000e+00 : f32
    %317 = vector.broadcast %cst_280 : f32 to vector<45x32xf32>
    %318 = arith.maximumf %316, %317 : vector<45x32xf32>
    %319 = vector.extract_strided_slice %318 {offsets = [0, 0], sizes = [1, 32], strides = [1, 1]} : vector<45x32xf32> to vector<1x32xf32>
    %c1_281 = arith.constant 1 : index
    %c0_282 = arith.constant 0 : index
    %320 = vector.load %arg17[%c1_281, %c0_282] : memref<2x1440xf32, #tpu.memory_space<vmem>>, vector<1x32xf32>
    tpu.vector_store %arg17[%c1_281, %c0_282], %319 {strides = array<i32>} : memref<2x1440xf32, #tpu.memory_space<vmem>>, vector<1x32xf32>,
    %321 = vector.extract_strided_slice %318 {offsets = [1, 0], sizes = [1, 32], strides = [1, 1]} : vector<45x32xf32> to vector<1x32xf32>
    %c1_283 = arith.constant 1 : index
    %c32_284 = arith.constant 32 : index
    %322 = vector.load %arg17[%c1_283, %c32_284] : memref<2x1440xf32, #tpu.memory_space<vmem>>, vector<1x32xf32>
    tpu.vector_store %arg17[%c1_283, %c32_284], %321 {strides = array<i32>} : memref<2x1440xf32, #tpu.memory_space<vmem>>, vector<1x32xf32>,
    %323 = vector.extract_strided_slice %318 {offsets = [2, 0], sizes = [1, 32], strides = [1, 1]} : vector<45x32xf32> to vector<1x32xf32>
    %c1_285 = arith.constant 1 : index
    %c64_286 = arith.constant 64 : index
    %324 = vector.load %arg17[%c1_285, %c64_286] : memref<2x1440xf32, #tpu.memory_space<vmem>>, vector<1x32xf32>
    tpu.vector_store %arg17[%c1_285, %c64_286], %323 {strides = array<i32>} : memref<2x1440xf32, #tpu.memory_space<vmem>>, vector<1x32xf32>,
    %325 = vector.extract_strided_slice %318 {offsets = [3, 0], sizes = [1, 32], strides = [1, 1]} : vector<45x32xf32> to vector<1x32xf32>
    %c1_287 = arith.constant 1 : index
    %c96_288 = arith.constant 96 : index
    %326 = vector.load %arg17[%c1_287, %c96_288] : memref<2x1440xf32, #tpu.memory_space<vmem>>, vector<1x32xf32>
    tpu.vector_store %arg17[%c1_287, %c96_288], %325 {strides = array<i32>} : memref<2x1440xf32, #tpu.memory_space<vmem>>, vector<1x32xf32>,
    %327 = vector.extract_strided_slice %318 {offsets = [4, 0], sizes = [1, 32], strides = [1, 1]} : vector<45x32xf32> to vector<1x32xf32>
    %c1_289 = arith.constant 1 : index
    %c128_290 = arith.constant 128 : index
    %328 = vector.load %arg17[%c1_289, %c128_290] : memref<2x1440xf32, #tpu.memory_space<vmem>>, vector<1x32xf32>
    tpu.vector_store %arg17[%c1_289, %c128_290], %327 {strides = array<i32>} : memref<2x1440xf32, #tpu.memory_space<vmem>>, vector<1x32xf32>,
    %329 = vector.extract_strided_slice %318 {offsets = [5, 0], sizes = [1, 32], strides = [1, 1]} : vector<45x32xf32> to vector<1x32xf32>
    %c1_291 = arith.constant 1 : index
    %c160_292 = arith.constant 160 : index
    %330 = vector.load %arg17[%c1_291, %c160_292] : memref<2x1440xf32, #tpu.memory_space<vmem>>, vector<1x32xf32>
    tpu.vector_store %arg17[%c1_291, %c160_292], %329 {strides = array<i32>} : memref<2x1440xf32, #tpu.memory_space<vmem>>, vector<1x32xf32>,
    %331 = vector.extract_strided_slice %318 {offsets = [6, 0], sizes = [1, 32], strides = [1, 1]} : vector<45x32xf32> to vector<1x32xf32>
    %c1_293 = arith.constant 1 : index
    %c192_294 = arith.constant 192 : index
    %332 = vector.load %arg17[%c1_293, %c192_294] : memref<2x1440xf32, #tpu.memory_space<vmem>>, vector<1x32xf32>
    tpu.vector_store %arg17[%c1_293, %c192_294], %331 {strides = array<i32>} : memref<2x1440xf32, #tpu.memory_space<vmem>>, vector<1x32xf32>,
    %333 = vector.extract_strided_slice %318 {offsets = [7, 0], sizes = [1, 32], strides = [1, 1]} : vector<45x32xf32> to vector<1x32xf32>
    %c1_295 = arith.constant 1 : index
    %c224_296 = arith.constant 224 : index
    %334 = vector.load %arg17[%c1_295, %c224_296] : memref<2x1440xf32, #tpu.memory_space<vmem>>, vector<1x32xf32>
    tpu.vector_store %arg17[%c1_295, %c224_296], %333 {strides = array<i32>} : memref<2x1440xf32, #tpu.memory_space<vmem>>, vector<1x32xf32>,
    %335 = vector.extract_strided_slice %318 {offsets = [8, 0], sizes = [1, 32], strides = [1, 1]} : vector<45x32xf32> to vector<1x32xf32>
    %c1_297 = arith.constant 1 : index
    %c256_298 = arith.constant 256 : index
    %336 = vector.load %arg17[%c1_297, %c256_298] : memref<2x1440xf32, #tpu.memory_space<vmem>>, vector<1x32xf32>
    tpu.vector_store %arg17[%c1_297, %c256_298], %335 {strides = array<i32>} : memref<2x1440xf32, #tpu.memory_space<vmem>>, vector<1x32xf32>,
    %337 = vector.extract_strided_slice %318 {offsets = [9, 0], sizes = [1, 32], strides = [1, 1]} : vector<45x32xf32> to vector<1x32xf32>
    %c1_299 = arith.constant 1 : index
    %c288_300 = arith.constant 288 : index
    %338 = vector.load %arg17[%c1_299, %c288_300] : memref<2x1440xf32, #tpu.memory_space<vmem>>, vector<1x32xf32>
    tpu.vector_store %arg17[%c1_299, %c288_300], %337 {strides = array<i32>} : memref<2x1440xf32, #tpu.memory_space<vmem>>, vector<1x32xf32>,
    %339 = vector.extract_strided_slice %318 {offsets = [10, 0], sizes = [1, 32], strides = [1, 1]} : vector<45x32xf32> to vector<1x32xf32>
    %c1_301 = arith.constant 1 : index
    %c320_302 = arith.constant 320 : index
    %340 = vector.load %arg17[%c1_301, %c320_302] : memref<2x1440xf32, #tpu.memory_space<vmem>>, vector<1x32xf32>
    tpu.vector_store %arg17[%c1_301, %c320_302], %339 {strides = array<i32>} : memref<2x1440xf32, #tpu.memory_space<vmem>>, vector<1x32xf32>,
    %341 = vector.extract_strided_slice %318 {offsets = [11, 0], sizes = [1, 32], strides = [1, 1]} : vector<45x32xf32> to vector<1x32xf32>
    %c1_303 = arith.constant 1 : index
    %c352_304 = arith.constant 352 : index
    %342 = vector.load %arg17[%c1_303, %c352_304] : memref<2x1440xf32, #tpu.memory_space<vmem>>, vector<1x32xf32>
    tpu.vector_store %arg17[%c1_303, %c352_304], %341 {strides = array<i32>} : memref<2x1440xf32, #tpu.memory_space<vmem>>, vector<1x32xf32>,
    %343 = vector.extract_strided_slice %318 {offsets = [12, 0], sizes = [1, 32], strides = [1, 1]} : vector<45x32xf32> to vector<1x32xf32>
    %c1_305 = arith.constant 1 : index
    %c384_306 = arith.constant 384 : index
    %344 = vector.load %arg17[%c1_305, %c384_306] : memref<2x1440xf32, #tpu.memory_space<vmem>>, vector<1x32xf32>
    tpu.vector_store %arg17[%c1_305, %c384_306], %343 {strides = array<i32>} : memref<2x1440xf32, #tpu.memory_space<vmem>>, vector<1x32xf32>,
    %345 = vector.extract_strided_slice %318 {offsets = [13, 0], sizes = [1, 32], strides = [1, 1]} : vector<45x32xf32> to vector<1x32xf32>
    %c1_307 = arith.constant 1 : index
    %c416_308 = arith.constant 416 : index
    %346 = vector.load %arg17[%c1_307, %c416_308] : memref<2x1440xf32, #tpu.memory_space<vmem>>, vector<1x32xf32>
    tpu.vector_store %arg17[%c1_307, %c416_308], %345 {strides = array<i32>} : memref<2x1440xf32, #tpu.memory_space<vmem>>, vector<1x32xf32>,
    %347 = vector.extract_strided_slice %318 {offsets = [14, 0], sizes = [1, 32], strides = [1, 1]} : vector<45x32xf32> to vector<1x32xf32>
    %c1_309 = arith.constant 1 : index
    %c448_310 = arith.constant 448 : index
    %348 = vector.load %arg17[%c1_309, %c448_310] : memref<2x1440xf32, #tpu.memory_space<vmem>>, vector<1x32xf32>
    tpu.vector_store %arg17[%c1_309, %c448_310], %347 {strides = array<i32>} : memref<2x1440xf32, #tpu.memory_space<vmem>>, vector<1x32xf32>,
    %349 = vector.extract_strided_slice %318 {offsets = [15, 0], sizes = [1, 32], strides = [1, 1]} : vector<45x32xf32> to vector<1x32xf32>
    %c1_311 = arith.constant 1 : index
    %c480_312 = arith.constant 480 : index
    %350 = vector.load %arg17[%c1_311, %c480_312] : memref<2x1440xf32, #tpu.memory_space<vmem>>, vector<1x32xf32>
    tpu.vector_store %arg17[%c1_311, %c480_312], %349 {strides = array<i32>} : memref<2x1440xf32, #tpu.memory_space<vmem>>, vector<1x32xf32>,
    %351 = vector.extract_strided_slice %318 {offsets = [16, 0], sizes = [1, 32], strides = [1, 1]} : vector<45x32xf32> to vector<1x32xf32>
    %c1_313 = arith.constant 1 : index
    %c512_314 = arith.constant 512 : index
    %352 = vector.load %arg17[%c1_313, %c512_314] : memref<2x1440xf32, #tpu.memory_space<vmem>>, vector<1x32xf32>
    tpu.vector_store %arg17[%c1_313, %c512_314], %351 {strides = array<i32>} : memref<2x1440xf32, #tpu.memory_space<vmem>>, vector<1x32xf32>,
    %353 = vector.extract_strided_slice %318 {offsets = [17, 0], sizes = [1, 32], strides = [1, 1]} : vector<45x32xf32> to vector<1x32xf32>
    %c1_315 = arith.constant 1 : index
    %c544_316 = arith.constant 544 : index
    %354 = vector.load %arg17[%c1_315, %c544_316] : memref<2x1440xf32, #tpu.memory_space<vmem>>, vector<1x32xf32>
    tpu.vector_store %arg17[%c1_315, %c544_316], %353 {strides = array<i32>} : memref<2x1440xf32, #tpu.memory_space<vmem>>, vector<1x32xf32>,
    %355 = vector.extract_strided_slice %318 {offsets = [18, 0], sizes = [1, 32], strides = [1, 1]} : vector<45x32xf32> to vector<1x32xf32>
    %c1_317 = arith.constant 1 : index
    %c576_318 = arith.constant 576 : index
    %356 = vector.load %arg17[%c1_317, %c576_318] : memref<2x1440xf32, #tpu.memory_space<vmem>>, vector<1x32xf32>
    tpu.vector_store %arg17[%c1_317, %c576_318], %355 {strides = array<i32>} : memref<2x1440xf32, #tpu.memory_space<vmem>>, vector<1x32xf32>,
    %357 = vector.extract_strided_slice %318 {offsets = [19, 0], sizes = [1, 32], strides = [1, 1]} : vector<45x32xf32> to vector<1x32xf32>
    %c1_319 = arith.constant 1 : index
    %c608_320 = arith.constant 608 : index
    %358 = vector.load %arg17[%c1_319, %c608_320] : memref<2x1440xf32, #tpu.memory_space<vmem>>, vector<1x32xf32>
    tpu.vector_store %arg17[%c1_319, %c608_320], %357 {strides = array<i32>} : memref<2x1440xf32, #tpu.memory_space<vmem>>, vector<1x32xf32>,
    %359 = vector.extract_strided_slice %318 {offsets = [20, 0], sizes = [1, 32], strides = [1, 1]} : vector<45x32xf32> to vector<1x32xf32>
    %c1_321 = arith.constant 1 : index
    %c640_322 = arith.constant 640 : index
    %360 = vector.load %arg17[%c1_321, %c640_322] : memref<2x1440xf32, #tpu.memory_space<vmem>>, vector<1x32xf32>
    tpu.vector_store %arg17[%c1_321, %c640_322], %359 {strides = array<i32>} : memref<2x1440xf32, #tpu.memory_space<vmem>>, vector<1x32xf32>,
    %361 = vector.extract_strided_slice %318 {offsets = [21, 0], sizes = [1, 32], strides = [1, 1]} : vector<45x32xf32> to vector<1x32xf32>
    %c1_323 = arith.constant 1 : index
    %c672_324 = arith.constant 672 : index
    %362 = vector.load %arg17[%c1_323, %c672_324] : memref<2x1440xf32, #tpu.memory_space<vmem>>, vector<1x32xf32>
    tpu.vector_store %arg17[%c1_323, %c672_324], %361 {strides = array<i32>} : memref<2x1440xf32, #tpu.memory_space<vmem>>, vector<1x32xf32>,
    %363 = vector.extract_strided_slice %318 {offsets = [22, 0], sizes = [1, 32], strides = [1, 1]} : vector<45x32xf32> to vector<1x32xf32>
    %c1_325 = arith.constant 1 : index
    %c704_326 = arith.constant 704 : index
    %364 = vector.load %arg17[%c1_325, %c704_326] : memref<2x1440xf32, #tpu.memory_space<vmem>>, vector<1x32xf32>
    tpu.vector_store %arg17[%c1_325, %c704_326], %363 {strides = array<i32>} : memref<2x1440xf32, #tpu.memory_space<vmem>>, vector<1x32xf32>,
    %365 = vector.extract_strided_slice %318 {offsets = [23, 0], sizes = [1, 32], strides = [1, 1]} : vector<45x32xf32> to vector<1x32xf32>
    %c1_327 = arith.constant 1 : index
    %c736_328 = arith.constant 736 : index
    %366 = vector.load %arg17[%c1_327, %c736_328] : memref<2x1440xf32, #tpu.memory_space<vmem>>, vector<1x32xf32>
    tpu.vector_store %arg17[%c1_327, %c736_328], %365 {strides = array<i32>} : memref<2x1440xf32, #tpu.memory_space<vmem>>, vector<1x32xf32>,
    %367 = vector.extract_strided_slice %318 {offsets = [24, 0], sizes = [1, 32], strides = [1, 1]} : vector<45x32xf32> to vector<1x32xf32>
    %c1_329 = arith.constant 1 : index
    %c768_330 = arith.constant 768 : index
    %368 = vector.load %arg17[%c1_329, %c768_330] : memref<2x1440xf32, #tpu.memory_space<vmem>>, vector<1x32xf32>
    tpu.vector_store %arg17[%c1_329, %c768_330], %367 {strides = array<i32>} : memref<2x1440xf32, #tpu.memory_space<vmem>>, vector<1x32xf32>,
    %369 = vector.extract_strided_slice %318 {offsets = [25, 0], sizes = [1, 32], strides = [1, 1]} : vector<45x32xf32> to vector<1x32xf32>
    %c1_331 = arith.constant 1 : index
    %c800_332 = arith.constant 800 : index
    %370 = vector.load %arg17[%c1_331, %c800_332] : memref<2x1440xf32, #tpu.memory_space<vmem>>, vector<1x32xf32>
    tpu.vector_store %arg17[%c1_331, %c800_332], %369 {strides = array<i32>} : memref<2x1440xf32, #tpu.memory_space<vmem>>, vector<1x32xf32>,
    %371 = vector.extract_strided_slice %318 {offsets = [26, 0], sizes = [1, 32], strides = [1, 1]} : vector<45x32xf32> to vector<1x32xf32>
    %c1_333 = arith.constant 1 : index
    %c832_334 = arith.constant 832 : index
    %372 = vector.load %arg17[%c1_333, %c832_334] : memref<2x1440xf32, #tpu.memory_space<vmem>>, vector<1x32xf32>
    tpu.vector_store %arg17[%c1_333, %c832_334], %371 {strides = array<i32>} : memref<2x1440xf32, #tpu.memory_space<vmem>>, vector<1x32xf32>,
    %373 = vector.extract_strided_slice %318 {offsets = [27, 0], sizes = [1, 32], strides = [1, 1]} : vector<45x32xf32> to vector<1x32xf32>
    %c1_335 = arith.constant 1 : index
    %c864_336 = arith.constant 864 : index
    %374 = vector.load %arg17[%c1_335, %c864_336] : memref<2x1440xf32, #tpu.memory_space<vmem>>, vector<1x32xf32>
    tpu.vector_store %arg17[%c1_335, %c864_336], %373 {strides = array<i32>} : memref<2x1440xf32, #tpu.memory_space<vmem>>, vector<1x32xf32>,
    %375 = vector.extract_strided_slice %318 {offsets = [28, 0], sizes = [1, 32], strides = [1, 1]} : vector<45x32xf32> to vector<1x32xf32>
    %c1_337 = arith.constant 1 : index
    %c896_338 = arith.constant 896 : index
    %376 = vector.load %arg17[%c1_337, %c896_338] : memref<2x1440xf32, #tpu.memory_space<vmem>>, vector<1x32xf32>
    tpu.vector_store %arg17[%c1_337, %c896_338], %375 {strides = array<i32>} : memref<2x1440xf32, #tpu.memory_space<vmem>>, vector<1x32xf32>,
    %377 = vector.extract_strided_slice %318 {offsets = [29, 0], sizes = [1, 32], strides = [1, 1]} : vector<45x32xf32> to vector<1x32xf32>
    %c1_339 = arith.constant 1 : index
    %c928_340 = arith.constant 928 : index
    %378 = vector.load %arg17[%c1_339, %c928_340] : memref<2x1440xf32, #tpu.memory_space<vmem>>, vector<1x32xf32>
    tpu.vector_store %arg17[%c1_339, %c928_340], %377 {strides = array<i32>} : memref<2x1440xf32, #tpu.memory_space<vmem>>, vector<1x32xf32>,
    %379 = vector.extract_strided_slice %318 {offsets = [30, 0], sizes = [1, 32], strides = [1, 1]} : vector<45x32xf32> to vector<1x32xf32>
    %c1_341 = arith.constant 1 : index
    %c960_342 = arith.constant 960 : index
    %380 = vector.load %arg17[%c1_341, %c960_342] : memref<2x1440xf32, #tpu.memory_space<vmem>>, vector<1x32xf32>
    tpu.vector_store %arg17[%c1_341, %c960_342], %379 {strides = array<i32>} : memref<2x1440xf32, #tpu.memory_space<vmem>>, vector<1x32xf32>,
    %381 = vector.extract_strided_slice %318 {offsets = [31, 0], sizes = [1, 32], strides = [1, 1]} : vector<45x32xf32> to vector<1x32xf32>
    %c1_343 = arith.constant 1 : index
    %c992_344 = arith.constant 992 : index
    %382 = vector.load %arg17[%c1_343, %c992_344] : memref<2x1440xf32, #tpu.memory_space<vmem>>, vector<1x32xf32>
    tpu.vector_store %arg17[%c1_343, %c992_344], %381 {strides = array<i32>} : memref<2x1440xf32, #tpu.memory_space<vmem>>, vector<1x32xf32>,
    %383 = vector.extract_strided_slice %318 {offsets = [32, 0], sizes = [1, 32], strides = [1, 1]} : vector<45x32xf32> to vector<1x32xf32>
    %c1_345 = arith.constant 1 : index
    %c1024_346 = arith.constant 1024 : index
    %384 = vector.load %arg17[%c1_345, %c1024_346] : memref<2x1440xf32, #tpu.memory_space<vmem>>, vector<1x32xf32>
    tpu.vector_store %arg17[%c1_345, %c1024_346], %383 {strides = array<i32>} : memref<2x1440xf32, #tpu.memory_space<vmem>>, vector<1x32xf32>,
    %385 = vector.extract_strided_slice %318 {offsets = [33, 0], sizes = [1, 32], strides = [1, 1]} : vector<45x32xf32> to vector<1x32xf32>
    %c1_347 = arith.constant 1 : index
    %c1056_348 = arith.constant 1056 : index
    %386 = vector.load %arg17[%c1_347, %c1056_348] : memref<2x1440xf32, #tpu.memory_space<vmem>>, vector<1x32xf32>
    tpu.vector_store %arg17[%c1_347, %c1056_348], %385 {strides = array<i32>} : memref<2x1440xf32, #tpu.memory_space<vmem>>, vector<1x32xf32>,
    %387 = vector.extract_strided_slice %318 {offsets = [34, 0], sizes = [1, 32], strides = [1, 1]} : vector<45x32xf32> to vector<1x32xf32>
    %c1_349 = arith.constant 1 : index
    %c1088_350 = arith.constant 1088 : index
    %388 = vector.load %arg17[%c1_349, %c1088_350] : memref<2x1440xf32, #tpu.memory_space<vmem>>, vector<1x32xf32>
    tpu.vector_store %arg17[%c1_349, %c1088_350], %387 {strides = array<i32>} : memref<2x1440xf32, #tpu.memory_space<vmem>>, vector<1x32xf32>,
    %389 = vector.extract_strided_slice %318 {offsets = [35, 0], sizes = [1, 32], strides = [1, 1]} : vector<45x32xf32> to vector<1x32xf32>
    %c1_351 = arith.constant 1 : index
    %c1120_352 = arith.constant 1120 : index
    %390 = vector.load %arg17[%c1_351, %c1120_352] : memref<2x1440xf32, #tpu.memory_space<vmem>>, vector<1x32xf32>
    tpu.vector_store %arg17[%c1_351, %c1120_352], %389 {strides = array<i32>} : memref<2x1440xf32, #tpu.memory_space<vmem>>, vector<1x32xf32>,
    %391 = vector.extract_strided_slice %318 {offsets = [36, 0], sizes = [1, 32], strides = [1, 1]} : vector<45x32xf32> to vector<1x32xf32>
    %c1_353 = arith.constant 1 : index
    %c1152_354 = arith.constant 1152 : index
    %392 = vector.load %arg17[%c1_353, %c1152_354] : memref<2x1440xf32, #tpu.memory_space<vmem>>, vector<1x32xf32>
    tpu.vector_store %arg17[%c1_353, %c1152_354], %391 {strides = array<i32>} : memref<2x1440xf32, #tpu.memory_space<vmem>>, vector<1x32xf32>,
    %393 = vector.extract_strided_slice %318 {offsets = [37, 0], sizes = [1, 32], strides = [1, 1]} : vector<45x32xf32> to vector<1x32xf32>
    %c1_355 = arith.constant 1 : index
    %c1184_356 = arith.constant 1184 : index
    %394 = vector.load %arg17[%c1_355, %c1184_356] : memref<2x1440xf32, #tpu.memory_space<vmem>>, vector<1x32xf32>
    tpu.vector_store %arg17[%c1_355, %c1184_356], %393 {strides = array<i32>} : memref<2x1440xf32, #tpu.memory_space<vmem>>, vector<1x32xf32>,
    %395 = vector.extract_strided_slice %318 {offsets = [38, 0], sizes = [1, 32], strides = [1, 1]} : vector<45x32xf32> to vector<1x32xf32>
    %c1_357 = arith.constant 1 : index
    %c1216_358 = arith.constant 1216 : index
    %396 = vector.load %arg17[%c1_357, %c1216_358] : memref<2x1440xf32, #tpu.memory_space<vmem>>, vector<1x32xf32>
    tpu.vector_store %arg17[%c1_357, %c1216_358], %395 {strides = array<i32>} : memref<2x1440xf32, #tpu.memory_space<vmem>>, vector<1x32xf32>,
    %397 = vector.extract_strided_slice %318 {offsets = [39, 0], sizes = [1, 32], strides = [1, 1]} : vector<45x32xf32> to vector<1x32xf32>
    %c1_359 = arith.constant 1 : index
    %c1248_360 = arith.constant 1248 : index
    %398 = vector.load %arg17[%c1_359, %c1248_360] : memref<2x1440xf32, #tpu.memory_space<vmem>>, vector<1x32xf32>
    tpu.vector_store %arg17[%c1_359, %c1248_360], %397 {strides = array<i32>} : memref<2x1440xf32, #tpu.memory_space<vmem>>, vector<1x32xf32>,
    %399 = vector.extract_strided_slice %318 {offsets = [40, 0], sizes = [1, 32], strides = [1, 1]} : vector<45x32xf32> to vector<1x32xf32>
    %c1_361 = arith.constant 1 : index
    %c1280_362 = arith.constant 1280 : index
    %400 = vector.load %arg17[%c1_361, %c1280_362] : memref<2x1440xf32, #tpu.memory_space<vmem>>, vector<1x32xf32>
    tpu.vector_store %arg17[%c1_361, %c1280_362], %399 {strides = array<i32>} : memref<2x1440xf32, #tpu.memory_space<vmem>>, vector<1x32xf32>,
    %401 = vector.extract_strided_slice %318 {offsets = [41, 0], sizes = [1, 32], strides = [1, 1]} : vector<45x32xf32> to vector<1x32xf32>
    %c1_363 = arith.constant 1 : index
    %c1312_364 = arith.constant 1312 : index
    %402 = vector.load %arg17[%c1_363, %c1312_364] : memref<2x1440xf32, #tpu.memory_space<vmem>>, vector<1x32xf32>
    tpu.vector_store %arg17[%c1_363, %c1312_364], %401 {strides = array<i32>} : memref<2x1440xf32, #tpu.memory_space<vmem>>, vector<1x32xf32>,
    %403 = vector.extract_strided_slice %318 {offsets = [42, 0], sizes = [1, 32], strides = [1, 1]} : vector<45x32xf32> to vector<1x32xf32>
    %c1_365 = arith.constant 1 : index
    %c1344_366 = arith.constant 1344 : index
    %404 = vector.load %arg17[%c1_365, %c1344_366] : memref<2x1440xf32, #tpu.memory_space<vmem>>, vector<1x32xf32>
    tpu.vector_store %arg17[%c1_365, %c1344_366], %403 {strides = array<i32>} : memref<2x1440xf32, #tpu.memory_space<vmem>>, vector<1x32xf32>,
    %405 = vector.extract_strided_slice %318 {offsets = [43, 0], sizes = [1, 32], strides = [1, 1]} : vector<45x32xf32> to vector<1x32xf32>
    %c1_367 = arith.constant 1 : index
    %c1376_368 = arith.constant 1376 : index
    %406 = vector.load %arg17[%c1_367, %c1376_368] : memref<2x1440xf32, #tpu.memory_space<vmem>>, vector<1x32xf32>
    tpu.vector_store %arg17[%c1_367, %c1376_368], %405 {strides = array<i32>} : memref<2x1440xf32, #tpu.memory_space<vmem>>, vector<1x32xf32>,
    %407 = vector.extract_strided_slice %318 {offsets = [44, 0], sizes = [1, 32], strides = [1, 1]} : vector<45x32xf32> to vector<1x32xf32>
    %c1_369 = arith.constant 1 : index
    %c1408_370 = arith.constant 1408 : index
    %408 = vector.load %arg17[%c1_369, %c1408_370] : memref<2x1440xf32, #tpu.memory_space<vmem>>, vector<1x32xf32>
    tpu.vector_store %arg17[%c1_369, %c1408_370], %407 {strides = array<i32>} : memref<2x1440xf32, #tpu.memory_space<vmem>>, vector<1x32xf32>,
    %c0_371 = arith.constant 0 : index
    %c0_372 = arith.constant 0 : index
    %409 = vector.load %arg17[%c0_371, %c0_372] : memref<2x1440xf32, #tpu.memory_space<vmem>>, vector<2x1440xf32>
    %410 = arith.truncf %409 : vector<2x1440xf32> to vector<2x1440xbf16>
    %c0_373 = arith.constant 0 : index
    %c0_374 = arith.constant 0 : index
    %411 = vector.load %arg7[%c0_373, %c0_374] : memref<1440x128xbf16, #tpu.memory_space<vmem>>, vector<1440x128xbf16>
    %cst_375 = arith.constant dense<0.000000e+00> : vector<2x128xf32>
    %412 = tpu.matmul %410, %411, %cst_375 {dimension_numbers = #tpu.dot_dimension_numbers<[1], [0], [0], [1], [0, 0, 1, 1], [], []>} : vector<2x1440xbf16>, vector<1440x128xbf16>, vector<2x128xf32> -> vector<2x128xf32>
    %c0_376 = arith.constant 0 : index
    %c0_377 = arith.constant 0 : index
    %413 = vector.load %arg8[%c0_376, %c0_377] : memref<1x128xf32, #tpu.memory_space<vmem>>, vector<1x128xf32>
    %414 = vector.broadcast %413 : vector<1x128xf32> to vector<2x128xf32>
    %415 = arith.addf %412, %414 : vector<2x128xf32>
    %cst_378 = arith.constant 0.000000e+00 : f32
    %416 = vector.broadcast %cst_378 : f32 to vector<2x128xf32>
    %417 = arith.maximumf %415, %416 : vector<2x128xf32>
    %418 = arith.truncf %417 : vector<2x128xf32> to vector<2x128xbf16>
    %c0_379 = arith.constant 0 : index
    %c0_380 = arith.constant 0 : index
    %419 = vector.load %arg9[%c0_379, %c0_380] : memref<128x128xbf16, #tpu.memory_space<vmem>>, vector<128x128xbf16>
    %cst_381 = arith.constant dense<0.000000e+00> : vector<2x128xf32>
    %420 = tpu.matmul %418, %419, %cst_381 {dimension_numbers = #tpu.dot_dimension_numbers<[1], [0], [0], [1], [0, 0, 1, 1], [], []>} : vector<2x128xbf16>, vector<128x128xbf16>, vector<2x128xf32> -> vector<2x128xf32>
    %c0_382 = arith.constant 0 : index
    %c0_383 = arith.constant 0 : index
    %421 = vector.load %arg10[%c0_382, %c0_383] : memref<1x128xf32, #tpu.memory_space<vmem>>, vector<1x128xf32>
    %422 = vector.broadcast %421 : vector<1x128xf32> to vector<2x128xf32>
    %423 = arith.addf %420, %422 : vector<2x128xf32>
    %cst_384 = arith.constant 0.000000e+00 : f32
    %424 = vector.broadcast %cst_384 : f32 to vector<2x128xf32>
    %425 = arith.maximumf %423, %424 : vector<2x128xf32>
    %426 = arith.truncf %425 : vector<2x128xf32> to vector<2x128xbf16>
    %c0_385 = arith.constant 0 : index
    %c0_386 = arith.constant 0 : index
    %427 = vector.load %arg11[%c0_385, %c0_386] : memref<128x2xbf16, #tpu.memory_space<vmem>>, vector<128x2xbf16>
    %cst_387 = arith.constant dense<0.000000e+00> : vector<2x2xf32>
    %428 = tpu.matmul %426, %427, %cst_387 {dimension_numbers = #tpu.dot_dimension_numbers<[1], [0], [0], [1], [0, 0, 1, 1], [], []>} : vector<2x128xbf16>, vector<128x2xbf16>, vector<2x2xf32> -> vector<2x2xf32>
    %c0_388 = arith.constant 0 : index
    %c0_389 = arith.constant 0 : index
    %429 = vector.load %arg12[%c0_388, %c0_389] : memref<1x2xf32, #tpu.memory_space<vmem>>, vector<1x2xf32>
    %430 = vector.broadcast %429 : vector<1x2xf32> to vector<2x2xf32>
    %431 = arith.addf %428, %430 : vector<2x2xf32>
    %c0_390 = arith.constant 0 : index
    %c0_391 = arith.constant 0 : index
    %432 = vector.load %arg13[%c0_390, %c0_391] : memref<2x2xf32, #tpu.memory_space<vmem>>, vector<2x2xf32>
    tpu.vector_store %arg13[%c0_390, %c0_391], %431 {strides = array<i32>} : memref<2x2xf32, #tpu.memory_space<vmem>>, vector<2x2xf32>,
    return
  }
}

</mosaic_0001>

<llo_original>
// kernel: convnet_forward.1
$region0: #{convnet_forward.1}
  #allocation0 [shape = 'u32[]', space=smem, size = 0x4, offset = 0x4, fixed_abs, tag = 'smem constant byte address 0x4 - core index']
  #allocation1 [shape = 'u32[72,128]{1,0:T(1,128)}', space=vmem, size = 0x9000, scoped, tag = 'internal scratch']
  #allocation2 [shape = 'f32[184,4]{1,0:T(8,128)}', space=vmem, size = 0x17000, scoped, tag = 'scratch operand']
  #allocation3 [shape = 'f32[94,16]{1,0:T(8,128)}', space=vmem, size = 0xc000, scoped, tag = 'scratch operand']
  #allocation4 [shape = 'f32[49,32]{1,0:T(8,128)}', space=vmem, size = 0x7000, scoped, tag = 'scratch operand']
  #allocation5 [shape = 'f32[2,1440]{1,0:T(2,128)}', space=vmem, size = 0x3000, scoped, tag = 'scratch operand']
  %s0 = inlined_call_operand.vmem [shape: f32[360,4], index: 0, kind: input, shape index: {}]
  %s1 = inlined_call_operand.vmem [shape: f32[5,4,16], index: 1, kind: input, shape index: {}]
  %s2 = inlined_call_operand.vmem [shape: f32[1,16], index: 2, kind: input, shape index: {}]
  %s3 = inlined_call_operand.vmem [shape: f32[5,16,32], index: 3, kind: input, shape index: {}]
  %s4 = inlined_call_operand.vmem [shape: f32[1,32], index: 4, kind: input, shape index: {}]
  %s5 = inlined_call_operand.vmem [shape: f32[5,32,32], index: 5, kind: input, shape index: {}]
  %s6 = inlined_call_operand.vmem [shape: f32[1,32], index: 6, kind: input, shape index: {}]
  %s7 = inlined_call_operand.hbm [shape: bf16[1440,128], index: 7, kind: input, shape index: {}]
  %s8 = inlined_call_operand.vmem [shape: f32[1,128], index: 8, kind: input, shape index: {}]
  %s9 = inlined_call_operand.vmem [shape: bf16[128,128], index: 9, kind: input, shape index: {}]
  %s10 = inlined_call_operand.vmem [shape: f32[1,128], index: 10, kind: input, shape index: {}]
  %s11 = inlined_call_operand.vmem [shape: bf16[128,2], index: 11, kind: input, shape index: {}]
  %s12 = inlined_call_operand.vmem [shape: f32[1,2], index: 12, kind: input, shape index: {}]
  %s13 = inlined_call_operand.hbm [shape: f32[2,2], index: 13, kind: output, shape index: {}]
  %s14 = sld [smem:[#allocation0]]
  $region66: #{convnet_forward.1} parent=0
    _
  %s16 = ssub.s32 1, %s14
  %s17 = scalar_select 0, %s16, %s14
  $region1: #{convnet_forward.1} parent=0
    #allocation6 [shape = 'u8[368640]{0}', space=vmem, size = 0x5a000, scoped, tag = 'input window, operand 7, single buffered']
    #allocation7 [shape = 's32[1]{0}', space=sflag, size = 0x4, scoped, tag = 'scoped memory for convnet_forward.1']
    #allocation8 [shape = 's32[1]{0}', space=sflag, size = 0x4, scoped, tag = 'scoped memory for convnet_forward.1']
    #allocation9 [shape = 'u8[1024]{0}', space=vmem, size = 0x400, scoped, tag = 'output window, operand 0, single buffered']
    %18 = vsyncpa [#allocation7], 0
    %19 = vsyncpa [#allocation8], 0
    // Predicated region
    $region2: #{convnet_forward.1} parent=1 // pred_check
      _
    $region3: #{convnet_forward.1} parent=1 // pred_check_branch
      %21 = sbr.rel (0) target = $region5
    $region4: #{convnet_forward.1} parent=1 // pred_region
      _
    $region5: #{convnet_forward.1} parent=1 // pred_fallthru
      _
    // Predicated region
    $region6: #{convnet_forward.1} parent=1 // pred_check
      _
    $region7: #{convnet_forward.1} parent=1 // pred_check_branch
      %23 = sbr.rel (0) target = $region9
    $region8: #{convnet_forward.1} parent=1 // pred_region
      _
    $region9: #{convnet_forward.1} parent=1 // pred_fallthru
      _
    // Predicated region
    $region10: #{convnet_forward.1} parent=1 // pred_check
      _
    $region11: #{convnet_forward.1} parent=1 // pred_check_branch
      %25 = sbr.rel (0) target = $region13
    $region12: #{convnet_forward.1} parent=1 // pred_region
      _
    $region13: #{convnet_forward.1} parent=1 // pred_fallthru
      _
    // Predicated region
    $region14: #{convnet_forward.1} parent=1 // pred_check
      _
    $region15: #{convnet_forward.1} parent=1 // pred_check_branch
      %27 = sbr.rel (0) target = $region17
    $region16: #{convnet_forward.1} parent=1 // pred_region
      _
    $region17: #{convnet_forward.1} parent=1 // pred_fallthru
      _
    // Predicated region
    $region18: #{convnet_forward.1} parent=1 // pred_check
      _
    $region19: #{convnet_forward.1} parent=1 // pred_check_branch
      %29 = sbr.rel (0) target = $region21
    $region20: #{convnet_forward.1} parent=1 // pred_region
      _
    $region21: #{convnet_forward.1} parent=1 // pred_fallthru
      _
    // Predicated region
    $region22: #{convnet_forward.1} parent=1 // pred_check
      _
    $region23: #{convnet_forward.1} parent=1 // pred_check_branch
      %31 = sbr.rel (0) target = $region25
    $region24: #{convnet_forward.1} parent=1 // pred_region
      _
    $region25: #{convnet_forward.1} parent=1 // pred_fallthru
      _
    // Predicated region
    $region26: #{convnet_forward.1} parent=1 // pred_check
      _
    $region27: #{convnet_forward.1} parent=1 // pred_check_branch
      %33 = sbr.rel (0) target = $region29
    $region28: #{convnet_forward.1} parent=1 // pred_region
      _
    $region29: #{convnet_forward.1} parent=1 // pred_fallthru
      _
    // Predicated region
    $region30: #{convnet_forward.1} parent=1 // pred_check
      _
    $region31: #{convnet_forward.1} parent=1 // pred_check_branch
      %35 = sbr.rel (0) target = $region33
    $region32: #{convnet_forward.1} parent=1 // pred_region
      %37 = vsyncadd [#allocation7], 0
      %s38 = sshll.u32 %s7, 4
      %s39 = int_to_ptr.hbm [resolvable:$true] %s38
      %s40 = sshll.u32 [#allocation6], 4
      %s41 = int_to_ptr.vmem [resolvable:$true] %s40
      %46 = dma.hbm_to_vmem [thread:$0]  %s39, 11520, %s41, [#allocation7], 64, 64, 4
    $region33: #{convnet_forward.1} parent=1 // pred_fallthru
      _
    // Predicated region
    $region34: #{convnet_forward.1} parent=1 // pred_check
      _
    $region35: #{convnet_forward.1} parent=1 // pred_check_branch
      %48 = sbr.rel (0) target = $region37
    $region36: #{convnet_forward.1} parent=1 // pred_region
      _
    $region37: #{convnet_forward.1} parent=1 // pred_fallthru
      _
    // Predicated region
    $region38: #{convnet_forward.1} parent=1 // pred_check
      _
    $region39: #{convnet_forward.1} parent=1 // pred_check_branch
      %50 = sbr.rel (0) target = $region41
    $region40: #{convnet_forward.1} parent=1 // pred_region
      _
    $region41: #{convnet_forward.1} parent=1 // pred_fallthru
      _
    // Predicated region
    $region42: #{convnet_forward.1} parent=1 // pred_check
      _
    $region43: #{convnet_forward.1} parent=1 // pred_check_branch
      %52 = sbr.rel (0) target = $region45
    $region44: #{convnet_forward.1} parent=1 // pred_region
      _
    $region45: #{convnet_forward.1} parent=1 // pred_fallthru
      _
    // Predicated region
    $region46: #{convnet_forward.1} parent=1 // pred_check
      _
    $region47: #{convnet_forward.1} parent=1 // pred_check_branch
      %54 = sbr.rel (0) target = $region49
    $region48: #{convnet_forward.1} parent=1 // pred_region
      _
    $region49: #{convnet_forward.1} parent=1 // pred_fallthru
      _
    // Predicated region
    $region50: #{convnet_forward.1} parent=1 // pred_check
      _
    $region51: #{convnet_forward.1} parent=1 // pred_check_branch
      %56 = sbr.rel (0) target = $region53
    $region52: #{convnet_forward.1} parent=1 // pred_region
      _
    $region53: #{convnet_forward.1} parent=1 // pred_fallthru
      _
    // Predicated region
    $region54: #{convnet_forward.1} parent=1 // pred_check
      _
    $region55: #{convnet_forward.1} parent=1 // pred_check_branch
      %58 = sbr.rel (0) target = $region57
    $region56: #{convnet_forward.1} parent=1 // pred_region
      %60 = dma.done [#allocation7], 11520
    $region57: #{convnet_forward.1} parent=1 // pred_fallthru
      _
    %v62 = vld [vmem:[%s0] sm:$0xff]
    %v63 = vld [vmem:[%s0 + $0x8] sm:$0xff]
    %v64 = vld [vmem:[%s0 + $0x10] sm:$0xff]
    %v65 = vld [vmem:[%s0 + $0x18] sm:$0xff]
    %v66 = vld [vmem:[%s0 + $0x20] sm:$0xff]
    %v67 = vld [vmem:[%s0 + $0x28] sm:$0xff]
    %v68 = vld [vmem:[%s0 + $0x30] sm:$0xff]
    %v69 = vld [vmem:[%s0 + $0x38] sm:$0xff]
    %v70 = vld [vmem:[%s0 + $0x40] sm:$0xff]
    %v71 = vld [vmem:[%s0 + $0x48] sm:$0xff]
    %v72 = vld [vmem:[%s0 + $0x50] sm:$0xff]
    %v73 = vld [vmem:[%s0 + $0x58] sm:$0xff]
    %v74 = vld [vmem:[%s0 + $0x60] sm:$0xff]
    %v75 = vld [vmem:[%s0 + $0x68] sm:$0xff]
    %v76 = vld [vmem:[%s0 + $0x70] sm:$0xff]
    %v77 = vld [vmem:[%s0 + $0x78] sm:$0xff]
    %v78 = vld [vmem:[%s0 + $0x80] sm:$0xff]
    %v79 = vld [vmem:[%s0 + $0x88] sm:$0xff]
    %v80 = vld [vmem:[%s0 + $0x90] sm:$0xff]
    %v81 = vld [vmem:[%s0 + $0x98] sm:$0xff]
    %v82 = vld [vmem:[%s0 + $0xa0] sm:$0xff]
    %v83 = vld [vmem:[%s0 + $0xa8] sm:$0xff]
    %v84 = vld [vmem:[%s0 + $0xb0] sm:$0xff]
    %v85 = vld [vmem:[%s0 + $0xb8] sm:$0xff]
    %v86 = vld [vmem:[%s0 + $0xc0] sm:$0xff]
    %v87 = vld [vmem:[%s0 + $0xc8] sm:$0xff]
    %v88 = vld [vmem:[%s0 + $0xd0] sm:$0xff]
    %v89 = vld [vmem:[%s0 + $0xd8] sm:$0xff]
    %v90 = vld [vmem:[%s0 + $0xe0] sm:$0xff]
    %v91 = vld [vmem:[%s0 + $0xe8] sm:$0xff]
    %v92 = vld [vmem:[%s0 + $0xf0] sm:$0xff]
    %v93 = vld [vmem:[%s0 + $0xf8] sm:$0xff]
    %v94 = vld [vmem:[%s0 + $0x100] sm:$0xff]
    %v95 = vld [vmem:[%s0 + $0x108] sm:$0xff]
    %v96 = vld [vmem:[%s0 + $0x110] sm:$0xff]
    %v97 = vld [vmem:[%s0 + $0x118] sm:$0xff]
    %v98 = vld [vmem:[%s0 + $0x120] sm:$0xff]
    %v99 = vld [vmem:[%s0 + $0x128] sm:$0xff]
    %v100 = vld [vmem:[%s0 + $0x130] sm:$0xff]
    %v101 = vld [vmem:[%s0 + $0x138] sm:$0xff]
    %v102 = vld [vmem:[%s0 + $0x140] sm:$0xff]
    %v103 = vld [vmem:[%s0 + $0x148] sm:$0xff]
    %v104 = vld [vmem:[%s0 + $0x150] sm:$0xff]
    %v105 = vld [vmem:[%s0 + $0x158] sm:$0xff]
    %v106 = vld [vmem:[%s0 + $0x160] sm:$0xff]
    %vm107 = vcmask 31744
    %v108 = vsel %vm107, %v62, 0.0
    %v109 = vsel %vm107, %v63, 0.0
    %v110 = vadd.f32 %v108, %v109
    %v111 = vsel %vm107, %v64, 0.0
    %v112 = vadd.f32 %v110, %v111
    %v113 = vsel %vm107, %v65, 0.0
    %v114 = vadd.f32 %v112, %v113
    %v115 = vsel %vm107, %v66, 0.0
    %v116 = vadd.f32 %v114, %v115
    %v117 = vsel %vm107, %v67, 0.0
    %v118 = vadd.f32 %v116, %v117
    %v119 = vsel %vm107, %v68, 0.0
    %v120 = vadd.f32 %v118, %v119
    %v121 = vsel %vm107, %v69, 0.0
    %v122 = vadd.f32 %v120, %v121
    %v123 = vsel %vm107, %v70, 0.0
    %v124 = vadd.f32 %v122, %v123
    %v125 = vsel %vm107, %v71, 0.0
    %v126 = vadd.f32 %v124, %v125
    %v127 = vsel %vm107, %v72, 0.0
    %v128 = vadd.f32 %v126, %v127
    %v129 = vsel %vm107, %v73, 0.0
    %v130 = vadd.f32 %v128, %v129
    %v131 = vsel %vm107, %v74, 0.0
    %v132 = vadd.f32 %v130, %v131
    %v133 = vsel %vm107, %v75, 0.0
    %v134 = vadd.f32 %v132, %v133
    %v135 = vsel %vm107, %v76, 0.0
    %v136 = vadd.f32 %v134, %v135
    %v137 = vsel %vm107, %v77, 0.0
    %v138 = vadd.f32 %v136, %v137
    %v139 = vsel %vm107, %v78, 0.0
    %v140 = vadd.f32 %v138, %v139
    %v141 = vsel %vm107, %v79, 0.0
    %v142 = vadd.f32 %v140, %v141
    %v143 = vsel %vm107, %v80, 0.0
    %v144 = vadd.f32 %v142, %v143
    %v145 = vsel %vm107, %v81, 0.0
    %v146 = vadd.f32 %v144, %v145
    %v147 = vsel %vm107, %v82, 0.0
    %v148 = vadd.f32 %v146, %v147
    %v149 = vsel %vm107, %v83, 0.0
    %v150 = vadd.f32 %v148, %v149
    %v151 = vsel %vm107, %v84, 0.0
    %v152 = vadd.f32 %v150, %v151
    %v153 = vsel %vm107, %v85, 0.0
    %v154 = vadd.f32 %v152, %v153
    %v155 = vsel %vm107, %v86, 0.0
    %v156 = vadd.f32 %v154, %v155
    %v157 = vsel %vm107, %v87, 0.0
    %v158 = vadd.f32 %v156, %v157
    %v159 = vsel %vm107, %v88, 0.0
    %v160 = vadd.f32 %v158, %v159
    %v161 = vsel %vm107, %v89, 0.0
    %v162 = vadd.f32 %v160, %v161
    %v163 = vsel %vm107, %v90, 0.0
    %v164 = vadd.f32 %v162, %v163
    %v165 = vsel %vm107, %v91, 0.0
    %v166 = vadd.f32 %v164, %v165
    %v167 = vsel %vm107, %v92, 0.0
    %v168 = vadd.f32 %v166, %v167
    %v169 = vsel %vm107, %v93, 0.0
    %v170 = vadd.f32 %v168, %v169
    %v171 = vsel %vm107, %v94, 0.0
    %v172 = vadd.f32 %v170, %v171
    %v173 = vsel %vm107, %v95, 0.0
    %v174 = vadd.f32 %v172, %v173
    %v175 = vsel %vm107, %v96, 0.0
    %v176 = vadd.f32 %v174, %v175
    %v177 = vsel %vm107, %v97, 0.0
    %v178 = vadd.f32 %v176, %v177
    %v179 = vsel %vm107, %v98, 0.0
    %v180 = vadd.f32 %v178, %v179
    %v181 = vsel %vm107, %v99, 0.0
    %v182 = vadd.f32 %v180, %v181
    %v183 = vsel %vm107, %v100, 0.0
    %v184 = vadd.f32 %v182, %v183
    %v185 = vsel %vm107, %v101, 0.0
    %v186 = vadd.f32 %v184, %v185
    %v187 = vsel %vm107, %v102, 0.0
    %v188 = vadd.f32 %v186, %v187
    %v189 = vsel %vm107, %v103, 0.0
    %v190 = vadd.f32 %v188, %v189
    %v191 = vsel %vm107, %v104, 0.0
    %v192 = vadd.f32 %v190, %v191
    %v193 = vsel %vm107, %v105, 0.0
    %v194 = vadd.f32 %v192, %v193
    %v195 = vsel %vm107, %v106, 0.0
    %v196 = vadd.f32 %v194, %v195
    %v197 = vrot.slane %v196, 4
    %v198 = vadd.f32 %v196, %v197
    %v199 = vrot.slane %v198, 2
    %v200 = vadd.f32 %v198, %v199
    %v201 = vrot.slane %v200, 1
    %v202 = vadd.f32 %v200, %v201
    %v203 = vmul.f32 %v202, 0.0027777778
    %v204 = vsub.f32 %v62, %v203
    %v205 = vsub.f32 %v63, %v203
    %v206 = vsub.f32 %v64, %v203
    %v207 = vsub.f32 %v65, %v203
    %v208 = vsub.f32 %v66, %v203
    %v209 = vsub.f32 %v67, %v203
    %v210 = vsub.f32 %v68, %v203
    %v211 = vsub.f32 %v69, %v203
    %v212 = vsub.f32 %v70, %v203
    %v213 = vsub.f32 %v71, %v203
    %v214 = vsub.f32 %v72, %v203
    %v215 = vsub.f32 %v73, %v203
    %v216 = vsub.f32 %v74, %v203
    %v217 = vsub.f32 %v75, %v203
    %v218 = vsub.f32 %v76, %v203
    %v219 = vsub.f32 %v77, %v203
    %v220 = vsub.f32 %v78, %v203
    %v221 = vsub.f32 %v79, %v203
    %v222 = vsub.f32 %v80, %v203
    %v223 = vsub.f32 %v81, %v203
    %v224 = vsub.f32 %v82, %v203
    %v225 = vsub.f32 %v83, %v203
    %v226 = vsub.f32 %v84, %v203
    %v227 = vsub.f32 %v85, %v203
    %v228 = vsub.f32 %v86, %v203
    %v229 = vsub.f32 %v87, %v203
    %v230 = vsub.f32 %v88, %v203
    %v231 = vsub.f32 %v89, %v203
    %v232 = vsub.f32 %v90, %v203
    %v233 = vsub.f32 %v91, %v203
    %v234 = vsub.f32 %v92, %v203
    %v235 = vsub.f32 %v93, %v203
    %v236 = vsub.f32 %v94, %v203
    %v237 = vsub.f32 %v95, %v203
    %v238 = vsub.f32 %v96, %v203
    %v239 = vsub.f32 %v97, %v203
    %v240 = vsub.f32 %v98, %v203
    %v241 = vsub.f32 %v99, %v203
    %v242 = vsub.f32 %v100, %v203
    %v243 = vsub.f32 %v101, %v203
    %v244 = vsub.f32 %v102, %v203
    %v245 = vsub.f32 %v103, %v203
    %v246 = vsub.f32 %v104, %v203
    %v247 = vsub.f32 %v105, %v203
    %v248 = vsub.f32 %v106, %v203
    %v249 = vmul.f32 %v204, %v204
    %v250 = vmul.f32 %v205, %v205
    %v251 = vmul.f32 %v206, %v206
    %v252 = vmul.f32 %v207, %v207
    %v253 = vmul.f32 %v208, %v208
    %v254 = vmul.f32 %v209, %v209
    %v255 = vmul.f32 %v210, %v210
    %v256 = vmul.f32 %v211, %v211
    %v257 = vmul.f32 %v212, %v212
    %v258 = vmul.f32 %v213, %v213
    %v259 = vmul.f32 %v214, %v214
    %v260 = vmul.f32 %v215, %v215
    %v261 = vmul.f32 %v216, %v216
    %v262 = vmul.f32 %v217, %v217
    %v263 = vmul.f32 %v218, %v218
    %v264 = vmul.f32 %v219, %v219
    %v265 = vmul.f32 %v220, %v220
    %v266 = vmul.f32 %v221, %v221
    %v267 = vmul.f32 %v222, %v222
    %v268 = vmul.f32 %v223, %v223
    %v269 = vmul.f32 %v224, %v224
    %v270 = vmul.f32 %v225, %v225
    %v271 = vmul.f32 %v226, %v226
    %v272 = vmul.f32 %v227, %v227
    %v273 = vmul.f32 %v228, %v228
    %v274 = vmul.f32 %v229, %v229
    %v275 = vmul.f32 %v230, %v230
    %v276 = vmul.f32 %v231, %v231
    %v277 = vmul.f32 %v232, %v232
    %v278 = vmul.f32 %v233, %v233
    %v279 = vmul.f32 %v234, %v234
    %v280 = vmul.f32 %v235, %v235
    %v281 = vmul.f32 %v236, %v236
    %v282 = vmul.f32 %v237, %v237
    %v283 = vmul.f32 %v238, %v238
    %v284 = vmul.f32 %v239, %v239
    %v285 = vmul.f32 %v240, %v240
    %v286 = vmul.f32 %v241, %v241
    %v287 = vmul.f32 %v242, %v242
    %v288 = vmul.f32 %v243, %v243
    %v289 = vmul.f32 %v244, %v244
    %v290 = vmul.f32 %v245, %v245
    %v291 = vmul.f32 %v246, %v246
    %v292 = vmul.f32 %v247, %v247
    %v293 = vmul.f32 %v248, %v248
    %v294 = vsel %vm107, %v249, 0.0
    %v295 = vsel %vm107, %v250, 0.0
    %v296 = vadd.f32 %v294, %v295
    %v297 = vsel %vm107, %v251, 0.0
    %v298 = vadd.f32 %v296, %v297
    %v299 = vsel %vm107, %v252, 0.0
    %v300 = vadd.f32 %v298, %v299
    %v301 = vsel %vm107, %v253, 0.0
    %v302 = vadd.f32 %v300, %v301
    %v303 = vsel %vm107, %v254, 0.0
    %v304 = vadd.f32 %v302, %v303
    %v305 = vsel %vm107, %v255, 0.0
    %v306 = vadd.f32 %v304, %v305
    %v307 = vsel %vm107, %v256, 0.0
    %v308 = vadd.f32 %v306, %v307
    %v309 = vsel %vm107, %v257, 0.0
    %v310 = vadd.f32 %v308, %v309
    %v311 = vsel %vm107, %v258, 0.0
    %v312 = vadd.f32 %v310, %v311
    %v313 = vsel %vm107, %v259, 0.0
    %v314 = vadd.f32 %v312, %v313
    %v315 = vsel %vm107, %v260, 0.0
    %v316 = vadd.f32 %v314, %v315
    %v317 = vsel %vm107, %v261, 0.0
    %v318 = vadd.f32 %v316, %v317
    %v319 = vsel %vm107, %v262, 0.0
    %v320 = vadd.f32 %v318, %v319
    %v321 = vsel %vm107, %v263, 0.0
    %v322 = vadd.f32 %v320, %v321
    %v323 = vsel %vm107, %v264, 0.0
    %v324 = vadd.f32 %v322, %v323
    %v325 = vsel %vm107, %v265, 0.0
    %v326 = vadd.f32 %v324, %v325
    %v327 = vsel %vm107, %v266, 0.0
    %v328 = vadd.f32 %v326, %v327
    %v329 = vsel %vm107, %v267, 0.0
    %v330 = vadd.f32 %v328, %v329
    %v331 = vsel %vm107, %v268, 0.0
    %v332 = vadd.f32 %v330, %v331
    %v333 = vsel %vm107, %v269, 0.0
    %v334 = vadd.f32 %v332, %v333
    %v335 = vsel %vm107, %v270, 0.0
    %v336 = vadd.f32 %v334, %v335
    %v337 = vsel %vm107, %v271, 0.0
    %v338 = vadd.f32 %v336, %v337
    %v339 = vsel %vm107, %v272, 0.0
    %v340 = vadd.f32 %v338, %v339
    %v341 = vsel %vm107, %v273, 0.0
    %v342 = vadd.f32 %v340, %v341
    %v343 = vsel %vm107, %v274, 0.0
    %v344 = vadd.f32 %v342, %v343
    %v345 = vsel %vm107, %v275, 0.0
    %v346 = vadd.f32 %v344, %v345
    %v347 = vsel %vm107, %v276, 0.0
    %v348 = vadd.f32 %v346, %v347
    %v349 = vsel %vm107, %v277, 0.0
    %v350 = vadd.f32 %v348, %v349
    %v351 = vsel %vm107, %v278, 0.0
    %v352 = vadd.f32 %v350, %v351
    %v353 = vsel %vm107, %v279, 0.0
    %v354 = vadd.f32 %v352, %v353
    %v355 = vsel %vm107, %v280, 0.0
    %v356 = vadd.f32 %v354, %v355
    %v357 = vsel %vm107, %v281, 0.0
    %v358 = vadd.f32 %v356, %v357
    %v359 = vsel %vm107, %v282, 0.0
    %v360 = vadd.f32 %v358, %v359
    %v361 = vsel %vm107, %v283, 0.0
    %v362 = vadd.f32 %v360, %v361
    %v363 = vsel %vm107, %v284, 0.0
    %v364 = vadd.f32 %v362, %v363
    %v365 = vsel %vm107, %v285, 0.0
    %v366 = vadd.f32 %v364, %v365
    %v367 = vsel %vm107, %v286, 0.0
    %v368 = vadd.f32 %v366, %v367
    %v369 = vsel %vm107, %v287, 0.0
    %v370 = vadd.f32 %v368, %v369
    %v371 = vsel %vm107, %v288, 0.0
    %v372 = vadd.f32 %v370, %v371
    %v373 = vsel %vm107, %v289, 0.0
    %v374 = vadd.f32 %v372, %v373
    %v375 = vsel %vm107, %v290, 0.0
    %v376 = vadd.f32 %v374, %v375
    %v377 = vsel %vm107, %v291, 0.0
    %v378 = vadd.f32 %v376, %v377
    %v379 = vsel %vm107, %v292, 0.0
    %v380 = vadd.f32 %v378, %v379
    %v381 = vsel %vm107, %v293, 0.0
    %v382 = vadd.f32 %v380, %v381
    %v383 = vrot.slane %v382, 4
    %v384 = vadd.f32 %v382, %v383
    %v385 = vrot.slane %v384, 2
    %v386 = vadd.f32 %v384, %v385
    %v387 = vrot.slane %v386, 1
    %v388 = vadd.f32 %v386, %v387
    %v389 = vmul.f32 %v388, 0.0027777778
    %v390 = vadd.f32 %v389, 1e-05
    %v391 = vrsqrt.pop %v390
    %v392 = vmul.f32 %v391, %v390
    %v393 = vmul.f32 %v392, %v391
    %v394 = vmul.f32 0.5, %v393
    %v395 = vsub.f32 1.5, %v394
    %v396 = vmul.f32 %v391, %v395
    %vm397 = vweird.f32 %v390
    %vm398 = vweird.f32 %v391
    %vm399 = vmor %vm397, %vm398
    %v400 = vsel %vm399, %v391, %v396
    %v401 = vld [vmem:[%s0 + $0xb0] sm:$0xf]
    %v402 = vsub.f32 %v401, %v203
    %v403 = vmul.f32 %v204, %v400
    %v404 = vmul.f32 %v205, %v400
    %v405 = vmul.f32 %v206, %v400
    %v406 = vmul.f32 %v207, %v400
    %v407 = vmul.f32 %v208, %v400
    %v408 = vmul.f32 %v209, %v400
    %v409 = vmul.f32 %v210, %v400
    %v410 = vmul.f32 %v211, %v400
    %v411 = vmul.f32 %v212, %v400
    %v412 = vmul.f32 %v213, %v400
    %v413 = vmul.f32 %v214, %v400
    %v414 = vmul.f32 %v215, %v400
    %v415 = vmul.f32 %v216, %v400
    %v416 = vmul.f32 %v217, %v400
    %v417 = vmul.f32 %v218, %v400
    %v418 = vmul.f32 %v219, %v400
    %v419 = vmul.f32 %v220, %v400
    %v420 = vmul.f32 %v221, %v400
    %v421 = vmul.f32 %v222, %v400
    %v422 = vmul.f32 %v223, %v400
    %v423 = vmul.f32 %v224, %v400
    %v424 = vmul.f32 %v225, %v400
    %v425 = vmul.f32 %v402, %v400
    %426 = vst.msk [vmem:[#allocation2 + $0x2] sm:$0xff] %vm107, %v403
    %427 = vst.msk [vmem:[#allocation2 + $0xa] sm:$0xff] %vm107, %v404
    %428 = vst.msk [vmem:[#allocation2 + $0x12] sm:$0xff] %vm107, %v405
    %429 = vst.msk [vmem:[#allocation2 + $0x1a] sm:$0xff] %vm107, %v406
    %430 = vst.msk [vmem:[#allocation2 + $0x22] sm:$0xff] %vm107, %v407
    %431 = vst.msk [vmem:[#allocation2 + $0x2a] sm:$0xff] %vm107, %v408
    %432 = vst.msk [vmem:[#allocation2 + $0x32] sm:$0xff] %vm107, %v409
    %433 = vst.msk [vmem:[#allocation2 + $0x3a] sm:$0xff] %vm107, %v410
    %434 = vst.msk [vmem:[#allocation2 + $0x42] sm:$0xff] %vm107, %v411
    %435 = vst.msk [vmem:[#allocation2 + $0x4a] sm:$0xff] %vm107, %v412
    %436 = vst.msk [vmem:[#allocation2 + $0x52] sm:$0xff] %vm107, %v413
    %437 = vst.msk [vmem:[#allocation2 + $0x5a] sm:$0xff] %vm107, %v414
    %438 = vst.msk [vmem:[#allocation2 + $0x62] sm:$0xff] %vm107, %v415
    %439 = vst.msk [vmem:[#allocation2 + $0x6a] sm:$0xff] %vm107, %v416
    %440 = vst.msk [vmem:[#allocation2 + $0x72] sm:$0xff] %vm107, %v417
    %441 = vst.msk [vmem:[#allocation2 + $0x7a] sm:$0xff] %vm107, %v418
    %442 = vst.msk [vmem:[#allocation2 + $0x82] sm:$0xff] %vm107, %v419
    %443 = vst.msk [vmem:[#allocation2 + $0x8a] sm:$0xff] %vm107, %v420
    %444 = vst.msk [vmem:[#allocation2 + $0x92] sm:$0xff] %vm107, %v421
    %445 = vst.msk [vmem:[#allocation2 + $0x9a] sm:$0xff] %vm107, %v422
    %446 = vst.msk [vmem:[#allocation2 + $0xa2] sm:$0xff] %vm107, %v423
    %447 = vst.msk [vmem:[#allocation2 + $0xaa] sm:$0xff] %vm107, %v424
    %vm448 = vcmask 27648
    %449 = vst.msk [vmem:[#allocation2 + $0xb2] sm:$0xf] %vm448, %v425
    %vm450 = vcmask 27650
    %451 = vst.msk [vmem:[#allocation2 - $0x2] sm:$0xc] %vm450, %v425
    %vm452 = vcmask 25600
    %453 = vst.msk [vmem:[#allocation2 + $0xb6] sm:$0x3] %vm452, %v403
    %v454 = vld [vmem:[#allocation2] ss:$2 sm:$0xff]
    %s455 = scalar_lea.vmem [#allocation2], 16
    %v456 = vld [vmem:[%s455] ss:$2 sm:$0xff]
    %s457 = scalar_lea.vmem [#allocation2], 32
    %v458 = vld [vmem:[%s457] ss:$2 sm:$0xff]
    %s459 = scalar_lea.vmem [#allocation2], 48
    %v460 = vld [vmem:[%s459] ss:$2 sm:$0xff]
    %s461 = scalar_lea.vmem [#allocation2], 64
    %v462 = vld [vmem:[%s461] ss:$2 sm:$0xff]
    %s463 = scalar_lea.vmem [#allocation2], 80
    %v464 = vld [vmem:[%s463] ss:$2 sm:$0xff]
    %s465 = scalar_lea.vmem [#allocation2], 96
    %v466 = vld [vmem:[%s465] ss:$2 sm:$0xff]
    %s467 = scalar_lea.vmem [#allocation2], 112
    %v468 = vld [vmem:[%s467] ss:$2 sm:$0xff]
    %s469 = scalar_lea.vmem [#allocation2], 128
    %v470 = vld [vmem:[%s469] ss:$2 sm:$0xff]
    %s471 = scalar_lea.vmem [#allocation2], 144
    %v472 = vld [vmem:[%s471] ss:$2 sm:$0xff]
    %s473 = scalar_lea.vmem [#allocation2], 160
    %v474 = vld [vmem:[%s473] ss:$2 sm:$0xff]
    %s475 = scalar_lea.vmem [#allocation2], 176
    %v476 = vld [vmem:[%s475] ss:$2 sm:$0x3]
    %v477 = vld [vmem:[%s1] sm:$0xf]
    %s478 = scalar_lea.vmem [#allocation2], 1
    %v479 = vld [vmem:[%s478] ss:$2 sm:$0xff]
    %s480 = scalar_lea.vmem [#allocation2], 17
    %v481 = vld [vmem:[%s480] ss:$2 sm:$0xff]
    %s482 = scalar_lea.vmem [#allocation2], 33
    %v483 = vld [vmem:[%s482] ss:$2 sm:$0xff]
    %s484 = scalar_lea.vmem [#allocation2], 49
    %v485 = vld [vmem:[%s484] ss:$2 sm:$0xff]
    %s486 = scalar_lea.vmem [#allocation2], 65
    %v487 = vld [vmem:[%s486] ss:$2 sm:$0xff]
    %s488 = scalar_lea.vmem [#allocation2], 81
    %v489 = vld [vmem:[%s488] ss:$2 sm:$0xff]
    %s490 = scalar_lea.vmem [#allocation2], 97
    %v491 = vld [vmem:[%s490] ss:$2 sm:$0xff]
    %s492 = scalar_lea.vmem [#allocation2], 113
    %v493 = vld [vmem:[%s492] ss:$2 sm:$0xff]
    %s494 = scalar_lea.vmem [#allocation2], 129
    %v495 = vld [vmem:[%s494] ss:$2 sm:$0xff]
    %s496 = scalar_lea.vmem [#allocation2], 145
    %v497 = vld [vmem:[%s496] ss:$2 sm:$0xff]
    %s498 = scalar_lea.vmem [#allocation2], 161
    %v499 = vld [vmem:[%s498] ss:$2 sm:$0xff]
    %s500 = scalar_lea.vmem [#allocation2], 177
    %v501 = vld [vmem:[%s500] ss:$2 sm:$0x3]
    %s502 = scalar_lea.vmem %s1, 4
    %v503 = vld [vmem:[%s502] sm:$0xf]
    %v505 = vsel %vm107, %v479, 0
    %v508 = vsel %vm107, %v481, 0
    %v511 = vsel %vm107, %v483, 0
    %v514 = vsel %vm107, %v485, 0
    %v517 = vsel %vm107, %v487, 0
    %v520 = vsel %vm107, %v489, 0
    %v523 = vsel %vm107, %v491, 0
    %v526 = vsel %vm107, %v493, 0
    %v529 = vsel %vm107, %v495, 0
    %v532 = vsel %vm107, %v497, 0
    %v535 = vsel %vm107, %v499, 0
    %v538 = vsel %vm107, %v501, 0
    %vm540 = vcmask 1043456
    %v542 = vsel %vm540, %v503, 0
    %544 = vmatpush.msra.mxu0 0.0
    %545 = vmatpush.msra.mxu0 0.0
    %546 = vmatpush.msra.mxu0 0.0
    %547 = vmatpush.msra.mxu0 0.0
    %548 = vmatpush.msra.mxu0 0.0
    %549 = vmatpush.msra.mxu0 0.0
    %550 = vmatpush.msra.mxu0 0.0
    %551 = vmatpush.msra.mxu0 0.0
    %552 = vmatpush.msra.mxu0 0.0
    %553 = vmatpush.msra.mxu0 0.0
    %554 = vmatpush.msra.mxu0 0.0
    %555 = vmatpush.msra.mxu0 0.0
    %556 = vmatpush.msra.mxu0 0.0
    %557 = vmatpush.msra.mxu0 0.0
    %558 = vmatpush.msra.mxu0 0.0
    %559 = vmatpush.msra.mxu0 %v542
    %560 = vmatmul.f32.gmra.mxu0 %v505
    %v561 = vpop.f32.mrf.mxu0
    %v562 = vadd.f32 0.0, %v561
    %563 = vmatmul.f32.gmra.mxu0 %v508
    %v564 = vpop.f32.mrf.mxu0
    %v565 = vadd.f32 0.0, %v564
    %566 = vmatmul.f32.gmra.mxu0 %v511
    %v567 = vpop.f32.mrf.mxu0
    %v568 = vadd.f32 0.0, %v567
    %569 = vmatmul.f32.gmra.mxu0 %v514
    %v570 = vpop.f32.mrf.mxu0
    %v571 = vadd.f32 0.0, %v570
    %572 = vmatmul.f32.gmra.mxu0 %v517
    %v573 = vpop.f32.mrf.mxu0
    %v574 = vadd.f32 0.0, %v573
    %575 = vmatmul.f32.gmra.mxu0 %v520
    %v576 = vpop.f32.mrf.mxu0
    %v577 = vadd.f32 0.0, %v576
    %578 = vmatmul.f32.gmra.mxu0 %v523
    %v579 = vpop.f32.mrf.mxu0
    %v580 = vadd.f32 0.0, %v579
    %581 = vmatmul.f32.gmra.mxu0 %v526
    %v582 = vpop.f32.mrf.mxu0
    %v583 = vadd.f32 0.0, %v582
    %584 = vmatmul.f32.gmra.mxu0 %v529
    %v585 = vpop.f32.mrf.mxu0
    %v586 = vadd.f32 0.0, %v585
    %587 = vmatmul.f32.gmra.mxu0 %v532
    %v588 = vpop.f32.mrf.mxu0
    %v589 = vadd.f32 0.0, %v588
    %590 = vmatmul.f32.gmra.mxu0 %v535
    %v591 = vpop.f32.mrf.mxu0
    %v592 = vadd.f32 0.0, %v591
    %593 = vmatmul.f32.gmra.mxu0 %v538
    %v594 = vpop.f32.mrf.mxu0
    %v595 = vadd.f32 0.0, %v594
    %596 = vdwg.mxu0
    %v598 = vsel %vm107, %v454, 0
    %v601 = vsel %vm107, %v456, 0
    %v604 = vsel %vm107, %v458, 0
    %v607 = vsel %vm107, %v460, 0
    %v610 = vsel %vm107, %v462, 0
    %v613 = vsel %vm107, %v464, 0
    %v616 = vsel %vm107, %v466, 0
    %v619 = vsel %vm107, %v468, 0
    %v622 = vsel %vm107, %v470, 0
    %v625 = vsel %vm107, %v472, 0
    %v628 = vsel %vm107, %v474, 0
    %v631 = vsel %vm107, %v476, 0
    %v634 = vsel %vm540, %v477, 0
    %636 = vmatpush.msra.mxu0 0.0
    %637 = vmatpush.msra.mxu0 0.0
    %638 = vmatpush.msra.mxu0 0.0
    %639 = vmatpush.msra.mxu0 0.0
    %640 = vmatpush.msra.mxu0 0.0
    %641 = vmatpush.msra.mxu0 0.0
    %642 = vmatpush.msra.mxu0 0.0
    %643 = vmatpush.msra.mxu0 0.0
    %644 = vmatpush.msra.mxu0 0.0
    %645 = vmatpush.msra.mxu0 0.0
    %646 = vmatpush.msra.mxu0 0.0
    %647 = vmatpush.msra.mxu0 0.0
    %648 = vmatpush.msra.mxu0 0.0
    %649 = vmatpush.msra.mxu0 0.0
    %650 = vmatpush.msra.mxu0 0.0
    %651 = vmatpush.msra.mxu0 %v634
    %652 = vmatmul.f32.gmra.mxu0 %v598
    %v653 = vpop.f32.mrf.mxu0
    %v654 = vadd.f32 %v562, %v653
    %655 = vmatmul.f32.gmra.mxu0 %v601
    %v656 = vpop.f32.mrf.mxu0
    %v657 = vadd.f32 %v565, %v656
    %658 = vmatmul.f32.gmra.mxu0 %v604
    %v659 = vpop.f32.mrf.mxu0
    %v660 = vadd.f32 %v568, %v659
    %661 = vmatmul.f32.gmra.mxu0 %v607
    %v662 = vpop.f32.mrf.mxu0
    %v663 = vadd.f32 %v571, %v662
    %664 = vmatmul.f32.gmra.mxu0 %v610
    %v665 = vpop.f32.mrf.mxu0
    %v666 = vadd.f32 %v574, %v665
    %667 = vmatmul.f32.gmra.mxu0 %v613
    %v668 = vpop.f32.mrf.mxu0
    %v669 = vadd.f32 %v577, %v668
    %670 = vmatmul.f32.gmra.mxu0 %v616
    %v671 = vpop.f32.mrf.mxu0
    %v672 = vadd.f32 %v580, %v671
    %673 = vmatmul.f32.gmra.mxu0 %v619
    %v674 = vpop.f32.mrf.mxu0
    %v675 = vadd.f32 %v583, %v674
    %676 = vmatmul.f32.gmra.mxu0 %v622
    %v677 = vpop.f32.mrf.mxu0
    %v678 = vadd.f32 %v586, %v677
    %679 = vmatmul.f32.gmra.mxu0 %v625
    %v680 = vpop.f32.mrf.mxu0
    %v681 = vadd.f32 %v589, %v680
    %682 = vmatmul.f32.gmra.mxu0 %v628
    %v683 = vpop.f32.mrf.mxu0
    %v684 = vadd.f32 %v592, %v683
    %685 = vmatmul.f32.gmra.mxu0 %v631
    %v686 = vpop.f32.mrf.mxu0
    %v687 = vadd.f32 %v595, %v686
    %688 = vdwg.mxu0
    %s689 = scalar_lea.vmem [#allocation2], 2
    %v690 = vld [vmem:[%s689] ss:$2 sm:$0xff]
    %s691 = scalar_lea.vmem [#allocation2], 18
    %v692 = vld [vmem:[%s691] ss:$2 sm:$0xff]
    %s693 = scalar_lea.vmem [#allocation2], 34
    %v694 = vld [vmem:[%s693] ss:$2 sm:$0xff]
    %s695 = scalar_lea.vmem [#allocation2], 50
    %v696 = vld [vmem:[%s695] ss:$2 sm:$0xff]
    %s697 = scalar_lea.vmem [#allocation2], 66
    %v698 = vld [vmem:[%s697] ss:$2 sm:$0xff]
    %s699 = scalar_lea.vmem [#allocation2], 82
    %v700 = vld [vmem:[%s699] ss:$2 sm:$0xff]
    %s701 = scalar_lea.vmem [#allocation2], 98
    %v702 = vld [vmem:[%s701] ss:$2 sm:$0xff]
    %s703 = scalar_lea.vmem [#allocation2], 114
    %v704 = vld [vmem:[%s703] ss:$2 sm:$0xff]
    %s705 = scalar_lea.vmem [#allocation2], 130
    %v706 = vld [vmem:[%s705] ss:$2 sm:$0xff]
    %s707 = scalar_lea.vmem [#allocation2], 146
    %v708 = vld [vmem:[%s707] ss:$2 sm:$0xff]
    %s709 = scalar_lea.vmem [#allocation2], 162
    %v710 = vld [vmem:[%s709] ss:$2 sm:$0xff]
    %s711 = scalar_lea.vmem [#allocation2], 178
    %v712 = vld [vmem:[%s711] ss:$2 sm:$0x3]
    %s713 = scalar_lea.vmem %s1, 8
    %v714 = vld [vmem:[%s713] sm:$0xf]
    %v716 = vsel %vm107, %v690, 0
    %v719 = vsel %vm107, %v692, 0
    %v722 = vsel %vm107, %v694, 0
    %v725 = vsel %vm107, %v696, 0
    %v728 = vsel %vm107, %v698, 0
    %v731 = vsel %vm107, %v700, 0
    %v734 = vsel %vm107, %v702, 0
    %v737 = vsel %vm107, %v704, 0
    %v740 = vsel %vm107, %v706, 0
    %v743 = vsel %vm107, %v708, 0
    %v746 = vsel %vm107, %v710, 0
    %v749 = vsel %vm107, %v712, 0
    %v752 = vsel %vm540, %v714, 0
    %754 = vmatpush.msra.mxu0 0.0
    %755 = vmatpush.msra.mxu0 0.0
    %756 = vmatpush.msra.mxu0 0.0
    %757 = vmatpush.msra.mxu0 0.0
    %758 = vmatpush.msra.mxu0 0.0
    %759 = vmatpush.msra.mxu0 0.0
    %760 = vmatpush.msra.mxu0 0.0
    %761 = vmatpush.msra.mxu0 0.0
    %762 = vmatpush.msra.mxu0 0.0
    %763 = vmatpush.msra.mxu0 0.0
    %764 = vmatpush.msra.mxu0 0.0
    %765 = vmatpush.msra.mxu0 0.0
    %766 = vmatpush.msra.mxu0 0.0
    %767 = vmatpush.msra.mxu0 0.0
    %768 = vmatpush.msra.mxu0 0.0
    %769 = vmatpush.msra.mxu0 %v752
    %770 = vmatmul.f32.gmra.mxu0 %v716
    %v771 = vpop.f32.mrf.mxu0
    %v772 = vadd.f32 0.0, %v771
    %773 = vmatmul.f32.gmra.mxu0 %v719
    %v774 = vpop.f32.mrf.mxu0
    %v775 = vadd.f32 0.0, %v774
    %776 = vmatmul.f32.gmra.mxu0 %v722
    %v777 = vpop.f32.mrf.mxu0
    %v778 = vadd.f32 0.0, %v777
    %779 = vmatmul.f32.gmra.mxu0 %v725
    %v780 = vpop.f32.mrf.mxu0
    %v781 = vadd.f32 0.0, %v780
    %782 = vmatmul.f32.gmra.mxu0 %v728
    %v783 = vpop.f32.mrf.mxu0
    %v784 = vadd.f32 0.0, %v783
    %785 = vmatmul.f32.gmra.mxu0 %v731
    %v786 = vpop.f32.mrf.mxu0
    %v787 = vadd.f32 0.0, %v786
    %788 = vmatmul.f32.gmra.mxu0 %v734
    %v789 = vpop.f32.mrf.mxu0
    %v790 = vadd.f32 0.0, %v789
    %791 = vmatmul.f32.gmra.mxu0 %v737
    %v792 = vpop.f32.mrf.mxu0
    %v793 = vadd.f32 0.0, %v792
    %794 = vmatmul.f32.gmra.mxu0 %v740
    %v795 = vpop.f32.mrf.mxu0
    %v796 = vadd.f32 0.0, %v795
    %797 = vmatmul.f32.gmra.mxu0 %v743
    %v798 = vpop.f32.mrf.mxu0
    %v799 = vadd.f32 0.0, %v798
    %800 = vmatmul.f32.gmra.mxu0 %v746
    %v801 = vpop.f32.mrf.mxu0
    %v802 = vadd.f32 0.0, %v801
    %803 = vmatmul.f32.gmra.mxu0 %v749
    %v804 = vpop.f32.mrf.mxu0
    %v805 = vadd.f32 0.0, %v804
    %806 = vdwg.mxu0
    %v807 = vadd.f32 %v654, %v772
    %v808 = vadd.f32 %v657, %v775
    %v809 = vadd.f32 %v660, %v778
    %v810 = vadd.f32 %v663, %v781
    %v811 = vadd.f32 %v666, %v784
    %v812 = vadd.f32 %v669, %v787
    %v813 = vadd.f32 %v672, %v790
    %v814 = vadd.f32 %v675, %v793
    %v815 = vadd.f32 %v678, %v796
    %v816 = vadd.f32 %v681, %v799
    %v817 = vadd.f32 %v684, %v802
    %v818 = vadd.f32 %v687, %v805
    %s819 = scalar_lea.vmem [#allocation2], 3
    %v820 = vld [vmem:[%s819] ss:$2 sm:$0xff]
    %s821 = scalar_lea.vmem [#allocation2], 19
    %v822 = vld [vmem:[%s821] ss:$2 sm:$0xff]
    %s823 = scalar_lea.vmem [#allocation2], 35
    %v824 = vld [vmem:[%s823] ss:$2 sm:$0xff]
    %s825 = scalar_lea.vmem [#allocation2], 51
    %v826 = vld [vmem:[%s825] ss:$2 sm:$0xff]
    %s827 = scalar_lea.vmem [#allocation2], 67
    %v828 = vld [vmem:[%s827] ss:$2 sm:$0xff]
    %s829 = scalar_lea.vmem [#allocation2], 83
    %v830 = vld [vmem:[%s829] ss:$2 sm:$0xff]
    %s831 = scalar_lea.vmem [#allocation2], 99
    %v832 = vld [vmem:[%s831] ss:$2 sm:$0xff]
    %s833 = scalar_lea.vmem [#allocation2], 115
    %v834 = vld [vmem:[%s833] ss:$2 sm:$0xff]
    %s835 = scalar_lea.vmem [#allocation2], 131
    %v836 = vld [vmem:[%s835] ss:$2 sm:$0xff]
    %s837 = scalar_lea.vmem [#allocation2], 147
    %v838 = vld [vmem:[%s837] ss:$2 sm:$0xff]
    %s839 = scalar_lea.vmem [#allocation2], 163
    %v840 = vld [vmem:[%s839] ss:$2 sm:$0xff]
    %s841 = scalar_lea.vmem [#allocation2], 179
    %v842 = vld [vmem:[%s841] ss:$2 sm:$0x3]
    %s843 = scalar_lea.vmem %s1, 12
    %v844 = vld [vmem:[%s843] sm:$0xf]
    %v846 = vsel %vm107, %v820, 0
    %v849 = vsel %vm107, %v822, 0
    %v852 = vsel %vm107, %v824, 0
    %v855 = vsel %vm107, %v826, 0
    %v858 = vsel %vm107, %v828, 0
    %v861 = vsel %vm107, %v830, 0
    %v864 = vsel %vm107, %v832, 0
    %v867 = vsel %vm107, %v834, 0
    %v870 = vsel %vm107, %v836, 0
    %v873 = vsel %vm107, %v838, 0
    %v876 = vsel %vm107, %v840, 0
    %v879 = vsel %vm107, %v842, 0
    %v882 = vsel %vm540, %v844, 0
    %884 = vmatpush.msra.mxu0 0.0
    %885 = vmatpush.msra.mxu0 0.0
    %886 = vmatpush.msra.mxu0 0.0
    %887 = vmatpush.msra.mxu0 0.0
    %888 = vmatpush.msra.mxu0 0.0
    %889 = vmatpush.msra.mxu0 0.0
    %890 = vmatpush.msra.mxu0 0.0
    %891 = vmatpush.msra.mxu0 0.0
    %892 = vmatpush.msra.mxu0 0.0
    %893 = vmatpush.msra.mxu0 0.0
    %894 = vmatpush.msra.mxu0 0.0
    %895 = vmatpush.msra.mxu0 0.0
    %896 = vmatpush.msra.mxu0 0.0
    %897 = vmatpush.msra.mxu0 0.0
    %898 = vmatpush.msra.mxu0 0.0
    %899 = vmatpush.msra.mxu0 %v882
    %900 = vmatmul.f32.gmra.mxu0 %v846
    %v901 = vpop.f32.mrf.mxu0
    %v902 = vadd.f32 0.0, %v901
    %903 = vmatmul.f32.gmra.mxu0 %v849
    %v904 = vpop.f32.mrf.mxu0
    %v905 = vadd.f32 0.0, %v904
    %906 = vmatmul.f32.gmra.mxu0 %v852
    %v907 = vpop.f32.mrf.mxu0
    %v908 = vadd.f32 0.0, %v907
    %909 = vmatmul.f32.gmra.mxu0 %v855
    %v910 = vpop.f32.mrf.mxu0
    %v911 = vadd.f32 0.0, %v910
    %912 = vmatmul.f32.gmra.mxu0 %v858
    %v913 = vpop.f32.mrf.mxu0
    %v914 = vadd.f32 0.0, %v913
    %915 = vmatmul.f32.gmra.mxu0 %v861
    %v916 = vpop.f32.mrf.mxu0
    %v917 = vadd.f32 0.0, %v916
    %918 = vmatmul.f32.gmra.mxu0 %v864
    %v919 = vpop.f32.mrf.mxu0
    %v920 = vadd.f32 0.0, %v919
    %921 = vmatmul.f32.gmra.mxu0 %v867
    %v922 = vpop.f32.mrf.mxu0
    %v923 = vadd.f32 0.0, %v922
    %924 = vmatmul.f32.gmra.mxu0 %v870
    %v925 = vpop.f32.mrf.mxu0
    %v926 = vadd.f32 0.0, %v925
    %927 = vmatmul.f32.gmra.mxu0 %v873
    %v928 = vpop.f32.mrf.mxu0
    %v929 = vadd.f32 0.0, %v928
    %930 = vmatmul.f32.gmra.mxu0 %v876
    %v931 = vpop.f32.mrf.mxu0
    %v932 = vadd.f32 0.0, %v931
    %933 = vmatmul.f32.gmra.mxu0 %v879
    %v934 = vpop.f32.mrf.mxu0
    %v935 = vadd.f32 0.0, %v934
    %936 = vdwg.mxu0
    %v937 = vadd.f32 %v807, %v902
    %v938 = vadd.f32 %v808, %v905
    %v939 = vadd.f32 %v809, %v908
    %v940 = vadd.f32 %v810, %v911
    %v941 = vadd.f32 %v811, %v914
    %v942 = vadd.f32 %v812, %v917
    %v943 = vadd.f32 %v813, %v920
    %v944 = vadd.f32 %v814, %v923
    %v945 = vadd.f32 %v815, %v926
    %v946 = vadd.f32 %v816, %v929
    %v947 = vadd.f32 %v817, %v932
    %v948 = vadd.f32 %v818, %v935
    %s949 = scalar_lea.vmem [#allocation2], 4
    %v950 = vld [vmem:[%s949] ss:$2 sm:$0xff]
    %s951 = scalar_lea.vmem [#allocation2], 20
    %v952 = vld [vmem:[%s951] ss:$2 sm:$0xff]
    %s953 = scalar_lea.vmem [#allocation2], 36
    %v954 = vld [vmem:[%s953] ss:$2 sm:$0xff]
    %s955 = scalar_lea.vmem [#allocation2], 52
    %v956 = vld [vmem:[%s955] ss:$2 sm:$0xff]
    %s957 = scalar_lea.vmem [#allocation2], 68
    %v958 = vld [vmem:[%s957] ss:$2 sm:$0xff]
    %s959 = scalar_lea.vmem [#allocation2], 84
    %v960 = vld [vmem:[%s959] ss:$2 sm:$0xff]
    %s961 = scalar_lea.vmem [#allocation2], 100
    %v962 = vld [vmem:[%s961] ss:$2 sm:$0xff]
    %s963 = scalar_lea.vmem [#allocation2], 116
    %v964 = vld [vmem:[%s963] ss:$2 sm:$0xff]
    %s965 = scalar_lea.vmem [#allocation2], 132
    %v966 = vld [vmem:[%s965] ss:$2 sm:$0xff]
    %s967 = scalar_lea.vmem [#allocation2], 148
    %v968 = vld [vmem:[%s967] ss:$2 sm:$0xff]
    %s969 = scalar_lea.vmem [#allocation2], 164
    %v970 = vld [vmem:[%s969] ss:$2 sm:$0xff]
    %s971 = scalar_lea.vmem [#allocation2], 180
    %v972 = vld [vmem:[%s971] ss:$2 sm:$0x3]
    %s973 = scalar_lea.vmem %s1, 16
    %v974 = vld [vmem:[%s973] sm:$0xf]
    %v976 = vsel %vm107, %v950, 0
    %v979 = vsel %vm107, %v952, 0
    %v982 = vsel %vm107, %v954, 0
    %v985 = vsel %vm107, %v956, 0
    %v988 = vsel %vm107, %v958, 0
    %v991 = vsel %vm107, %v960, 0
    %v994 = vsel %vm107, %v962, 0
    %v997 = vsel %vm107, %v964, 0
    %v1000 = vsel %vm107, %v966, 0
    %v1003 = vsel %vm107, %v968, 0
    %v1006 = vsel %vm107, %v970, 0
    %v1009 = vsel %vm107, %v972, 0
    %v1012 = vsel %vm540, %v974, 0
    %1014 = vmatpush.msra.mxu0 0.0
    %1015 = vmatpush.msra.mxu0 0.0
    %1016 = vmatpush.msra.mxu0 0.0
    %1017 = vmatpush.msra.mxu0 0.0
    %1018 = vmatpush.msra.mxu0 0.0
    %1019 = vmatpush.msra.mxu0 0.0
    %1020 = vmatpush.msra.mxu0 0.0
    %1021 = vmatpush.msra.mxu0 0.0
    %1022 = vmatpush.msra.mxu0 0.0
    %1023 = vmatpush.msra.mxu0 0.0
    %1024 = vmatpush.msra.mxu0 0.0
    %1025 = vmatpush.msra.mxu0 0.0
    %1026 = vmatpush.msra.mxu0 0.0
    %1027 = vmatpush.msra.mxu0 0.0
    %1028 = vmatpush.msra.mxu0 0.0
    %1029 = vmatpush.msra.mxu0 %v1012
    %1030 = vmatmul.f32.gmra.mxu0 %v976
    %v1031 = vpop.f32.mrf.mxu0
    %v1032 = vadd.f32 0.0, %v1031
    %1033 = vmatmul.f32.gmra.mxu0 %v979
    %v1034 = vpop.f32.mrf.mxu0
    %v1035 = vadd.f32 0.0, %v1034
    %1036 = vmatmul.f32.gmra.mxu0 %v982
    %v1037 = vpop.f32.mrf.mxu0
    %v1038 = vadd.f32 0.0, %v1037
    %1039 = vmatmul.f32.gmra.mxu0 %v985
    %v1040 = vpop.f32.mrf.mxu0
    %v1041 = vadd.f32 0.0, %v1040
    %1042 = vmatmul.f32.gmra.mxu0 %v988
    %v1043 = vpop.f32.mrf.mxu0
    %v1044 = vadd.f32 0.0, %v1043
    %1045 = vmatmul.f32.gmra.mxu0 %v991
    %v1046 = vpop.f32.mrf.mxu0
    %v1047 = vadd.f32 0.0, %v1046
    %1048 = vmatmul.f32.gmra.mxu0 %v994
    %v1049 = vpop.f32.mrf.mxu0
    %v1050 = vadd.f32 0.0, %v1049
    %1051 = vmatmul.f32.gmra.mxu0 %v997
    %v1052 = vpop.f32.mrf.mxu0
    %v1053 = vadd.f32 0.0, %v1052
    %1054 = vmatmul.f32.gmra.mxu0 %v1000
    %v1055 = vpop.f32.mrf.mxu0
    %v1056 = vadd.f32 0.0, %v1055
    %1057 = vmatmul.f32.gmra.mxu0 %v1003
    %v1058 = vpop.f32.mrf.mxu0
    %v1059 = vadd.f32 0.0, %v1058
    %1060 = vmatmul.f32.gmra.mxu0 %v1006
    %v1061 = vpop.f32.mrf.mxu0
    %v1062 = vadd.f32 0.0, %v1061
    %1063 = vmatmul.f32.gmra.mxu0 %v1009
    %v1064 = vpop.f32.mrf.mxu0
    %v1065 = vadd.f32 0.0, %v1064
    %1066 = vdwg.mxu0
    %v1067 = vadd.f32 %v937, %v1032
    %v1068 = vadd.f32 %v938, %v1035
    %v1069 = vadd.f32 %v939, %v1038
    %v1070 = vadd.f32 %v940, %v1041
    %v1071 = vadd.f32 %v941, %v1044
    %v1072 = vadd.f32 %v942, %v1047
    %v1073 = vadd.f32 %v943, %v1050
    %v1074 = vadd.f32 %v944, %v1053
    %v1075 = vadd.f32 %v945, %v1056
    %v1076 = vadd.f32 %v946, %v1059
    %v1077 = vadd.f32 %v947, %v1062
    %v1078 = vadd.f32 %v948, %v1065
    %v1079 = vld [vmem:[%s2] sm:$0x1]
    %v1081 = vperm.slane %v1079, 0
    %v1083 = vadd.f32 %v1067, %v1081
    %v1084 = vadd.f32 %v1068, %v1081
    %v1085 = vadd.f32 %v1069, %v1081
    %v1086 = vadd.f32 %v1070, %v1081
    %v1087 = vadd.f32 %v1071, %v1081
    %v1088 = vadd.f32 %v1072, %v1081
    %v1089 = vadd.f32 %v1073, %v1081
    %v1090 = vadd.f32 %v1074, %v1081
    %v1091 = vadd.f32 %v1075, %v1081
    %v1092 = vadd.f32 %v1076, %v1081
    %v1093 = vadd.f32 %v1077, %v1081
    %v1094 = vadd.f32 %v1078, %v1081
    %v1095 = vmax.f32 %v1083, 0.0
    %v1096 = vmax.f32 %v1084, 0.0
    %v1097 = vmax.f32 %v1085, 0.0
    %v1098 = vmax.f32 %v1086, 0.0
    %v1099 = vmax.f32 %v1087, 0.0
    %v1100 = vmax.f32 %v1088, 0.0
    %v1101 = vmax.f32 %v1089, 0.0
    %v1102 = vmax.f32 %v1090, 0.0
    %v1103 = vmax.f32 %v1091, 0.0
    %v1104 = vmax.f32 %v1092, 0.0
    %v1105 = vmax.f32 %v1093, 0.0
    %v1106 = vmax.f32 %v1094, 0.0
    %vm1107 = vcmask 130048
    %1108 = vst.msk [vmem:[#allocation3 + $0x2] sm:$0xff] %vm1107, %v1095
    %1109 = vst.msk [vmem:[#allocation3 + $0xa] sm:$0xff] %vm1107, %v1096
    %1110 = vst.msk [vmem:[#allocation3 + $0x12] sm:$0xff] %vm1107, %v1097
    %1111 = vst.msk [vmem:[#allocation3 + $0x1a] sm:$0xff] %vm1107, %v1098
    %1112 = vst.msk [vmem:[#allocation3 + $0x22] sm:$0xff] %vm1107, %v1099
    %1113 = vst.msk [vmem:[#allocation3 + $0x2a] sm:$0xff] %vm1107, %v1100
    %1114 = vst.msk [vmem:[#allocation3 + $0x32] sm:$0xff] %vm1107, %v1101
    %1115 = vst.msk [vmem:[#allocation3 + $0x3a] sm:$0xff] %vm1107, %v1102
    %1116 = vst.msk [vmem:[#allocation3 + $0x42] sm:$0xff] %vm1107, %v1103
    %1117 = vst.msk [vmem:[#allocation3 + $0x4a] sm:$0xff] %vm1107, %v1104
    %1118 = vst.msk [vmem:[#allocation3 + $0x52] sm:$0xff] %vm1107, %v1105
    %vm1119 = vcmask 123904
    %1120 = vst.msk [vmem:[#allocation3 + $0x5a] sm:$0x3] %vm1119, %v1106
    %1121 = vst.msk [vmem:[#allocation3] sm:$0x3] %vm1119, %v1106
    %1122 = vst.msk [vmem:[#allocation3 + $0x5c] sm:$0x3] %vm1119, %v1095
    %v1123 = vld [vmem:[#allocation3] ss:$2 sm:$0xff]
    %s1124 = scalar_lea.vmem [#allocation3], 16
    %v1125 = vld [vmem:[%s1124] ss:$2 sm:$0xff]
    %s1126 = scalar_lea.vmem [#allocation3], 32
    %v1127 = vld [vmem:[%s1126] ss:$2 sm:$0xff]
    %s1128 = scalar_lea.vmem [#allocation3], 48
    %v1129 = vld [vmem:[%s1128] ss:$2 sm:$0xff]
    %s1130 = scalar_lea.vmem [#allocation3], 64
    %v1131 = vld [vmem:[%s1130] ss:$2 sm:$0xff]
    %s1132 = scalar_lea.vmem [#allocation3], 80
    %v1133 = vld [vmem:[%s1132] ss:$2 sm:$0x1f]
    %v1134 = vld [vmem:[%s3] sm:$0xff]
    %v1135 = vld [vmem:[%s3 + $0x8] sm:$0xff]
    %s1136 = scalar_lea.vmem [#allocation3], 1
    %v1137 = vld [vmem:[%s1136] ss:$2 sm:$0xff]
    %s1138 = scalar_lea.vmem [#allocation3], 17
    %v1139 = vld [vmem:[%s1138] ss:$2 sm:$0xff]
    %s1140 = scalar_lea.vmem [#allocation3], 33
    %v1141 = vld [vmem:[%s1140] ss:$2 sm:$0xff]
    %s1142 = scalar_lea.vmem [#allocation3], 49
    %v1143 = vld [vmem:[%s1142] ss:$2 sm:$0xff]
    %s1144 = scalar_lea.vmem [#allocation3], 65
    %v1145 = vld [vmem:[%s1144] ss:$2 sm:$0xff]
    %s1146 = scalar_lea.vmem [#allocation3], 81
    %v1147 = vld [vmem:[%s1146] ss:$2 sm:$0x1f]
    %s1148 = scalar_lea.vmem %s3, 16
    %v1149 = vld [vmem:[%s1148] sm:$0xff]
    %v1150 = vld [vmem:[%s1148 + $0x8] sm:$0xff]
    %v1152 = vsel %vm1107, %v1137, 0
    %v1155 = vsel %vm1107, %v1139, 0
    %v1158 = vsel %vm1107, %v1141, 0
    %v1161 = vsel %vm1107, %v1143, 0
    %v1164 = vsel %vm1107, %v1145, 0
    %v1167 = vsel %vm1107, %v1147, 0
    %1169 = vmatpush.msra.mxu0 0.0
    %1170 = vmatpush.msra.mxu0 0.0
    %1171 = vmatpush.msra.mxu0 0.0
    %1172 = vmatpush.msra.mxu0 0.0
    %1173 = vmatpush.msra.mxu0 0.0
    %1174 = vmatpush.msra.mxu0 0.0
    %1175 = vmatpush.msra.mxu0 0.0
    %1176 = vmatpush.msra.mxu0 0.0
    %1177 = vmatpush.msra.mxu0 0.0
    %1178 = vmatpush.msra.mxu0 0.0
    %1179 = vmatpush.msra.mxu0 0.0
    %1180 = vmatpush.msra.mxu0 0.0
    %1181 = vmatpush.msra.mxu0 0.0
    %1182 = vmatpush.msra.mxu0 0.0
    %1183 = vmatpush.msra.mxu0 %v1150
    %1184 = vmatpush.msra.mxu0 %v1149
    %1185 = vmatmul.f32.gmra.mxu0 %v1152
    %v1186 = vpop.f32.mrf.mxu0
    %v1187 = vadd.f32 0.0, %v1186
    %1188 = vmatmul.f32.gmra.mxu0 %v1155
    %v1189 = vpop.f32.mrf.mxu0
    %v1190 = vadd.f32 0.0, %v1189
    %1191 = vmatmul.f32.gmra.mxu0 %v1158
    %v1192 = vpop.f32.mrf.mxu0
    %v1193 = vadd.f32 0.0, %v1192
    %1194 = vmatmul.f32.gmra.mxu0 %v1161
    %v1195 = vpop.f32.mrf.mxu0
    %v1196 = vadd.f32 0.0, %v1195
    %1197 = vmatmul.f32.gmra.mxu0 %v1164
    %v1198 = vpop.f32.mrf.mxu0
    %v1199 = vadd.f32 0.0, %v1198
    %1200 = vmatmul.f32.gmra.mxu0 %v1167
    %v1201 = vpop.f32.mrf.mxu0
    %v1202 = vadd.f32 0.0, %v1201
    %1203 = vdwg.mxu0
    %v1205 = vsel %vm1107, %v1123, 0
    %v1208 = vsel %vm1107, %v1125, 0
    %v1211 = vsel %vm1107, %v1127, 0
    %v1214 = vsel %vm1107, %v1129, 0
    %v1217 = vsel %vm1107, %v1131, 0
    %v1220 = vsel %vm1107, %v1133, 0
    %1222 = vmatpush.msra.mxu0 0.0
    %1223 = vmatpush.msra.mxu0 0.0
    %1224 = vmatpush.msra.mxu0 0.0
    %1225 = vmatpush.msra.mxu0 0.0
    %1226 = vmatpush.msra.mxu0 0.0
    %1227 = vmatpush.msra.mxu0 0.0
    %1228 = vmatpush.msra.mxu0 0.0
    %1229 = vmatpush.msra.mxu0 0.0
    %1230 = vmatpush.msra.mxu0 0.0
    %1231 = vmatpush.msra.mxu0 0.0
    %1232 = vmatpush.msra.mxu0 0.0
    %1233 = vmatpush.msra.mxu0 0.0
    %1234 = vmatpush.msra.mxu0 0.0
    %1235 = vmatpush.msra.mxu0 0.0
    %1236 = vmatpush.msra.mxu0 %v1135
    %1237 = vmatpush.msra.mxu0 %v1134
    %1238 = vmatmul.f32.gmra.mxu0 %v1205
    %v1239 = vpop.f32.mrf.mxu0
    %v1240 = vadd.f32 %v1187, %v1239
    %1241 = vmatmul.f32.gmra.mxu0 %v1208
    %v1242 = vpop.f32.mrf.mxu0
    %v1243 = vadd.f32 %v1190, %v1242
    %1244 = vmatmul.f32.gmra.mxu0 %v1211
    %v1245 = vpop.f32.mrf.mxu0
    %v1246 = vadd.f32 %v1193, %v1245
    %1247 = vmatmul.f32.gmra.mxu0 %v1214
    %v1248 = vpop.f32.mrf.mxu0
    %v1249 = vadd.f32 %v1196, %v1248
    %1250 = vmatmul.f32.gmra.mxu0 %v1217
    %v1251 = vpop.f32.mrf.mxu0
    %v1252 = vadd.f32 %v1199, %v1251
    %1253 = vmatmul.f32.gmra.mxu0 %v1220
    %v1254 = vpop.f32.mrf.mxu0
    %v1255 = vadd.f32 %v1202, %v1254
    %1256 = vdwg.mxu0
    %s1257 = scalar_lea.vmem [#allocation3], 2
    %v1258 = vld [vmem:[%s1257] ss:$2 sm:$0xff]
    %s1259 = scalar_lea.vmem [#allocation3], 18
    %v1260 = vld [vmem:[%s1259] ss:$2 sm:$0xff]
    %s1261 = scalar_lea.vmem [#allocation3], 34
    %v1262 = vld [vmem:[%s1261] ss:$2 sm:$0xff]
    %s1263 = scalar_lea.vmem [#allocation3], 50
    %v1264 = vld [vmem:[%s1263] ss:$2 sm:$0xff]
    %s1265 = scalar_lea.vmem [#allocation3], 66
    %v1266 = vld [vmem:[%s1265] ss:$2 sm:$0xff]
    %s1267 = scalar_lea.vmem [#allocation3], 82
    %v1268 = vld [vmem:[%s1267] ss:$2 sm:$0x1f]
    %s1269 = scalar_lea.vmem %s3, 32
    %v1270 = vld [vmem:[%s1269] sm:$0xff]
    %v1271 = vld [vmem:[%s1269 + $0x8] sm:$0xff]
    %v1273 = vsel %vm1107, %v1258, 0
    %v1276 = vsel %vm1107, %v1260, 0
    %v1279 = vsel %vm1107, %v1262, 0
    %v1282 = vsel %vm1107, %v1264, 0
    %v1285 = vsel %vm1107, %v1266, 0
    %v1288 = vsel %vm1107, %v1268, 0
    %1290 = vmatpush.msra.mxu0 0.0
    %1291 = vmatpush.msra.mxu0 0.0
    %1292 = vmatpush.msra.mxu0 0.0
    %1293 = vmatpush.msra.mxu0 0.0
    %1294 = vmatpush.msra.mxu0 0.0
    %1295 = vmatpush.msra.mxu0 0.0
    %1296 = vmatpush.msra.mxu0 0.0
    %1297 = vmatpush.msra.mxu0 0.0
    %1298 = vmatpush.msra.mxu0 0.0
    %1299 = vmatpush.msra.mxu0 0.0
    %1300 = vmatpush.msra.mxu0 0.0
    %1301 = vmatpush.msra.mxu0 0.0
    %1302 = vmatpush.msra.mxu0 0.0
    %1303 = vmatpush.msra.mxu0 0.0
    %1304 = vmatpush.msra.mxu0 %v1271
    %1305 = vmatpush.msra.mxu0 %v1270
    %1306 = vmatmul.f32.gmra.mxu0 %v1273
    %v1307 = vpop.f32.mrf.mxu0
    %v1308 = vadd.f32 0.0, %v1307
    %1309 = vmatmul.f32.gmra.mxu0 %v1276
    %v1310 = vpop.f32.mrf.mxu0
    %v1311 = vadd.f32 0.0, %v1310
    %1312 = vmatmul.f32.gmra.mxu0 %v1279
    %v1313 = vpop.f32.mrf.mxu0
    %v1314 = vadd.f32 0.0, %v1313
    %1315 = vmatmul.f32.gmra.mxu0 %v1282
    %v1316 = vpop.f32.mrf.mxu0
    %v1317 = vadd.f32 0.0, %v1316
    %1318 = vmatmul.f32.gmra.mxu0 %v1285
    %v1319 = vpop.f32.mrf.mxu0
    %v1320 = vadd.f32 0.0, %v1319
    %1321 = vmatmul.f32.gmra.mxu0 %v1288
    %v1322 = vpop.f32.mrf.mxu0
    %v1323 = vadd.f32 0.0, %v1322
    %1324 = vdwg.mxu0
    %v1325 = vadd.f32 %v1240, %v1308
    %v1326 = vadd.f32 %v1243, %v1311
    %v1327 = vadd.f32 %v1246, %v1314
    %v1328 = vadd.f32 %v1249, %v1317
    %v1329 = vadd.f32 %v1252, %v1320
    %v1330 = vadd.f32 %v1255, %v1323
    %s1331 = scalar_lea.vmem [#allocation3], 3
    %v1332 = vld [vmem:[%s1331] ss:$2 sm:$0xff]
    %s1333 = scalar_lea.vmem [#allocation3], 19
    %v1334 = vld [vmem:[%s1333] ss:$2 sm:$0xff]
    %s1335 = scalar_lea.vmem [#allocation3], 35
    %v1336 = vld [vmem:[%s1335] ss:$2 sm:$0xff]
    %s1337 = scalar_lea.vmem [#allocation3], 51
    %v1338 = vld [vmem:[%s1337] ss:$2 sm:$0xff]
    %s1339 = scalar_lea.vmem [#allocation3], 67
    %v1340 = vld [vmem:[%s1339] ss:$2 sm:$0xff]
    %s1341 = scalar_lea.vmem [#allocation3], 83
    %v1342 = vld [vmem:[%s1341] ss:$2 sm:$0x1f]
    %s1343 = scalar_lea.vmem %s3, 48
    %v1344 = vld [vmem:[%s1343] sm:$0xff]
    %v1345 = vld [vmem:[%s1343 + $0x8] sm:$0xff]
    %v1347 = vsel %vm1107, %v1332, 0
    %v1350 = vsel %vm1107, %v1334, 0
    %v1353 = vsel %vm1107, %v1336, 0
    %v1356 = vsel %vm1107, %v1338, 0
    %v1359 = vsel %vm1107, %v1340, 0
    %v1362 = vsel %vm1107, %v1342, 0
    %1364 = vmatpush.msra.mxu0 0.0
    %1365 = vmatpush.msra.mxu0 0.0
    %1366 = vmatpush.msra.mxu0 0.0
    %1367 = vmatpush.msra.mxu0 0.0
    %1368 = vmatpush.msra.mxu0 0.0
    %1369 = vmatpush.msra.mxu0 0.0
    %1370 = vmatpush.msra.mxu0 0.0
    %1371 = vmatpush.msra.mxu0 0.0
    %1372 = vmatpush.msra.mxu0 0.0
    %1373 = vmatpush.msra.mxu0 0.0
    %1374 = vmatpush.msra.mxu0 0.0
    %1375 = vmatpush.msra.mxu0 0.0
    %1376 = vmatpush.msra.mxu0 0.0
    %1377 = vmatpush.msra.mxu0 0.0
    %1378 = vmatpush.msra.mxu0 %v1345
    %1379 = vmatpush.msra.mxu0 %v1344
    %1380 = vmatmul.f32.gmra.mxu0 %v1347
    %v1381 = vpop.f32.mrf.mxu0
    %v1382 = vadd.f32 0.0, %v1381
    %1383 = vmatmul.f32.gmra.mxu0 %v1350
    %v1384 = vpop.f32.mrf.mxu0
    %v1385 = vadd.f32 0.0, %v1384
    %1386 = vmatmul.f32.gmra.mxu0 %v1353
    %v1387 = vpop.f32.mrf.mxu0
    %v1388 = vadd.f32 0.0, %v1387
    %1389 = vmatmul.f32.gmra.mxu0 %v1356
    %v1390 = vpop.f32.mrf.mxu0
    %v1391 = vadd.f32 0.0, %v1390
    %1392 = vmatmul.f32.gmra.mxu0 %v1359
    %v1393 = vpop.f32.mrf.mxu0
    %v1394 = vadd.f32 0.0, %v1393
    %1395 = vmatmul.f32.gmra.mxu0 %v1362
    %v1396 = vpop.f32.mrf.mxu0
    %v1397 = vadd.f32 0.0, %v1396
    %1398 = vdwg.mxu0
    %v1399 = vadd.f32 %v1325, %v1382
    %v1400 = vadd.f32 %v1326, %v1385
    %v1401 = vadd.f32 %v1327, %v1388
    %v1402 = vadd.f32 %v1328, %v1391
    %v1403 = vadd.f32 %v1329, %v1394
    %v1404 = vadd.f32 %v1330, %v1397
    %s1405 = scalar_lea.vmem [#allocation3], 4
    %v1406 = vld [vmem:[%s1405] ss:$2 sm:$0xff]
    %s1407 = scalar_lea.vmem [#allocation3], 20
    %v1408 = vld [vmem:[%s1407] ss:$2 sm:$0xff]
    %s1409 = scalar_lea.vmem [#allocation3], 36
    %v1410 = vld [vmem:[%s1409] ss:$2 sm:$0xff]
    %s1411 = scalar_lea.vmem [#allocation3], 52
    %v1412 = vld [vmem:[%s1411] ss:$2 sm:$0xff]
    %s1413 = scalar_lea.vmem [#allocation3], 68
    %v1414 = vld [vmem:[%s1413] ss:$2 sm:$0xff]
    %s1415 = scalar_lea.vmem [#allocation3], 84
    %v1416 = vld [vmem:[%s1415] ss:$2 sm:$0x1f]
    %s1417 = scalar_lea.vmem %s3, 64
    %v1418 = vld [vmem:[%s1417] sm:$0xff]
    %v1419 = vld [vmem:[%s1417 + $0x8] sm:$0xff]
    %v1421 = vsel %vm1107, %v1406, 0
    %v1424 = vsel %vm1107, %v1408, 0
    %v1427 = vsel %vm1107, %v1410, 0
    %v1430 = vsel %vm1107, %v1412, 0
    %v1433 = vsel %vm1107, %v1414, 0
    %v1436 = vsel %vm1107, %v1416, 0
    %1438 = vmatpush.msra.mxu0 0.0
    %1439 = vmatpush.msra.mxu0 0.0
    %1440 = vmatpush.msra.mxu0 0.0
    %1441 = vmatpush.msra.mxu0 0.0
    %1442 = vmatpush.msra.mxu0 0.0
    %1443 = vmatpush.msra.mxu0 0.0
    %1444 = vmatpush.msra.mxu0 0.0
    %1445 = vmatpush.msra.mxu0 0.0
    %1446 = vmatpush.msra.mxu0 0.0
    %1447 = vmatpush.msra.mxu0 0.0
    %1448 = vmatpush.msra.mxu0 0.0
    %1449 = vmatpush.msra.mxu0 0.0
    %1450 = vmatpush.msra.mxu0 0.0
    %1451 = vmatpush.msra.mxu0 0.0
    %1452 = vmatpush.msra.mxu0 %v1419
    %1453 = vmatpush.msra.mxu0 %v1418
    %1454 = vmatmul.f32.gmra.mxu0 %v1421
    %v1455 = vpop.f32.mrf.mxu0
    %v1456 = vadd.f32 0.0, %v1455
    %1457 = vmatmul.f32.gmra.mxu0 %v1424
    %v1458 = vpop.f32.mrf.mxu0
    %v1459 = vadd.f32 0.0, %v1458
    %1460 = vmatmul.f32.gmra.mxu0 %v1427
    %v1461 = vpop.f32.mrf.mxu0
    %v1462 = vadd.f32 0.0, %v1461
    %1463 = vmatmul.f32.gmra.mxu0 %v1430
    %v1464 = vpop.f32.mrf.mxu0
    %v1465 = vadd.f32 0.0, %v1464
    %1466 = vmatmul.f32.gmra.mxu0 %v1433
    %v1467 = vpop.f32.mrf.mxu0
    %v1468 = vadd.f32 0.0, %v1467
    %1469 = vmatmul.f32.gmra.mxu0 %v1436
    %v1470 = vpop.f32.mrf.mxu0
    %v1471 = vadd.f32 0.0, %v1470
    %1472 = vdwg.mxu0
    %v1473 = vadd.f32 %v1399, %v1456
    %v1474 = vadd.f32 %v1400, %v1459
    %v1475 = vadd.f32 %v1401, %v1462
    %v1476 = vadd.f32 %v1402, %v1465
    %v1477 = vadd.f32 %v1403, %v1468
    %v1478 = vadd.f32 %v1404, %v1471
    %v1479 = vld [vmem:[%s4] sm:$0x1]
    %v1481 = vperm.slane %v1479, 0
    %v1483 = vadd.f32 %v1473, %v1481
    %v1484 = vadd.f32 %v1474, %v1481
    %v1485 = vadd.f32 %v1475, %v1481
    %v1486 = vadd.f32 %v1476, %v1481
    %v1487 = vadd.f32 %v1477, %v1481
    %v1488 = vadd.f32 %v1478, %v1481
    %v1489 = vmax.f32 %v1483, 0.0
    %v1490 = vmax.f32 %v1484, 0.0
    %v1491 = vmax.f32 %v1485, 0.0
    %v1492 = vmax.f32 %v1486, 0.0
    %v1493 = vmax.f32 %v1487, 0.0
    %v1494 = vmax.f32 %v1488, 0.0
    %vm1495 = vcmask 261120
    %1496 = vst.msk [vmem:[#allocation4 + $0x2] sm:$0xff] %vm1495, %v1489
    %1497 = vst.msk [vmem:[#allocation4 + $0xa] sm:$0xff] %vm1495, %v1490
    %1498 = vst.msk [vmem:[#allocation4 + $0x12] sm:$0xff] %vm1495, %v1491
    %1499 = vst.msk [vmem:[#allocation4 + $0x1a] sm:$0xff] %vm1495, %v1492
    %1500 = vst.msk [vmem:[#allocation4 + $0x22] sm:$0xff] %vm1495, %v1493
    %vm1501 = vcmask 258048
    %1502 = vst.msk [vmem:[#allocation4 + $0x2a] sm:$0x1f] %vm1501, %v1494
    %vm1503 = vcmask 258051
    %1504 = vst.msk [vmem:[#allocation4 - $0x3] sm:$0x18] %vm1503, %v1494
    %vm1505 = vcmask 254976
    %1506 = vst.msk [vmem:[#allocation4 + $0x2f] sm:$0x3] %vm1505, %v1489
    %v1507 = vld [vmem:[#allocation4] sm:$0xff]
    %v1508 = vld [vmem:[#allocation4 + $0x8] sm:$0xff]
    %v1509 = vld [vmem:[#allocation4 + $0x10] sm:$0xff]
    %v1510 = vld [vmem:[#allocation4 + $0x18] sm:$0xff]
    %v1511 = vld [vmem:[#allocation4 + $0x20] sm:$0xff]
    %v1512 = vld [vmem:[#allocation4 + $0x28] sm:$0x1f]
    %v1513 = vld [vmem:[%s5] sm:$0xff]
    %v1514 = vld [vmem:[%s5 + $0x8] sm:$0xff]
    %v1515 = vld [vmem:[%s5 + $0x10] sm:$0xff]
    %v1516 = vld [vmem:[%s5 + $0x18] sm:$0xff]
    %v1517 = vld [vmem:[#allocation4 + $0x1] sm:$0xff]
    %v1518 = vld [vmem:[#allocation4 + $0x9] sm:$0xff]
    %v1519 = vld [vmem:[#allocation4 + $0x11] sm:$0xff]
    %v1520 = vld [vmem:[#allocation4 + $0x19] sm:$0xff]
    %v1521 = vld [vmem:[#allocation4 + $0x21] sm:$0xff]
    %v1522 = vld [vmem:[#allocation4 + $0x29] sm:$0x1f]
    %s1523 = scalar_lea.vmem %s5, 32
    %v1524 = vld [vmem:[%s1523] sm:$0xff]
    %v1525 = vld [vmem:[%s1523 + $0x8] sm:$0xff]
    %v1526 = vld [vmem:[%s1523 + $0x10] sm:$0xff]
    %v1527 = vld [vmem:[%s1523 + $0x18] sm:$0xff]
    %v1529 = vsel %vm1495, %v1517, 0
    %v1532 = vsel %vm1495, %v1518, 0
    %v1535 = vsel %vm1495, %v1519, 0
    %v1538 = vsel %vm1495, %v1520, 0
    %v1541 = vsel %vm1495, %v1521, 0
    %v1544 = vsel %vm1495, %v1522, 0
    %1546 = vmatpush.msra.mxu0 0.0
    %1547 = vmatpush.msra.mxu0 0.0
    %1548 = vmatpush.msra.mxu0 0.0
    %1549 = vmatpush.msra.mxu0 0.0
    %1550 = vmatpush.msra.mxu0 0.0
    %1551 = vmatpush.msra.mxu0 0.0
    %1552 = vmatpush.msra.mxu0 0.0
    %1553 = vmatpush.msra.mxu0 0.0
    %1554 = vmatpush.msra.mxu0 0.0
    %1555 = vmatpush.msra.mxu0 0.0
    %1556 = vmatpush.msra.mxu0 0.0
    %1557 = vmatpush.msra.mxu0 0.0
    %1558 = vmatpush.msra.mxu0 %v1527
    %1559 = vmatpush.msra.mxu0 %v1526
    %1560 = vmatpush.msra.mxu0 %v1525
    %1561 = vmatpush.msra.mxu0 %v1524
    %1562 = vmatmul.f32.gmra.mxu0 %v1529
    %v1563 = vpop.f32.mrf.mxu0
    %v1564 = vadd.f32 0.0, %v1563
    %1565 = vmatmul.f32.gmra.mxu0 %v1532
    %v1566 = vpop.f32.mrf.mxu0
    %v1567 = vadd.f32 0.0, %v1566
    %1568 = vmatmul.f32.gmra.mxu0 %v1535
    %v1569 = vpop.f32.mrf.mxu0
    %v1570 = vadd.f32 0.0, %v1569
    %1571 = vmatmul.f32.gmra.mxu0 %v1538
    %v1572 = vpop.f32.mrf.mxu0
    %v1573 = vadd.f32 0.0, %v1572
    %1574 = vmatmul.f32.gmra.mxu0 %v1541
    %v1575 = vpop.f32.mrf.mxu0
    %v1576 = vadd.f32 0.0, %v1575
    %1577 = vmatmul.f32.gmra.mxu0 %v1544
    %v1578 = vpop.f32.mrf.mxu0
    %v1579 = vadd.f32 0.0, %v1578
    %1580 = vdwg.mxu0
    %v1582 = vsel %vm1495, %v1507, 0
    %v1585 = vsel %vm1495, %v1508, 0
    %v1588 = vsel %vm1495, %v1509, 0
    %v1591 = vsel %vm1495, %v1510, 0
    %v1594 = vsel %vm1495, %v1511, 0
    %v1597 = vsel %vm1495, %v1512, 0
    %1599 = vmatpush.msra.mxu0 0.0
    %1600 = vmatpush.msra.mxu0 0.0
    %1601 = vmatpush.msra.mxu0 0.0
    %1602 = vmatpush.msra.mxu0 0.0
    %1603 = vmatpush.msra.mxu0 0.0
    %1604 = vmatpush.msra.mxu0 0.0
    %1605 = vmatpush.msra.mxu0 0.0
    %1606 = vmatpush.msra.mxu0 0.0
    %1607 = vmatpush.msra.mxu0 0.0
    %1608 = vmatpush.msra.mxu0 0.0
    %1609 = vmatpush.msra.mxu0 0.0
    %1610 = vmatpush.msra.mxu0 0.0
    %1611 = vmatpush.msra.mxu0 %v1516
    %1612 = vmatpush.msra.mxu0 %v1515
    %1613 = vmatpush.msra.mxu0 %v1514
    %1614 = vmatpush.msra.mxu0 %v1513
    %1615 = vmatmul.f32.gmra.mxu0 %v1582
    %v1616 = vpop.f32.mrf.mxu0
    %v1617 = vadd.f32 %v1564, %v1616
    %1618 = vmatmul.f32.gmra.mxu0 %v1585
    %v1619 = vpop.f32.mrf.mxu0
    %v1620 = vadd.f32 %v1567, %v1619
    %1621 = vmatmul.f32.gmra.mxu0 %v1588
    %v1622 = vpop.f32.mrf.mxu0
    %v1623 = vadd.f32 %v1570, %v1622
    %1624 = vmatmul.f32.gmra.mxu0 %v1591
    %v1625 = vpop.f32.mrf.mxu0
    %v1626 = vadd.f32 %v1573, %v1625
    %1627 = vmatmul.f32.gmra.mxu0 %v1594
    %v1628 = vpop.f32.mrf.mxu0
    %v1629 = vadd.f32 %v1576, %v1628
    %1630 = vmatmul.f32.gmra.mxu0 %v1597
    %v1631 = vpop.f32.mrf.mxu0
    %v1632 = vadd.f32 %v1579, %v1631
    %1633 = vdwg.mxu0
    %v1634 = vld [vmem:[#allocation4 + $0x2] sm:$0xff]
    %v1635 = vld [vmem:[#allocation4 + $0xa] sm:$0xff]
    %v1636 = vld [vmem:[#allocation4 + $0x12] sm:$0xff]
    %v1637 = vld [vmem:[#allocation4 + $0x1a] sm:$0xff]
    %v1638 = vld [vmem:[#allocation4 + $0x22] sm:$0xff]
    %v1639 = vld [vmem:[#allocation4 + $0x2a] sm:$0x1f]
    %s1640 = scalar_lea.vmem %s5, 64
    %v1641 = vld [vmem:[%s1640] sm:$0xff]
    %v1642 = vld [vmem:[%s1640 + $0x8] sm:$0xff]
    %v1643 = vld [vmem:[%s1640 + $0x10] sm:$0xff]
    %v1644 = vld [vmem:[%s1640 + $0x18] sm:$0xff]
    %v1646 = vsel %vm1495, %v1634, 0
    %v1649 = vsel %vm1495, %v1635, 0
    %v1652 = vsel %vm1495, %v1636, 0
    %v1655 = vsel %vm1495, %v1637, 0
    %v1658 = vsel %vm1495, %v1638, 0
    %v1661 = vsel %vm1495, %v1639, 0
    %1663 = vmatpush.msra.mxu0 0.0
    %1664 = vmatpush.msra.mxu0 0.0
    %1665 = vmatpush.msra.mxu0 0.0
    %1666 = vmatpush.msra.mxu0 0.0
    %1667 = vmatpush.msra.mxu0 0.0
    %1668 = vmatpush.msra.mxu0 0.0
    %1669 = vmatpush.msra.mxu0 0.0
    %1670 = vmatpush.msra.mxu0 0.0
    %1671 = vmatpush.msra.mxu0 0.0
    %1672 = vmatpush.msra.mxu0 0.0
    %1673 = vmatpush.msra.mxu0 0.0
    %1674 = vmatpush.msra.mxu0 0.0
    %1675 = vmatpush.msra.mxu0 %v1644
    %1676 = vmatpush.msra.mxu0 %v1643
    %1677 = vmatpush.msra.mxu0 %v1642
    %1678 = vmatpush.msra.mxu0 %v1641
    %1679 = vmatmul.f32.gmra.mxu0 %v1646
    %v1680 = vpop.f32.mrf.mxu0
    %v1681 = vadd.f32 0.0, %v1680
    %1682 = vmatmul.f32.gmra.mxu0 %v1649
    %v1683 = vpop.f32.mrf.mxu0
    %v1684 = vadd.f32 0.0, %v1683
    %1685 = vmatmul.f32.gmra.mxu0 %v1652
    %v1686 = vpop.f32.mrf.mxu0
    %v1687 = vadd.f32 0.0, %v1686
    %1688 = vmatmul.f32.gmra.mxu0 %v1655
    %v1689 = vpop.f32.mrf.mxu0
    %v1690 = vadd.f32 0.0, %v1689
    %1691 = vmatmul.f32.gmra.mxu0 %v1658
    %v1692 = vpop.f32.mrf.mxu0
    %v1693 = vadd.f32 0.0, %v1692
    %1694 = vmatmul.f32.gmra.mxu0 %v1661
    %v1695 = vpop.f32.mrf.mxu0
    %v1696 = vadd.f32 0.0, %v1695
    %1697 = vdwg.mxu0
    %v1698 = vadd.f32 %v1617, %v1681
    %v1699 = vadd.f32 %v1620, %v1684
    %v1700 = vadd.f32 %v1623, %v1687
    %v1701 = vadd.f32 %v1626, %v1690
    %v1702 = vadd.f32 %v1629, %v1693
    %v1703 = vadd.f32 %v1632, %v1696
    %v1704 = vld [vmem:[#allocation4 + $0x3] sm:$0xff]
    %v1705 = vld [vmem:[#allocation4 + $0xb] sm:$0xff]
    %v1706 = vld [vmem:[#allocation4 + $0x13] sm:$0xff]
    %v1707 = vld [vmem:[#allocation4 + $0x1b] sm:$0xff]
    %v1708 = vld [vmem:[#allocation4 + $0x23] sm:$0xff]
    %v1709 = vld [vmem:[#allocation4 + $0x2b] sm:$0x1f]
    %s1710 = scalar_lea.vmem %s5, 96
    %v1711 = vld [vmem:[%s1710] sm:$0xff]
    %v1712 = vld [vmem:[%s1710 + $0x8] sm:$0xff]
    %v1713 = vld [vmem:[%s1710 + $0x10] sm:$0xff]
    %v1714 = vld [vmem:[%s1710 + $0x18] sm:$0xff]
    %v1716 = vsel %vm1495, %v1704, 0
    %v1719 = vsel %vm1495, %v1705, 0
    %v1722 = vsel %vm1495, %v1706, 0
    %v1725 = vsel %vm1495, %v1707, 0
    %v1728 = vsel %vm1495, %v1708, 0
    %v1731 = vsel %vm1495, %v1709, 0
    %1733 = vmatpush.msra.mxu0 0.0
    %1734 = vmatpush.msra.mxu0 0.0
    %1735 = vmatpush.msra.mxu0 0.0
    %1736 = vmatpush.msra.mxu0 0.0
    %1737 = vmatpush.msra.mxu0 0.0
    %1738 = vmatpush.msra.mxu0 0.0
    %1739 = vmatpush.msra.mxu0 0.0
    %1740 = vmatpush.msra.mxu0 0.0
    %1741 = vmatpush.msra.mxu0 0.0
    %1742 = vmatpush.msra.mxu0 0.0
    %1743 = vmatpush.msra.mxu0 0.0
    %1744 = vmatpush.msra.mxu0 0.0
    %1745 = vmatpush.msra.mxu0 %v1714
    %1746 = vmatpush.msra.mxu0 %v1713
    %1747 = vmatpush.msra.mxu0 %v1712
    %1748 = vmatpush.msra.mxu0 %v1711
    %1749 = vmatmul.f32.gmra.mxu0 %v1716
    %v1750 = vpop.f32.mrf.mxu0
    %v1751 = vadd.f32 0.0, %v1750
    %1752 = vmatmul.f32.gmra.mxu0 %v1719
    %v1753 = vpop.f32.mrf.mxu0
    %v1754 = vadd.f32 0.0, %v1753
    %1755 = vmatmul.f32.gmra.mxu0 %v1722
    %v1756 = vpop.f32.mrf.mxu0
    %v1757 = vadd.f32 0.0, %v1756
    %1758 = vmatmul.f32.gmra.mxu0 %v1725
    %v1759 = vpop.f32.mrf.mxu0
    %v1760 = vadd.f32 0.0, %v1759
    %1761 = vmatmul.f32.gmra.mxu0 %v1728
    %v1762 = vpop.f32.mrf.mxu0
    %v1763 = vadd.f32 0.0, %v1762
    %1764 = vmatmul.f32.gmra.mxu0 %v1731
    %v1765 = vpop.f32.mrf.mxu0
    %v1766 = vadd.f32 0.0, %v1765
    %1767 = vdwg.mxu0
    %v1768 = vadd.f32 %v1698, %v1751
    %v1769 = vadd.f32 %v1699, %v1754
    %v1770 = vadd.f32 %v1700, %v1757
    %v1771 = vadd.f32 %v1701, %v1760
    %v1772 = vadd.f32 %v1702, %v1763
    %v1773 = vadd.f32 %v1703, %v1766
    %v1774 = vld [vmem:[#allocation4 + $0x4] sm:$0xff]
    %v1775 = vld [vmem:[#allocation4 + $0xc] sm:$0xff]
    %v1776 = vld [vmem:[#allocation4 + $0x14] sm:$0xff]
    %v1777 = vld [vmem:[#allocation4 + $0x1c] sm:$0xff]
    %v1778 = vld [vmem:[#allocation4 + $0x24] sm:$0xff]
    %v1779 = vld [vmem:[#allocation4 + $0x2c] sm:$0x1f]
    %s1780 = scalar_lea.vmem %s5, 128
    %v1781 = vld [vmem:[%s1780] sm:$0xff]
    %v1782 = vld [vmem:[%s1780 + $0x8] sm:$0xff]
    %v1783 = vld [vmem:[%s1780 + $0x10] sm:$0xff]
    %v1784 = vld [vmem:[%s1780 + $0x18] sm:$0xff]
    %v1786 = vsel %vm1495, %v1774, 0
    %v1789 = vsel %vm1495, %v1775, 0
    %v1792 = vsel %vm1495, %v1776, 0
    %v1795 = vsel %vm1495, %v1777, 0
    %v1798 = vsel %vm1495, %v1778, 0
    %v1801 = vsel %vm1495, %v1779, 0
    %1803 = vmatpush.msra.mxu0 0.0
    %1804 = vmatpush.msra.mxu0 0.0
    %1805 = vmatpush.msra.mxu0 0.0
    %1806 = vmatpush.msra.mxu0 0.0
    %1807 = vmatpush.msra.mxu0 0.0
    %1808 = vmatpush.msra.mxu0 0.0
    %1809 = vmatpush.msra.mxu0 0.0
    %1810 = vmatpush.msra.mxu0 0.0
    %1811 = vmatpush.msra.mxu0 0.0
    %1812 = vmatpush.msra.mxu0 0.0
    %1813 = vmatpush.msra.mxu0 0.0
    %1814 = vmatpush.msra.mxu0 0.0
    %1815 = vmatpush.msra.mxu0 %v1784
    %1816 = vmatpush.msra.mxu0 %v1783
    %1817 = vmatpush.msra.mxu0 %v1782
    %1818 = vmatpush.msra.mxu0 %v1781
    %1819 = vmatmul.f32.gmra.mxu0 %v1786
    %v1820 = vpop.f32.mrf.mxu0
    %v1821 = vadd.f32 0.0, %v1820
    %1822 = vmatmul.f32.gmra.mxu0 %v1789
    %v1823 = vpop.f32.mrf.mxu0
    %v1824 = vadd.f32 0.0, %v1823
    %1825 = vmatmul.f32.gmra.mxu0 %v1792
    %v1826 = vpop.f32.mrf.mxu0
    %v1827 = vadd.f32 0.0, %v1826
    %1828 = vmatmul.f32.gmra.mxu0 %v1795
    %v1829 = vpop.f32.mrf.mxu0
    %v1830 = vadd.f32 0.0, %v1829
    %1831 = vmatmul.f32.gmra.mxu0 %v1798
    %v1832 = vpop.f32.mrf.mxu0
    %v1833 = vadd.f32 0.0, %v1832
    %1834 = vmatmul.f32.gmra.mxu0 %v1801
    %v1835 = vpop.f32.mrf.mxu0
    %v1836 = vadd.f32 0.0, %v1835
    %1837 = vdwg.mxu0
    %v1838 = vadd.f32 %v1768, %v1821
    %v1839 = vadd.f32 %v1769, %v1824
    %v1840 = vadd.f32 %v1770, %v1827
    %v1841 = vadd.f32 %v1771, %v1830
    %v1842 = vadd.f32 %v1772, %v1833
    %v1843 = vadd.f32 %v1773, %v1836
    %v1844 = vld [vmem:[%s6] sm:$0x1]
    %v1846 = vperm.slane %v1844, 0
    %v1848 = vadd.f32 %v1838, %v1846
    %v1849 = vadd.f32 %v1839, %v1846
    %v1850 = vadd.f32 %v1840, %v1846
    %v1851 = vadd.f32 %v1841, %v1846
    %v1852 = vadd.f32 %v1842, %v1846
    %v1853 = vadd.f32 %v1843, %v1846
    %v1854 = vmax.f32 %v1848, 0.0
    %v1855 = vmax.f32 %v1849, 0.0
    %v1856 = vmax.f32 %v1850, 0.0
    %v1857 = vmax.f32 %v1851, 0.0
    %v1858 = vmax.f32 %v1852, 0.0
    %v1859 = vmax.f32 %v1853, 0.0
    %vm1860 = vcmask 253952
    %1861 = vst.msk [vmem:[#allocation5] sm:$0x1] %vm1860, %v1854
    %v1863 = vrot.slane %v1854, 7
    %v1864 = vrot.slane %v1863, 2
    %1865 = vrot.lane.b32.xlu0 %v1864, 32
    %v1866 = vpop.permute.xlu0 %1865
    %vm1868 = vcmask 516352
    %1869 = vst.msk [vmem:[#allocation5] sm:$0x1] %vm1868, %v1866
    %1870 = vst.sshfl [vmem:[#allocation1] sm:$0xff pattern:$0x73625140] %v1854
    %s1871 = scalar_lea.vmem [#allocation1], 1
    %v1872 = vld [vmem:[%s1871] ss:$4 sm:$0xff]
    %1873 = vrot.lane.b32.xlu0 %v1872, 64
    %v1874 = vpop.permute.xlu0 %1873
    %vm1876 = vcmask 778752
    %1877 = vst.msk [vmem:[#allocation5] sm:$0x1] %vm1876, %v1874
    %1878 = vst.sshfl [vmem:[#allocation1] sm:$0xff pattern:$0x73625140] %v1854
    %s1879 = scalar_lea.vmem [#allocation1], 1
    %v1880 = vld [vmem:[%s1879] ss:$4 sm:$0xff]
    %v1881 = vrot.slane %v1880, 7
    %v1882 = vrot.slane %v1881, 2
    %1883 = vrot.lane.b32.xlu0 %v1882, 96
    %v1884 = vpop.permute.xlu0 %1883
    %vm1886 = vcmask 1041152
    %1887 = vst.msk [vmem:[#allocation5] sm:$0x1] %vm1886, %v1884
    %1888 = vst.sshfl [vmem:[#allocation1] sm:$0xff pattern:$0x73625140] %v1854
    %s1889 = scalar_lea.vmem [#allocation1], 2
    %v1890 = vld [vmem:[%s1889] ss:$4 sm:$0xff]
    %1892 = vst.msk [vmem:[#allocation5 + $0x2] sm:$0x1] %vm1860, %v1890
    %1893 = vst.sshfl [vmem:[#allocation1] sm:$0xff pattern:$0x73625140] %v1854
    %s1894 = scalar_lea.vmem [#allocation1], 2
    %v1895 = vld [vmem:[%s1894] ss:$4 sm:$0xff]
    %v1896 = vrot.slane %v1895, 7
    %v1897 = vrot.slane %v1896, 2
    %1898 = vrot.lane.b32.xlu0 %v1897, 32
    %v1899 = vpop.permute.xlu0 %1898
    %1901 = vst.msk [vmem:[#allocation5 + $0x2] sm:$0x1] %vm1868, %v1899
    %1902 = vst.sshfl [vmem:[#allocation1] sm:$0xff pattern:$0x73625140] %v1854
    %s1903 = scalar_lea.vmem [#allocation1], 3
    %v1904 = vld [vmem:[%s1903] ss:$4 sm:$0xff]
    %1905 = vrot.lane.b32.xlu0 %v1904, 64
    %v1906 = vpop.permute.xlu0 %1905
    %1908 = vst.msk [vmem:[#allocation5 + $0x2] sm:$0x1] %vm1876, %v1906
    %1909 = vst.sshfl [vmem:[#allocation1] sm:$0xff pattern:$0x73625140] %v1854
    %s1910 = scalar_lea.vmem [#allocation1], 3
    %v1911 = vld [vmem:[%s1910] ss:$4 sm:$0xff]
    %v1912 = vrot.slane %v1911, 7
    %v1913 = vrot.slane %v1912, 2
    %1914 = vrot.lane.b32.xlu0 %v1913, 96
    %v1915 = vpop.permute.xlu0 %1914
    %1917 = vst.msk [vmem:[#allocation5 + $0x2] sm:$0x1] %vm1886, %v1915
    %1918 = vst.msk [vmem:[#allocation5 + $0x4] sm:$0x1] %vm1860, %v1855
    %v1920 = vrot.slane %v1855, 7
    %v1921 = vrot.slane %v1920, 2
    %1922 = vrot.lane.b32.xlu0 %v1921, 32
    %v1923 = vpop.permute.xlu0 %1922
    %1925 = vst.msk [vmem:[#allocation5 + $0x4] sm:$0x1] %vm1868, %v1923
    %1926 = vst.sshfl [vmem:[#allocation1] sm:$0xff pattern:$0x73625140] %v1855
    %s1927 = scalar_lea.vmem [#allocation1], 1
    %v1928 = vld [vmem:[%s1927] ss:$4 sm:$0xff]
    %1929 = vrot.lane.b32.xlu0 %v1928, 64
    %v1930 = vpop.permute.xlu0 %1929
    %1932 = vst.msk [vmem:[#allocation5 + $0x4] sm:$0x1] %vm1876, %v1930
    %1933 = vst.sshfl [vmem:[#allocation1] sm:$0xff pattern:$0x73625140] %v1855
    %s1934 = scalar_lea.vmem [#allocation1], 1
    %v1935 = vld [vmem:[%s1934] ss:$4 sm:$0xff]
    %v1936 = vrot.slane %v1935, 7
    %v1937 = vrot.slane %v1936, 2
    %1938 = vrot.lane.b32.xlu0 %v1937, 96
    %v1939 = vpop.permute.xlu0 %1938
    %1941 = vst.msk [vmem:[#allocation5 + $0x4] sm:$0x1] %vm1886, %v1939
    %1942 = vst.sshfl [vmem:[#allocation1] sm:$0xff pattern:$0x73625140] %v1855
    %s1943 = scalar_lea.vmem [#allocation1], 2
    %v1944 = vld [vmem:[%s1943] ss:$4 sm:$0xff]
    %1946 = vst.msk [vmem:[#allocation5 + $0x6] sm:$0x1] %vm1860, %v1944
    %1947 = vst.sshfl [vmem:[#allocation1] sm:$0xff pattern:$0x73625140] %v1855
    %s1948 = scalar_lea.vmem [#allocation1], 2
    %v1949 = vld [vmem:[%s1948] ss:$4 sm:$0xff]
    %v1950 = vrot.slane %v1949, 7
    %v1951 = vrot.slane %v1950, 2
    %1952 = vrot.lane.b32.xlu0 %v1951, 32
    %v1953 = vpop.permute.xlu0 %1952
    %1955 = vst.msk [vmem:[#allocation5 + $0x6] sm:$0x1] %vm1868, %v1953
    %1956 = vst.sshfl [vmem:[#allocation1] sm:$0xff pattern:$0x73625140] %v1855
    %s1957 = scalar_lea.vmem [#allocation1], 3
    %v1958 = vld [vmem:[%s1957] ss:$4 sm:$0xff]
    %1959 = vrot.lane.b32.xlu0 %v1958, 64
    %v1960 = vpop.permute.xlu0 %1959
    %1962 = vst.msk [vmem:[#allocation5 + $0x6] sm:$0x1] %vm1876, %v1960
    %1963 = vst.sshfl [vmem:[#allocation1] sm:$0xff pattern:$0x73625140] %v1855
    %s1964 = scalar_lea.vmem [#allocation1], 3
    %v1965 = vld [vmem:[%s1964] ss:$4 sm:$0xff]
    %v1966 = vrot.slane %v1965, 7
    %v1967 = vrot.slane %v1966, 2
    %1968 = vrot.lane.b32.xlu0 %v1967, 96
    %v1969 = vpop.permute.xlu0 %1968
    %1971 = vst.msk [vmem:[#allocation5 + $0x6] sm:$0x1] %vm1886, %v1969
    %1972 = vst.msk [vmem:[#allocation5 + $0x8] sm:$0x1] %vm1860, %v1856
    %v1974 = vrot.slane %v1856, 7
    %v1975 = vrot.slane %v1974, 2
    %1976 = vrot.lane.b32.xlu0 %v1975, 32
    %v1977 = vpop.permute.xlu0 %1976
    %1979 = vst.msk [vmem:[#allocation5 + $0x8] sm:$0x1] %vm1868, %v1977
    %1980 = vst.sshfl [vmem:[#allocation1] sm:$0xff pattern:$0x73625140] %v1856
    %s1981 = scalar_lea.vmem [#allocation1], 1
    %v1982 = vld [vmem:[%s1981] ss:$4 sm:$0xff]
    %1983 = vrot.lane.b32.xlu0 %v1982, 64
    %v1984 = vpop.permute.xlu0 %1983
    %1986 = vst.msk [vmem:[#allocation5 + $0x8] sm:$0x1] %vm1876, %v1984
    %1987 = vst.sshfl [vmem:[#allocation1] sm:$0xff pattern:$0x73625140] %v1856
    %s1988 = scalar_lea.vmem [#allocation1], 1
    %v1989 = vld [vmem:[%s1988] ss:$4 sm:$0xff]
    %v1990 = vrot.slane %v1989, 7
    %v1991 = vrot.slane %v1990, 2
    %1992 = vrot.lane.b32.xlu0 %v1991, 96
    %v1993 = vpop.permute.xlu0 %1992
    %1995 = vst.msk [vmem:[#allocation5 + $0x8] sm:$0x1] %vm1886, %v1993
    %1996 = vst.sshfl [vmem:[#allocation1] sm:$0xff pattern:$0x73625140] %v1856
    %s1997 = scalar_lea.vmem [#allocation1], 2
    %v1998 = vld [vmem:[%s1997] ss:$4 sm:$0xff]
    %2000 = vst.msk [vmem:[#allocation5 + $0xa] sm:$0x1] %vm1860, %v1998
    %2001 = vst.sshfl [vmem:[#allocation1] sm:$0xff pattern:$0x73625140] %v1856
    %s2002 = scalar_lea.vmem [#allocation1], 2
    %v2003 = vld [vmem:[%s2002] ss:$4 sm:$0xff]
    %v2004 = vrot.slane %v2003, 7
    %v2005 = vrot.slane %v2004, 2
    %2006 = vrot.lane.b32.xlu0 %v2005, 32
    %v2007 = vpop.permute.xlu0 %2006
    %2009 = vst.msk [vmem:[#allocation5 + $0xa] sm:$0x1] %vm1868, %v2007
    %2010 = vst.sshfl [vmem:[#allocation1] sm:$0xff pattern:$0x73625140] %v1856
    %s2011 = scalar_lea.vmem [#allocation1], 3
    %v2012 = vld [vmem:[%s2011] ss:$4 sm:$0xff]
    %2013 = vrot.lane.b32.xlu0 %v2012, 64
    %v2014 = vpop.permute.xlu0 %2013
    %2016 = vst.msk [vmem:[#allocation5 + $0xa] sm:$0x1] %vm1876, %v2014
    %2017 = vst.sshfl [vmem:[#allocation1] sm:$0xff pattern:$0x73625140] %v1856
    %s2018 = scalar_lea.vmem [#allocation1], 3
    %v2019 = vld [vmem:[%s2018] ss:$4 sm:$0xff]
    %v2020 = vrot.slane %v2019, 7
    %v2021 = vrot.slane %v2020, 2
    %2022 = vrot.lane.b32.xlu0 %v2021, 96
    %v2023 = vpop.permute.xlu0 %2022
    %2025 = vst.msk [vmem:[#allocation5 + $0xa] sm:$0x1] %vm1886, %v2023
    %2026 = vst.msk [vmem:[#allocation5 + $0xc] sm:$0x1] %vm1860, %v1857
    %v2028 = vrot.slane %v1857, 7
    %v2029 = vrot.slane %v2028, 2
    %2030 = vrot.lane.b32.xlu0 %v2029, 32
    %v2031 = vpop.permute.xlu0 %2030
    %2033 = vst.msk [vmem:[#allocation5 + $0xc] sm:$0x1] %vm1868, %v2031
    %2034 = vst.sshfl [vmem:[#allocation1] sm:$0xff pattern:$0x73625140] %v1857
    %s2035 = scalar_lea.vmem [#allocation1], 1
    %v2036 = vld [vmem:[%s2035] ss:$4 sm:$0xff]
    %2037 = vrot.lane.b32.xlu0 %v2036, 64
    %v2038 = vpop.permute.xlu0 %2037
    %2040 = vst.msk [vmem:[#allocation5 + $0xc] sm:$0x1] %vm1876, %v2038
    %2041 = vst.sshfl [vmem:[#allocation1] sm:$0xff pattern:$0x73625140] %v1857
    %s2042 = scalar_lea.vmem [#allocation1], 1
    %v2043 = vld [vmem:[%s2042] ss:$4 sm:$0xff]
    %v2044 = vrot.slane %v2043, 7
    %v2045 = vrot.slane %v2044, 2
    %2046 = vrot.lane.b32.xlu0 %v2045, 96
    %v2047 = vpop.permute.xlu0 %2046
    %2049 = vst.msk [vmem:[#allocation5 + $0xc] sm:$0x1] %vm1886, %v2047
    %2050 = vst.sshfl [vmem:[#allocation1] sm:$0xff pattern:$0x73625140] %v1857
    %s2051 = scalar_lea.vmem [#allocation1], 2
    %v2052 = vld [vmem:[%s2051] ss:$4 sm:$0xff]
    %2054 = vst.msk [vmem:[#allocation5 + $0xe] sm:$0x1] %vm1860, %v2052
    %2055 = vst.sshfl [vmem:[#allocation1] sm:$0xff pattern:$0x73625140] %v1857
    %s2056 = scalar_lea.vmem [#allocation1], 2
    %v2057 = vld [vmem:[%s2056] ss:$4 sm:$0xff]
    %v2058 = vrot.slane %v2057, 7
    %v2059 = vrot.slane %v2058, 2
    %2060 = vrot.lane.b32.xlu0 %v2059, 32
    %v2061 = vpop.permute.xlu0 %2060
    %2063 = vst.msk [vmem:[#allocation5 + $0xe] sm:$0x1] %vm1868, %v2061
    %2064 = vst.sshfl [vmem:[#allocation1] sm:$0xff pattern:$0x73625140] %v1857
    %s2065 = scalar_lea.vmem [#allocation1], 3
    %v2066 = vld [vmem:[%s2065] ss:$4 sm:$0xff]
    %2067 = vrot.lane.b32.xlu0 %v2066, 64
    %v2068 = vpop.permute.xlu0 %2067
    %2070 = vst.msk [vmem:[#allocation5 + $0xe] sm:$0x1] %vm1876, %v2068
    %2071 = vst.sshfl [vmem:[#allocation1] sm:$0xff pattern:$0x73625140] %v1857
    %s2072 = scalar_lea.vmem [#allocation1], 3
    %v2073 = vld [vmem:[%s2072] ss:$4 sm:$0xff]
    %v2074 = vrot.slane %v2073, 7
    %v2075 = vrot.slane %v2074, 2
    %2076 = vrot.lane.b32.xlu0 %v2075, 96
    %v2077 = vpop.permute.xlu0 %2076
    %2079 = vst.msk [vmem:[#allocation5 + $0xe] sm:$0x1] %vm1886, %v2077
    %2080 = vst.msk [vmem:[#allocation5 + $0x10] sm:$0x1] %vm1860, %v1858
    %v2082 = vrot.slane %v1858, 7
    %v2083 = vrot.slane %v2082, 2
    %2084 = vrot.lane.b32.xlu0 %v2083, 32
    %v2085 = vpop.permute.xlu0 %2084
    %2087 = vst.msk [vmem:[#allocation5 + $0x10] sm:$0x1] %vm1868, %v2085
    %2088 = vst.sshfl [vmem:[#allocation1] sm:$0xff pattern:$0x73625140] %v1858
    %s2089 = scalar_lea.vmem [#allocation1], 1
    %v2090 = vld [vmem:[%s2089] ss:$4 sm:$0xff]
    %2091 = vrot.lane.b32.xlu0 %v2090, 64
    %v2092 = vpop.permute.xlu0 %2091
    %2094 = vst.msk [vmem:[#allocation5 + $0x10] sm:$0x1] %vm1876, %v2092
    %2095 = vst.sshfl [vmem:[#allocation1] sm:$0xff pattern:$0x73625140] %v1858
    %s2096 = scalar_lea.vmem [#allocation1], 1
    %v2097 = vld [vmem:[%s2096] ss:$4 sm:$0xff]
    %v2098 = vrot.slane %v2097, 7
    %v2099 = vrot.slane %v2098, 2
    %2100 = vrot.lane.b32.xlu0 %v2099, 96
    %v2101 = vpop.permute.xlu0 %2100
    %2103 = vst.msk [vmem:[#allocation5 + $0x10] sm:$0x1] %vm1886, %v2101
    %2104 = vst.sshfl [vmem:[#allocation1] sm:$0xff pattern:$0x73625140] %v1858
    %s2105 = scalar_lea.vmem [#allocation1], 2
    %v2106 = vld [vmem:[%s2105] ss:$4 sm:$0xff]
    %2108 = vst.msk [vmem:[#allocation5 + $0x12] sm:$0x1] %vm1860, %v2106
    %2109 = vst.sshfl [vmem:[#allocation1] sm:$0xff pattern:$0x73625140] %v1858
    %s2110 = scalar_lea.vmem [#allocation1], 2
    %v2111 = vld [vmem:[%s2110] ss:$4 sm:$0xff]
    %v2112 = vrot.slane %v2111, 7
    %v2113 = vrot.slane %v2112, 2
    %2114 = vrot.lane.b32.xlu0 %v2113, 32
    %v2115 = vpop.permute.xlu0 %2114
    %2117 = vst.msk [vmem:[#allocation5 + $0x12] sm:$0x1] %vm1868, %v2115
    %2118 = vst.sshfl [vmem:[#allocation1] sm:$0xff pattern:$0x73625140] %v1858
    %s2119 = scalar_lea.vmem [#allocation1], 3
    %v2120 = vld [vmem:[%s2119] ss:$4 sm:$0xff]
    %2121 = vrot.lane.b32.xlu0 %v2120, 64
    %v2122 = vpop.permute.xlu0 %2121
    %2124 = vst.msk [vmem:[#allocation5 + $0x12] sm:$0x1] %vm1876, %v2122
    %2125 = vst.sshfl [vmem:[#allocation1] sm:$0xff pattern:$0x73625140] %v1858
    %s2126 = scalar_lea.vmem [#allocation1], 3
    %v2127 = vld [vmem:[%s2126] ss:$4 sm:$0xff]
    %v2128 = vrot.slane %v2127, 7
    %v2129 = vrot.slane %v2128, 2
    %2130 = vrot.lane.b32.xlu0 %v2129, 96
    %v2131 = vpop.permute.xlu0 %2130
    %2133 = vst.msk [vmem:[#allocation5 + $0x12] sm:$0x1] %vm1886, %v2131
    %2134 = vst.msk [vmem:[#allocation5 + $0x14] sm:$0x1] %vm1860, %v1859
    %v2136 = vrot.slane %v1859, 7
    %v2137 = vrot.slane %v2136, 2
    %2138 = vrot.lane.b32.xlu0 %v2137, 32
    %v2139 = vpop.permute.xlu0 %2138
    %2141 = vst.msk [vmem:[#allocation5 + $0x14] sm:$0x1] %vm1868, %v2139
    %2142 = vst.sshfl [vmem:[#allocation1] sm:$0xff pattern:$0x73625140] %v1859
    %s2143 = scalar_lea.vmem [#allocation1], 1
    %v2144 = vld [vmem:[%s2143] ss:$4 sm:$0xff]
    %2145 = vrot.lane.b32.xlu0 %v2144, 64
    %v2146 = vpop.permute.xlu0 %2145
    %2148 = vst.msk [vmem:[#allocation5 + $0x14] sm:$0x1] %vm1876, %v2146
    %2149 = vst.sshfl [vmem:[#allocation1] sm:$0xff pattern:$0x73625140] %v1859
    %s2150 = scalar_lea.vmem [#allocation1], 1
    %v2151 = vld [vmem:[%s2150] ss:$4 sm:$0xff]
    %v2152 = vrot.slane %v2151, 7
    %v2153 = vrot.slane %v2152, 2
    %2154 = vrot.lane.b32.xlu0 %v2153, 96
    %v2155 = vpop.permute.xlu0 %2154
    %2157 = vst.msk [vmem:[#allocation5 + $0x14] sm:$0x1] %vm1886, %v2155
    %2158 = vst.sshfl [vmem:[#allocation1] sm:$0xff pattern:$0x73625140] %v1859
    %s2159 = scalar_lea.vmem [#allocation1], 2
    %v2160 = vld [vmem:[%s2159] ss:$4 sm:$0xff]
    %2162 = vst.msk [vmem:[#allocation5 + $0x16] sm:$0x1] %vm1860, %v2160
    %v2163 = vld [vmem:[%s0 + $0xb4] sm:$0xff]
    %v2164 = vld [vmem:[%s0 + $0xbc] sm:$0xff]
    %v2165 = vld [vmem:[%s0 + $0xc4] sm:$0xff]
    %v2166 = vld [vmem:[%s0 + $0xcc] sm:$0xff]
    %v2167 = vld [vmem:[%s0 + $0xd4] sm:$0xff]
    %v2168 = vld [vmem:[%s0 + $0xdc] sm:$0xff]
    %v2169 = vld [vmem:[%s0 + $0xe4] sm:$0xff]
    %v2170 = vld [vmem:[%s0 + $0xec] sm:$0xff]
    %v2171 = vld [vmem:[%s0 + $0xf4] sm:$0xff]
    %v2172 = vld [vmem:[%s0 + $0xfc] sm:$0xff]
    %v2173 = vld [vmem:[%s0 + $0x104] sm:$0xff]
    %v2174 = vld [vmem:[%s0 + $0x10c] sm:$0xff]
    %v2175 = vld [vmem:[%s0 + $0x114] sm:$0xff]
    %v2176 = vld [vmem:[%s0 + $0x11c] sm:$0xff]
    %v2177 = vld [vmem:[%s0 + $0x124] sm:$0xff]
    %v2178 = vld [vmem:[%s0 + $0x12c] sm:$0xff]
    %v2179 = vld [vmem:[%s0 + $0x134] sm:$0xff]
    %v2180 = vld [vmem:[%s0 + $0x13c] sm:$0xff]
    %v2181 = vld [vmem:[%s0 + $0x144] sm:$0xff]
    %v2182 = vld [vmem:[%s0 + $0x14c] sm:$0xff]
    %v2183 = vld [vmem:[%s0 + $0x154] sm:$0xff]
    %v2184 = vld [vmem:[%s0 + $0x15c] sm:$0xff]
    %v2185 = vld [vmem:[%s0 + $0x164] sm:$0xf]
    %v2186 = vsub.f32 %v2163, %v203
    %v2187 = vsub.f32 %v2164, %v203
    %v2188 = vsub.f32 %v2165, %v203
    %v2189 = vsub.f32 %v2166, %v203
    %v2190 = vsub.f32 %v2167, %v203
    %v2191 = vsub.f32 %v2168, %v203
    %v2192 = vsub.f32 %v2169, %v203
    %v2193 = vsub.f32 %v2170, %v203
    %v2194 = vsub.f32 %v2171, %v203
    %v2195 = vsub.f32 %v2172, %v203
    %v2196 = vsub.f32 %v2173, %v203
    %v2197 = vsub.f32 %v2174, %v203
    %v2198 = vsub.f32 %v2175, %v203
    %v2199 = vsub.f32 %v2176, %v203
    %v2200 = vsub.f32 %v2177, %v203
    %v2201 = vsub.f32 %v2178, %v203
    %v2202 = vsub.f32 %v2179, %v203
    %v2203 = vsub.f32 %v2180, %v203
    %v2204 = vsub.f32 %v2181, %v203
    %v2205 = vsub.f32 %v2182, %v203
    %v2206 = vsub.f32 %v2183, %v203
    %v2207 = vsub.f32 %v2184, %v203
    %v2208 = vsub.f32 %v2185, %v203
    %v2209 = vmul.f32 %v2186, %v400
    %v2210 = vmul.f32 %v2187, %v400
    %v2211 = vmul.f32 %v2188, %v400
    %v2212 = vmul.f32 %v2189, %v400
    %v2213 = vmul.f32 %v2190, %v400
    %v2214 = vmul.f32 %v2191, %v400
    %v2215 = vmul.f32 %v2192, %v400
    %v2216 = vmul.f32 %v2193, %v400
    %v2217 = vmul.f32 %v2194, %v400
    %v2218 = vmul.f32 %v2195, %v400
    %v2219 = vmul.f32 %v2196, %v400
    %v2220 = vmul.f32 %v2197, %v400
    %v2221 = vmul.f32 %v2198, %v400
    %v2222 = vmul.f32 %v2199, %v400
    %v2223 = vmul.f32 %v2200, %v400
    %v2224 = vmul.f32 %v2201, %v400
    %v2225 = vmul.f32 %v2202, %v400
    %v2226 = vmul.f32 %v2203, %v400
    %v2227 = vmul.f32 %v2204, %v400
    %v2228 = vmul.f32 %v2205, %v400
    %v2229 = vmul.f32 %v2206, %v400
    %v2230 = vmul.f32 %v2207, %v400
    %v2231 = vmul.f32 %v2208, %v400
    %2232 = vst.msk [vmem:[#allocation2 + $0x2] sm:$0xff] %vm107, %v2209
    %2233 = vst.msk [vmem:[#allocation2 + $0xa] sm:$0xff] %vm107, %v2210
    %2234 = vst.msk [vmem:[#allocation2 + $0x12] sm:$0xff] %vm107, %v2211
    %2235 = vst.msk [vmem:[#allocation2 + $0x1a] sm:$0xff] %vm107, %v2212
    %2236 = vst.msk [vmem:[#allocation2 + $0x22] sm:$0xff] %vm107, %v2213
    %2237 = vst.msk [vmem:[#allocation2 + $0x2a] sm:$0xff] %vm107, %v2214
    %2238 = vst.msk [vmem:[#allocation2 + $0x32] sm:$0xff] %vm107, %v2215
    %2239 = vst.msk [vmem:[#allocation2 + $0x3a] sm:$0xff] %vm107, %v2216
    %2240 = vst.msk [vmem:[#allocation2 + $0x42] sm:$0xff] %vm107, %v2217
    %2241 = vst.msk [vmem:[#allocation2 + $0x4a] sm:$0xff] %vm107, %v2218
    %2242 = vst.msk [vmem:[#allocation2 + $0x52] sm:$0xff] %vm107, %v2219
    %2243 = vst.msk [vmem:[#allocation2 + $0x5a] sm:$0xff] %vm107, %v2220
    %2244 = vst.msk [vmem:[#allocation2 + $0x62] sm:$0xff] %vm107, %v2221
    %2245 = vst.msk [vmem:[#allocation2 + $0x6a] sm:$0xff] %vm107, %v2222
    %2246 = vst.msk [vmem:[#allocation2 + $0x72] sm:$0xff] %vm107, %v2223
    %2247 = vst.msk [vmem:[#allocation2 + $0x7a] sm:$0xff] %vm107, %v2224
    %2248 = vst.msk [vmem:[#allocation2 + $0x82] sm:$0xff] %vm107, %v2225
    %2249 = vst.msk [vmem:[#allocation2 + $0x8a] sm:$0xff] %vm107, %v2226
    %2250 = vst.msk [vmem:[#allocation2 + $0x92] sm:$0xff] %vm107, %v2227
    %2251 = vst.msk [vmem:[#allocation2 + $0x9a] sm:$0xff] %vm107, %v2228
    %2252 = vst.msk [vmem:[#allocation2 + $0xa2] sm:$0xff] %vm107, %v2229
    %2253 = vst.msk [vmem:[#allocation2 + $0xaa] sm:$0xff] %vm107, %v2230
    %2254 = vst.msk [vmem:[#allocation2 + $0xb2] sm:$0xf] %vm448, %v2231
    %2255 = vst.msk [vmem:[#allocation2 - $0x2] sm:$0xc] %vm450, %v2231
    %2256 = vst.msk [vmem:[#allocation2 + $0xb6] sm:$0x3] %vm452, %v2209
    %v2257 = vld [vmem:[#allocation2] ss:$2 sm:$0xff]
    %v2258 = vld [vmem:[%s455] ss:$2 sm:$0xff]
    %v2259 = vld [vmem:[%s457] ss:$2 sm:$0xff]
    %v2260 = vld [vmem:[%s459] ss:$2 sm:$0xff]
    %v2261 = vld [vmem:[%s461] ss:$2 sm:$0xff]
    %v2262 = vld [vmem:[%s463] ss:$2 sm:$0xff]
    %v2263 = vld [vmem:[%s465] ss:$2 sm:$0xff]
    %v2264 = vld [vmem:[%s467] ss:$2 sm:$0xff]
    %v2265 = vld [vmem:[%s469] ss:$2 sm:$0xff]
    %v2266 = vld [vmem:[%s471] ss:$2 sm:$0xff]
    %v2267 = vld [vmem:[%s473] ss:$2 sm:$0xff]
    %v2268 = vld [vmem:[%s475] ss:$2 sm:$0x3]
    %v2269 = vld [vmem:[%s1] sm:$0xf]
    %v2270 = vld [vmem:[%s478] ss:$2 sm:$0xff]
    %v2271 = vld [vmem:[%s480] ss:$2 sm:$0xff]
    %v2272 = vld [vmem:[%s482] ss:$2 sm:$0xff]
    %v2273 = vld [vmem:[%s484] ss:$2 sm:$0xff]
    %v2274 = vld [vmem:[%s486] ss:$2 sm:$0xff]
    %v2275 = vld [vmem:[%s488] ss:$2 sm:$0xff]
    %v2276 = vld [vmem:[%s490] ss:$2 sm:$0xff]
    %v2277 = vld [vmem:[%s492] ss:$2 sm:$0xff]
    %v2278 = vld [vmem:[%s494] ss:$2 sm:$0xff]
    %v2279 = vld [vmem:[%s496] ss:$2 sm:$0xff]
    %v2280 = vld [vmem:[%s498] ss:$2 sm:$0xff]
    %v2281 = vld [vmem:[%s500] ss:$2 sm:$0x3]
    %v2282 = vld [vmem:[%s502] sm:$0xf]
    %v2284 = vsel %vm107, %v2270, 0
    %v2287 = vsel %vm107, %v2271, 0
    %v2290 = vsel %vm107, %v2272, 0
    %v2293 = vsel %vm107, %v2273, 0
    %v2296 = vsel %vm107, %v2274, 0
    %v2299 = vsel %vm107, %v2275, 0
    %v2302 = vsel %vm107, %v2276, 0
    %v2305 = vsel %vm107, %v2277, 0
    %v2308 = vsel %vm107, %v2278, 0
    %v2311 = vsel %vm107, %v2279, 0
    %v2314 = vsel %vm107, %v2280, 0
    %v2317 = vsel %vm107, %v2281, 0
    %v2320 = vsel %vm540, %v2282, 0
    %2322 = vmatpush.msra.mxu0 0.0
    %2323 = vmatpush.msra.mxu0 0.0
    %2324 = vmatpush.msra.mxu0 0.0
    %2325 = vmatpush.msra.mxu0 0.0
    %2326 = vmatpush.msra.mxu0 0.0
    %2327 = vmatpush.msra.mxu0 0.0
    %2328 = vmatpush.msra.mxu0 0.0
    %2329 = vmatpush.msra.mxu0 0.0
    %2330 = vmatpush.msra.mxu0 0.0
    %2331 = vmatpush.msra.mxu0 0.0
    %2332 = vmatpush.msra.mxu0 0.0
    %2333 = vmatpush.msra.mxu0 0.0
    %2334 = vmatpush.msra.mxu0 0.0
    %2335 = vmatpush.msra.mxu0 0.0
    %2336 = vmatpush.msra.mxu0 0.0
    %2337 = vmatpush.msra.mxu0 %v2320
    %2338 = vmatmul.f32.gmra.mxu0 %v2284
    %v2339 = vpop.f32.mrf.mxu0
    %v2340 = vadd.f32 0.0, %v2339
    %2341 = vmatmul.f32.gmra.mxu0 %v2287
    %v2342 = vpop.f32.mrf.mxu0
    %v2343 = vadd.f32 0.0, %v2342
    %2344 = vmatmul.f32.gmra.mxu0 %v2290
    %v2345 = vpop.f32.mrf.mxu0
    %v2346 = vadd.f32 0.0, %v2345
    %2347 = vmatmul.f32.gmra.mxu0 %v2293
    %v2348 = vpop.f32.mrf.mxu0
    %v2349 = vadd.f32 0.0, %v2348
    %2350 = vmatmul.f32.gmra.mxu0 %v2296
    %v2351 = vpop.f32.mrf.mxu0
    %v2352 = vadd.f32 0.0, %v2351
    %2353 = vmatmul.f32.gmra.mxu0 %v2299
    %v2354 = vpop.f32.mrf.mxu0
    %v2355 = vadd.f32 0.0, %v2354
    %2356 = vmatmul.f32.gmra.mxu0 %v2302
    %v2357 = vpop.f32.mrf.mxu0
    %v2358 = vadd.f32 0.0, %v2357
    %2359 = vmatmul.f32.gmra.mxu0 %v2305
    %v2360 = vpop.f32.mrf.mxu0
    %v2361 = vadd.f32 0.0, %v2360
    %2362 = vmatmul.f32.gmra.mxu0 %v2308
    %v2363 = vpop.f32.mrf.mxu0
    %v2364 = vadd.f32 0.0, %v2363
    %2365 = vmatmul.f32.gmra.mxu0 %v2311
    %v2366 = vpop.f32.mrf.mxu0
    %v2367 = vadd.f32 0.0, %v2366
    %2368 = vmatmul.f32.gmra.mxu0 %v2314
    %v2369 = vpop.f32.mrf.mxu0
    %v2370 = vadd.f32 0.0, %v2369
    %2371 = vmatmul.f32.gmra.mxu0 %v2317
    %v2372 = vpop.f32.mrf.mxu0
    %v2373 = vadd.f32 0.0, %v2372
    %2374 = vdwg.mxu0
    %v2376 = vsel %vm107, %v2257, 0
    %v2379 = vsel %vm107, %v2258, 0
    %v2382 = vsel %vm107, %v2259, 0
    %v2385 = vsel %vm107, %v2260, 0
    %v2388 = vsel %vm107, %v2261, 0
    %v2391 = vsel %vm107, %v2262, 0
    %v2394 = vsel %vm107, %v2263, 0
    %v2397 = vsel %vm107, %v2264, 0
    %v2400 = vsel %vm107, %v2265, 0
    %v2403 = vsel %vm107, %v2266, 0
    %v2406 = vsel %vm107, %v2267, 0
    %v2409 = vsel %vm107, %v2268, 0
    %v2412 = vsel %vm540, %v2269, 0
    %2414 = vmatpush.msra.mxu0 0.0
    %2415 = vmatpush.msra.mxu0 0.0
    %2416 = vmatpush.msra.mxu0 0.0
    %2417 = vmatpush.msra.mxu0 0.0
    %2418 = vmatpush.msra.mxu0 0.0
    %2419 = vmatpush.msra.mxu0 0.0
    %2420 = vmatpush.msra.mxu0 0.0
    %2421 = vmatpush.msra.mxu0 0.0
    %2422 = vmatpush.msra.mxu0 0.0
    %2423 = vmatpush.msra.mxu0 0.0
    %2424 = vmatpush.msra.mxu0 0.0
    %2425 = vmatpush.msra.mxu0 0.0
    %2426 = vmatpush.msra.mxu0 0.0
    %2427 = vmatpush.msra.mxu0 0.0
    %2428 = vmatpush.msra.mxu0 0.0
    %2429 = vmatpush.msra.mxu0 %v2412
    %2430 = vmatmul.f32.gmra.mxu0 %v2376
    %v2431 = vpop.f32.mrf.mxu0
    %v2432 = vadd.f32 %v2340, %v2431
    %2433 = vmatmul.f32.gmra.mxu0 %v2379
    %v2434 = vpop.f32.mrf.mxu0
    %v2435 = vadd.f32 %v2343, %v2434
    %2436 = vmatmul.f32.gmra.mxu0 %v2382
    %v2437 = vpop.f32.mrf.mxu0
    %v2438 = vadd.f32 %v2346, %v2437
    %2439 = vmatmul.f32.gmra.mxu0 %v2385
    %v2440 = vpop.f32.mrf.mxu0
    %v2441 = vadd.f32 %v2349, %v2440
    %2442 = vmatmul.f32.gmra.mxu0 %v2388
    %v2443 = vpop.f32.mrf.mxu0
    %v2444 = vadd.f32 %v2352, %v2443
    %2445 = vmatmul.f32.gmra.mxu0 %v2391
    %v2446 = vpop.f32.mrf.mxu0
    %v2447 = vadd.f32 %v2355, %v2446
    %2448 = vmatmul.f32.gmra.mxu0 %v2394
    %v2449 = vpop.f32.mrf.mxu0
    %v2450 = vadd.f32 %v2358, %v2449
    %2451 = vmatmul.f32.gmra.mxu0 %v2397
    %v2452 = vpop.f32.mrf.mxu0
    %v2453 = vadd.f32 %v2361, %v2452
    %2454 = vmatmul.f32.gmra.mxu0 %v2400
    %v2455 = vpop.f32.mrf.mxu0
    %v2456 = vadd.f32 %v2364, %v2455
    %2457 = vmatmul.f32.gmra.mxu0 %v2403
    %v2458 = vpop.f32.mrf.mxu0
    %v2459 = vadd.f32 %v2367, %v2458
    %2460 = vmatmul.f32.gmra.mxu0 %v2406
    %v2461 = vpop.f32.mrf.mxu0
    %v2462 = vadd.f32 %v2370, %v2461
    %2463 = vmatmul.f32.gmra.mxu0 %v2409
    %v2464 = vpop.f32.mrf.mxu0
    %v2465 = vadd.f32 %v2373, %v2464
    %2466 = vdwg.mxu0
    %v2467 = vld [vmem:[%s689] ss:$2 sm:$0xff]
    %v2468 = vld [vmem:[%s691] ss:$2 sm:$0xff]
    %v2469 = vld [vmem:[%s693] ss:$2 sm:$0xff]
    %v2470 = vld [vmem:[%s695] ss:$2 sm:$0xff]
    %v2471 = vld [vmem:[%s697] ss:$2 sm:$0xff]
    %v2472 = vld [vmem:[%s699] ss:$2 sm:$0xff]
    %v2473 = vld [vmem:[%s701] ss:$2 sm:$0xff]
    %v2474 = vld [vmem:[%s703] ss:$2 sm:$0xff]
    %v2475 = vld [vmem:[%s705] ss:$2 sm:$0xff]
    %v2476 = vld [vmem:[%s707] ss:$2 sm:$0xff]
    %v2477 = vld [vmem:[%s709] ss:$2 sm:$0xff]
    %v2478 = vld [vmem:[%s711] ss:$2 sm:$0x3]
    %v2479 = vld [vmem:[%s713] sm:$0xf]
    %v2481 = vsel %vm107, %v2467, 0
    %v2484 = vsel %vm107, %v2468, 0
    %v2487 = vsel %vm107, %v2469, 0
    %v2490 = vsel %vm107, %v2470, 0
    %v2493 = vsel %vm107, %v2471, 0
    %v2496 = vsel %vm107, %v2472, 0
    %v2499 = vsel %vm107, %v2473, 0
    %v2502 = vsel %vm107, %v2474, 0
    %v2505 = vsel %vm107, %v2475, 0
    %v2508 = vsel %vm107, %v2476, 0
    %v2511 = vsel %vm107, %v2477, 0
    %v2514 = vsel %vm107, %v2478, 0
    %v2517 = vsel %vm540, %v2479, 0
    %2519 = vmatpush.msra.mxu0 0.0
    %2520 = vmatpush.msra.mxu0 0.0
    %2521 = vmatpush.msra.mxu0 0.0
    %2522 = vmatpush.msra.mxu0 0.0
    %2523 = vmatpush.msra.mxu0 0.0
    %2524 = vmatpush.msra.mxu0 0.0
    %2525 = vmatpush.msra.mxu0 0.0
    %2526 = vmatpush.msra.mxu0 0.0
    %2527 = vmatpush.msra.mxu0 0.0
    %2528 = vmatpush.msra.mxu0 0.0
    %2529 = vmatpush.msra.mxu0 0.0
    %2530 = vmatpush.msra.mxu0 0.0
    %2531 = vmatpush.msra.mxu0 0.0
    %2532 = vmatpush.msra.mxu0 0.0
    %2533 = vmatpush.msra.mxu0 0.0
    %2534 = vmatpush.msra.mxu0 %v2517
    %2535 = vmatmul.f32.gmra.mxu0 %v2481
    %v2536 = vpop.f32.mrf.mxu0
    %v2537 = vadd.f32 0.0, %v2536
    %2538 = vmatmul.f32.gmra.mxu0 %v2484
    %v2539 = vpop.f32.mrf.mxu0
    %v2540 = vadd.f32 0.0, %v2539
    %2541 = vmatmul.f32.gmra.mxu0 %v2487
    %v2542 = vpop.f32.mrf.mxu0
    %v2543 = vadd.f32 0.0, %v2542
    %2544 = vmatmul.f32.gmra.mxu0 %v2490
    %v2545 = vpop.f32.mrf.mxu0
    %v2546 = vadd.f32 0.0, %v2545
    %2547 = vmatmul.f32.gmra.mxu0 %v2493
    %v2548 = vpop.f32.mrf.mxu0
    %v2549 = vadd.f32 0.0, %v2548
    %2550 = vmatmul.f32.gmra.mxu0 %v2496
    %v2551 = vpop.f32.mrf.mxu0
    %v2552 = vadd.f32 0.0, %v2551
    %2553 = vmatmul.f32.gmra.mxu0 %v2499
    %v2554 = vpop.f32.mrf.mxu0
    %v2555 = vadd.f32 0.0, %v2554
    %2556 = vmatmul.f32.gmra.mxu0 %v2502
    %v2557 = vpop.f32.mrf.mxu0
    %v2558 = vadd.f32 0.0, %v2557
    %2559 = vmatmul.f32.gmra.mxu0 %v2505
    %v2560 = vpop.f32.mrf.mxu0
    %v2561 = vadd.f32 0.0, %v2560
    %2562 = vmatmul.f32.gmra.mxu0 %v2508
    %v2563 = vpop.f32.mrf.mxu0
    %v2564 = vadd.f32 0.0, %v2563
    %2565 = vmatmul.f32.gmra.mxu0 %v2511
    %v2566 = vpop.f32.mrf.mxu0
    %v2567 = vadd.f32 0.0, %v2566
    %2568 = vmatmul.f32.gmra.mxu0 %v2514
    %v2569 = vpop.f32.mrf.mxu0
    %v2570 = vadd.f32 0.0, %v2569
    %2571 = vdwg.mxu0
    %v2572 = vadd.f32 %v2432, %v2537
    %v2573 = vadd.f32 %v2435, %v2540
    %v2574 = vadd.f32 %v2438, %v2543
    %v2575 = vadd.f32 %v2441, %v2546
    %v2576 = vadd.f32 %v2444, %v2549
    %v2577 = vadd.f32 %v2447, %v2552
    %v2578 = vadd.f32 %v2450, %v2555
    %v2579 = vadd.f32 %v2453, %v2558
    %v2580 = vadd.f32 %v2456, %v2561
    %v2581 = vadd.f32 %v2459, %v2564
    %v2582 = vadd.f32 %v2462, %v2567
    %v2583 = vadd.f32 %v2465, %v2570
    %v2584 = vld [vmem:[%s819] ss:$2 sm:$0xff]
    %v2585 = vld [vmem:[%s821] ss:$2 sm:$0xff]
    %v2586 = vld [vmem:[%s823] ss:$2 sm:$0xff]
    %v2587 = vld [vmem:[%s825] ss:$2 sm:$0xff]
    %v2588 = vld [vmem:[%s827] ss:$2 sm:$0xff]
    %v2589 = vld [vmem:[%s829] ss:$2 sm:$0xff]
    %v2590 = vld [vmem:[%s831] ss:$2 sm:$0xff]
    %v2591 = vld [vmem:[%s833] ss:$2 sm:$0xff]
    %v2592 = vld [vmem:[%s835] ss:$2 sm:$0xff]
    %v2593 = vld [vmem:[%s837] ss:$2 sm:$0xff]
    %v2594 = vld [vmem:[%s839] ss:$2 sm:$0xff]
    %v2595 = vld [vmem:[%s841] ss:$2 sm:$0x3]
    %v2596 = vld [vmem:[%s843] sm:$0xf]
    %v2598 = vsel %vm107, %v2584, 0
    %v2601 = vsel %vm107, %v2585, 0
    %v2604 = vsel %vm107, %v2586, 0
    %v2607 = vsel %vm107, %v2587, 0
    %v2610 = vsel %vm107, %v2588, 0
    %v2613 = vsel %vm107, %v2589, 0
    %v2616 = vsel %vm107, %v2590, 0
    %v2619 = vsel %vm107, %v2591, 0
    %v2622 = vsel %vm107, %v2592, 0
    %v2625 = vsel %vm107, %v2593, 0
    %v2628 = vsel %vm107, %v2594, 0
    %v2631 = vsel %vm107, %v2595, 0
    %v2634 = vsel %vm540, %v2596, 0
    %2636 = vmatpush.msra.mxu0 0.0
    %2637 = vmatpush.msra.mxu0 0.0
    %2638 = vmatpush.msra.mxu0 0.0
    %2639 = vmatpush.msra.mxu0 0.0
    %2640 = vmatpush.msra.mxu0 0.0
    %2641 = vmatpush.msra.mxu0 0.0
    %2642 = vmatpush.msra.mxu0 0.0
    %2643 = vmatpush.msra.mxu0 0.0
    %2644 = vmatpush.msra.mxu0 0.0
    %2645 = vmatpush.msra.mxu0 0.0
    %2646 = vmatpush.msra.mxu0 0.0
    %2647 = vmatpush.msra.mxu0 0.0
    %2648 = vmatpush.msra.mxu0 0.0
    %2649 = vmatpush.msra.mxu0 0.0
    %2650 = vmatpush.msra.mxu0 0.0
    %2651 = vmatpush.msra.mxu0 %v2634
    %2652 = vmatmul.f32.gmra.mxu0 %v2598
    %v2653 = vpop.f32.mrf.mxu0
    %v2654 = vadd.f32 0.0, %v2653
    %2655 = vmatmul.f32.gmra.mxu0 %v2601
    %v2656 = vpop.f32.mrf.mxu0
    %v2657 = vadd.f32 0.0, %v2656
    %2658 = vmatmul.f32.gmra.mxu0 %v2604
    %v2659 = vpop.f32.mrf.mxu0
    %v2660 = vadd.f32 0.0, %v2659
    %2661 = vmatmul.f32.gmra.mxu0 %v2607
    %v2662 = vpop.f32.mrf.mxu0
    %v2663 = vadd.f32 0.0, %v2662
    %2664 = vmatmul.f32.gmra.mxu0 %v2610
    %v2665 = vpop.f32.mrf.mxu0
    %v2666 = vadd.f32 0.0, %v2665
    %2667 = vmatmul.f32.gmra.mxu0 %v2613
    %v2668 = vpop.f32.mrf.mxu0
    %v2669 = vadd.f32 0.0, %v2668
    %2670 = vmatmul.f32.gmra.mxu0 %v2616
    %v2671 = vpop.f32.mrf.mxu0
    %v2672 = vadd.f32 0.0, %v2671
    %2673 = vmatmul.f32.gmra.mxu0 %v2619
    %v2674 = vpop.f32.mrf.mxu0
    %v2675 = vadd.f32 0.0, %v2674
    %2676 = vmatmul.f32.gmra.mxu0 %v2622
    %v2677 = vpop.f32.mrf.mxu0
    %v2678 = vadd.f32 0.0, %v2677
    %2679 = vmatmul.f32.gmra.mxu0 %v2625
    %v2680 = vpop.f32.mrf.mxu0
    %v2681 = vadd.f32 0.0, %v2680
    %2682 = vmatmul.f32.gmra.mxu0 %v2628
    %v2683 = vpop.f32.mrf.mxu0
    %v2684 = vadd.f32 0.0, %v2683
    %2685 = vmatmul.f32.gmra.mxu0 %v2631
    %v2686 = vpop.f32.mrf.mxu0
    %v2687 = vadd.f32 0.0, %v2686
    %2688 = vdwg.mxu0
    %v2689 = vadd.f32 %v2572, %v2654
    %v2690 = vadd.f32 %v2573, %v2657
    %v2691 = vadd.f32 %v2574, %v2660
    %v2692 = vadd.f32 %v2575, %v2663
    %v2693 = vadd.f32 %v2576, %v2666
    %v2694 = vadd.f32 %v2577, %v2669
    %v2695 = vadd.f32 %v2578, %v2672
    %v2696 = vadd.f32 %v2579, %v2675
    %v2697 = vadd.f32 %v2580, %v2678
    %v2698 = vadd.f32 %v2581, %v2681
    %v2699 = vadd.f32 %v2582, %v2684
    %v2700 = vadd.f32 %v2583, %v2687
    %v2701 = vld [vmem:[%s949] ss:$2 sm:$0xff]
    %v2702 = vld [vmem:[%s951] ss:$2 sm:$0xff]
    %v2703 = vld [vmem:[%s953] ss:$2 sm:$0xff]
    %v2704 = vld [vmem:[%s955] ss:$2 sm:$0xff]
    %v2705 = vld [vmem:[%s957] ss:$2 sm:$0xff]
    %v2706 = vld [vmem:[%s959] ss:$2 sm:$0xff]
    %v2707 = vld [vmem:[%s961] ss:$2 sm:$0xff]
    %v2708 = vld [vmem:[%s963] ss:$2 sm:$0xff]
    %v2709 = vld [vmem:[%s965] ss:$2 sm:$0xff]
    %v2710 = vld [vmem:[%s967] ss:$2 sm:$0xff]
    %v2711 = vld [vmem:[%s969] ss:$2 sm:$0xff]
    %v2712 = vld [vmem:[%s971] ss:$2 sm:$0x3]
    %v2713 = vld [vmem:[%s973] sm:$0xf]
    %v2715 = vsel %vm107, %v2701, 0
    %v2718 = vsel %vm107, %v2702, 0
    %v2721 = vsel %vm107, %v2703, 0
    %v2724 = vsel %vm107, %v2704, 0
    %v2727 = vsel %vm107, %v2705, 0
    %v2730 = vsel %vm107, %v2706, 0
    %v2733 = vsel %vm107, %v2707, 0
    %v2736 = vsel %vm107, %v2708, 0
    %v2739 = vsel %vm107, %v2709, 0
    %v2742 = vsel %vm107, %v2710, 0
    %v2745 = vsel %vm107, %v2711, 0
    %v2748 = vsel %vm107, %v2712, 0
    %v2751 = vsel %vm540, %v2713, 0
    %2753 = vmatpush.msra.mxu0 0.0
    %2754 = vmatpush.msra.mxu0 0.0
    %2755 = vmatpush.msra.mxu0 0.0
    %2756 = vmatpush.msra.mxu0 0.0
    %2757 = vmatpush.msra.mxu0 0.0
    %2758 = vmatpush.msra.mxu0 0.0
    %2759 = vmatpush.msra.mxu0 0.0
    %2760 = vmatpush.msra.mxu0 0.0
    %2761 = vmatpush.msra.mxu0 0.0
    %2762 = vmatpush.msra.mxu0 0.0
    %2763 = vmatpush.msra.mxu0 0.0
    %2764 = vmatpush.msra.mxu0 0.0
    %2765 = vmatpush.msra.mxu0 0.0
    %2766 = vmatpush.msra.mxu0 0.0
    %2767 = vmatpush.msra.mxu0 0.0
    %2768 = vmatpush.msra.mxu0 %v2751
    %2769 = vmatmul.f32.gmra.mxu0 %v2715
    %v2770 = vpop.f32.mrf.mxu0
    %v2771 = vadd.f32 0.0, %v2770
    %2772 = vmatmul.f32.gmra.mxu0 %v2718
    %v2773 = vpop.f32.mrf.mxu0
    %v2774 = vadd.f32 0.0, %v2773
    %2775 = vmatmul.f32.gmra.mxu0 %v2721
    %v2776 = vpop.f32.mrf.mxu0
    %v2777 = vadd.f32 0.0, %v2776
    %2778 = vmatmul.f32.gmra.mxu0 %v2724
    %v2779 = vpop.f32.mrf.mxu0
    %v2780 = vadd.f32 0.0, %v2779
    %2781 = vmatmul.f32.gmra.mxu0 %v2727
    %v2782 = vpop.f32.mrf.mxu0
    %v2783 = vadd.f32 0.0, %v2782
    %2784 = vmatmul.f32.gmra.mxu0 %v2730
    %v2785 = vpop.f32.mrf.mxu0
    %v2786 = vadd.f32 0.0, %v2785
    %2787 = vmatmul.f32.gmra.mxu0 %v2733
    %v2788 = vpop.f32.mrf.mxu0
    %v2789 = vadd.f32 0.0, %v2788
    %2790 = vmatmul.f32.gmra.mxu0 %v2736
    %v2791 = vpop.f32.mrf.mxu0
    %v2792 = vadd.f32 0.0, %v2791
    %2793 = vmatmul.f32.gmra.mxu0 %v2739
    %v2794 = vpop.f32.mrf.mxu0
    %v2795 = vadd.f32 0.0, %v2794
    %2796 = vmatmul.f32.gmra.mxu0 %v2742
    %v2797 = vpop.f32.mrf.mxu0
    %v2798 = vadd.f32 0.0, %v2797
    %2799 = vmatmul.f32.gmra.mxu0 %v2745
    %v2800 = vpop.f32.mrf.mxu0
    %v2801 = vadd.f32 0.0, %v2800
    %2802 = vmatmul.f32.gmra.mxu0 %v2748
    %v2803 = vpop.f32.mrf.mxu0
    %v2804 = vadd.f32 0.0, %v2803
    %2805 = vdwg.mxu0
    %v2806 = vadd.f32 %v2689, %v2771
    %v2807 = vadd.f32 %v2690, %v2774
    %v2808 = vadd.f32 %v2691, %v2777
    %v2809 = vadd.f32 %v2692, %v2780
    %v2810 = vadd.f32 %v2693, %v2783
    %v2811 = vadd.f32 %v2694, %v2786
    %v2812 = vadd.f32 %v2695, %v2789
    %v2813 = vadd.f32 %v2696, %v2792
    %v2814 = vadd.f32 %v2697, %v2795
    %v2815 = vadd.f32 %v2698, %v2798
    %v2816 = vadd.f32 %v2699, %v2801
    %v2817 = vadd.f32 %v2700, %v2804
    %v2818 = vld [vmem:[%s2] sm:$0x1]
    %v2820 = vperm.slane %v2818, 0
    %v2822 = vadd.f32 %v2806, %v2820
    %v2823 = vadd.f32 %v2807, %v2820
    %v2824 = vadd.f32 %v2808, %v2820
    %v2825 = vadd.f32 %v2809, %v2820
    %v2826 = vadd.f32 %v2810, %v2820
    %v2827 = vadd.f32 %v2811, %v2820
    %v2828 = vadd.f32 %v2812, %v2820
    %v2829 = vadd.f32 %v2813, %v2820
    %v2830 = vadd.f32 %v2814, %v2820
    %v2831 = vadd.f32 %v2815, %v2820
    %v2832 = vadd.f32 %v2816, %v2820
    %v2833 = vadd.f32 %v2817, %v2820
    %v2834 = vmax.f32 %v2822, 0.0
    %v2835 = vmax.f32 %v2823, 0.0
    %v2836 = vmax.f32 %v2824, 0.0
    %v2837 = vmax.f32 %v2825, 0.0
    %v2838 = vmax.f32 %v2826, 0.0
    %v2839 = vmax.f32 %v2827, 0.0
    %v2840 = vmax.f32 %v2828, 0.0
    %v2841 = vmax.f32 %v2829, 0.0
    %v2842 = vmax.f32 %v2830, 0.0
    %v2843 = vmax.f32 %v2831, 0.0
    %v2844 = vmax.f32 %v2832, 0.0
    %v2845 = vmax.f32 %v2833, 0.0
    %2846 = vst.msk [vmem:[#allocation3 + $0x2] sm:$0xff] %vm1107, %v2834
    %2847 = vst.msk [vmem:[#allocation3 + $0xa] sm:$0xff] %vm1107, %v2835
    %2848 = vst.msk [vmem:[#allocation3 + $0x12] sm:$0xff] %vm1107, %v2836
    %2849 = vst.msk [vmem:[#allocation3 + $0x1a] sm:$0xff] %vm1107, %v2837
    %2850 = vst.msk [vmem:[#allocation3 + $0x22] sm:$0xff] %vm1107, %v2838
    %2851 = vst.msk [vmem:[#allocation3 + $0x2a] sm:$0xff] %vm1107, %v2839
    %2852 = vst.msk [vmem:[#allocation3 + $0x32] sm:$0xff] %vm1107, %v2840
    %2853 = vst.msk [vmem:[#allocation3 + $0x3a] sm:$0xff] %vm1107, %v2841
    %2854 = vst.msk [vmem:[#allocation3 + $0x42] sm:$0xff] %vm1107, %v2842
    %2855 = vst.msk [vmem:[#allocation3 + $0x4a] sm:$0xff] %vm1107, %v2843
    %2856 = vst.msk [vmem:[#allocation3 + $0x52] sm:$0xff] %vm1107, %v2844
    %2857 = vst.msk [vmem:[#allocation3 + $0x5a] sm:$0x3] %vm1119, %v2845
    %2858 = vst.msk [vmem:[#allocation3] sm:$0x3] %vm1119, %v2845
    %2859 = vst.msk [vmem:[#allocation3 + $0x5c] sm:$0x3] %vm1119, %v2834
    %v2860 = vld [vmem:[#allocation3] ss:$2 sm:$0xff]
    %v2861 = vld [vmem:[%s1124] ss:$2 sm:$0xff]
    %v2862 = vld [vmem:[%s1126] ss:$2 sm:$0xff]
    %v2863 = vld [vmem:[%s1128] ss:$2 sm:$0xff]
    %v2864 = vld [vmem:[%s1130] ss:$2 sm:$0xff]
    %v2865 = vld [vmem:[%s1132] ss:$2 sm:$0x1f]
    %v2866 = vld [vmem:[%s3] sm:$0xff]
    %v2867 = vld [vmem:[%s3 + $0x8] sm:$0xff]
    %v2868 = vld [vmem:[%s1136] ss:$2 sm:$0xff]
    %v2869 = vld [vmem:[%s1138] ss:$2 sm:$0xff]
    %v2870 = vld [vmem:[%s1140] ss:$2 sm:$0xff]
    %v2871 = vld [vmem:[%s1142] ss:$2 sm:$0xff]
    %v2872 = vld [vmem:[%s1144] ss:$2 sm:$0xff]
    %v2873 = vld [vmem:[%s1146] ss:$2 sm:$0x1f]
    %v2874 = vld [vmem:[%s1148] sm:$0xff]
    %v2875 = vld [vmem:[%s1148 + $0x8] sm:$0xff]
    %v2877 = vsel %vm1107, %v2868, 0
    %v2880 = vsel %vm1107, %v2869, 0
    %v2883 = vsel %vm1107, %v2870, 0
    %v2886 = vsel %vm1107, %v2871, 0
    %v2889 = vsel %vm1107, %v2872, 0
    %v2892 = vsel %vm1107, %v2873, 0
    %2894 = vmatpush.msra.mxu0 0.0
    %2895 = vmatpush.msra.mxu0 0.0
    %2896 = vmatpush.msra.mxu0 0.0
    %2897 = vmatpush.msra.mxu0 0.0
    %2898 = vmatpush.msra.mxu0 0.0
    %2899 = vmatpush.msra.mxu0 0.0
    %2900 = vmatpush.msra.mxu0 0.0
    %2901 = vmatpush.msra.mxu0 0.0
    %2902 = vmatpush.msra.mxu0 0.0
    %2903 = vmatpush.msra.mxu0 0.0
    %2904 = vmatpush.msra.mxu0 0.0
    %2905 = vmatpush.msra.mxu0 0.0
    %2906 = vmatpush.msra.mxu0 0.0
    %2907 = vmatpush.msra.mxu0 0.0
    %2908 = vmatpush.msra.mxu0 %v2875
    %2909 = vmatpush.msra.mxu0 %v2874
    %2910 = vmatmul.f32.gmra.mxu0 %v2877
    %v2911 = vpop.f32.mrf.mxu0
    %v2912 = vadd.f32 0.0, %v2911
    %2913 = vmatmul.f32.gmra.mxu0 %v2880
    %v2914 = vpop.f32.mrf.mxu0
    %v2915 = vadd.f32 0.0, %v2914
    %2916 = vmatmul.f32.gmra.mxu0 %v2883
    %v2917 = vpop.f32.mrf.mxu0
    %v2918 = vadd.f32 0.0, %v2917
    %2919 = vmatmul.f32.gmra.mxu0 %v2886
    %v2920 = vpop.f32.mrf.mxu0
    %v2921 = vadd.f32 0.0, %v2920
    %2922 = vmatmul.f32.gmra.mxu0 %v2889
    %v2923 = vpop.f32.mrf.mxu0
    %v2924 = vadd.f32 0.0, %v2923
    %2925 = vmatmul.f32.gmra.mxu0 %v2892
    %v2926 = vpop.f32.mrf.mxu0
    %v2927 = vadd.f32 0.0, %v2926
    %2928 = vdwg.mxu0
    %v2930 = vsel %vm1107, %v2860, 0
    %v2933 = vsel %vm1107, %v2861, 0
    %v2936 = vsel %vm1107, %v2862, 0
    %v2939 = vsel %vm1107, %v2863, 0
    %v2942 = vsel %vm1107, %v2864, 0
    %v2945 = vsel %vm1107, %v2865, 0
    %2947 = vmatpush.msra.mxu0 0.0
    %2948 = vmatpush.msra.mxu0 0.0
    %2949 = vmatpush.msra.mxu0 0.0
    %2950 = vmatpush.msra.mxu0 0.0
    %2951 = vmatpush.msra.mxu0 0.0
    %2952 = vmatpush.msra.mxu0 0.0
    %2953 = vmatpush.msra.mxu0 0.0
    %2954 = vmatpush.msra.mxu0 0.0
    %2955 = vmatpush.msra.mxu0 0.0
    %2956 = vmatpush.msra.mxu0 0.0
    %2957 = vmatpush.msra.mxu0 0.0
    %2958 = vmatpush.msra.mxu0 0.0
    %2959 = vmatpush.msra.mxu0 0.0
    %2960 = vmatpush.msra.mxu0 0.0
    %2961 = vmatpush.msra.mxu0 %v2867
    %2962 = vmatpush.msra.mxu0 %v2866
    %2963 = vmatmul.f32.gmra.mxu0 %v2930
    %v2964 = vpop.f32.mrf.mxu0
    %v2965 = vadd.f32 %v2912, %v2964
    %2966 = vmatmul.f32.gmra.mxu0 %v2933
    %v2967 = vpop.f32.mrf.mxu0
    %v2968 = vadd.f32 %v2915, %v2967
    %2969 = vmatmul.f32.gmra.mxu0 %v2936
    %v2970 = vpop.f32.mrf.mxu0
    %v2971 = vadd.f32 %v2918, %v2970
    %2972 = vmatmul.f32.gmra.mxu0 %v2939
    %v2973 = vpop.f32.mrf.mxu0
    %v2974 = vadd.f32 %v2921, %v2973
    %2975 = vmatmul.f32.gmra.mxu0 %v2942
    %v2976 = vpop.f32.mrf.mxu0
    %v2977 = vadd.f32 %v2924, %v2976
    %2978 = vmatmul.f32.gmra.mxu0 %v2945
    %v2979 = vpop.f32.mrf.mxu0
    %v2980 = vadd.f32 %v2927, %v2979
    %2981 = vdwg.mxu0
    %v2982 = vld [vmem:[%s1257] ss:$2 sm:$0xff]
    %v2983 = vld [vmem:[%s1259] ss:$2 sm:$0xff]
    %v2984 = vld [vmem:[%s1261] ss:$2 sm:$0xff]
    %v2985 = vld [vmem:[%s1263] ss:$2 sm:$0xff]
    %v2986 = vld [vmem:[%s1265] ss:$2 sm:$0xff]
    %v2987 = vld [vmem:[%s1267] ss:$2 sm:$0x1f]
    %v2988 = vld [vmem:[%s1269] sm:$0xff]
    %v2989 = vld [vmem:[%s1269 + $0x8] sm:$0xff]
    %v2991 = vsel %vm1107, %v2982, 0
    %v2994 = vsel %vm1107, %v2983, 0
    %v2997 = vsel %vm1107, %v2984, 0
    %v3000 = vsel %vm1107, %v2985, 0
    %v3003 = vsel %vm1107, %v2986, 0
    %v3006 = vsel %vm1107, %v2987, 0
    %3008 = vmatpush.msra.mxu0 0.0
    %3009 = vmatpush.msra.mxu0 0.0
    %3010 = vmatpush.msra.mxu0 0.0
    %3011 = vmatpush.msra.mxu0 0.0
    %3012 = vmatpush.msra.mxu0 0.0
    %3013 = vmatpush.msra.mxu0 0.0
    %3014 = vmatpush.msra.mxu0 0.0
    %3015 = vmatpush.msra.mxu0 0.0
    %3016 = vmatpush.msra.mxu0 0.0
    %3017 = vmatpush.msra.mxu0 0.0
    %3018 = vmatpush.msra.mxu0 0.0
    %3019 = vmatpush.msra.mxu0 0.0
    %3020 = vmatpush.msra.mxu0 0.0
    %3021 = vmatpush.msra.mxu0 0.0
    %3022 = vmatpush.msra.mxu0 %v2989
    %3023 = vmatpush.msra.mxu0 %v2988
    %3024 = vmatmul.f32.gmra.mxu0 %v2991
    %v3025 = vpop.f32.mrf.mxu0
    %v3026 = vadd.f32 0.0, %v3025
    %3027 = vmatmul.f32.gmra.mxu0 %v2994
    %v3028 = vpop.f32.mrf.mxu0
    %v3029 = vadd.f32 0.0, %v3028
    %3030 = vmatmul.f32.gmra.mxu0 %v2997
    %v3031 = vpop.f32.mrf.mxu0
    %v3032 = vadd.f32 0.0, %v3031
    %3033 = vmatmul.f32.gmra.mxu0 %v3000
    %v3034 = vpop.f32.mrf.mxu0
    %v3035 = vadd.f32 0.0, %v3034
    %3036 = vmatmul.f32.gmra.mxu0 %v3003
    %v3037 = vpop.f32.mrf.mxu0
    %v3038 = vadd.f32 0.0, %v3037
    %3039 = vmatmul.f32.gmra.mxu0 %v3006
    %v3040 = vpop.f32.mrf.mxu0
    %v3041 = vadd.f32 0.0, %v3040
    %3042 = vdwg.mxu0
    %v3043 = vadd.f32 %v2965, %v3026
    %v3044 = vadd.f32 %v2968, %v3029
    %v3045 = vadd.f32 %v2971, %v3032
    %v3046 = vadd.f32 %v2974, %v3035
    %v3047 = vadd.f32 %v2977, %v3038
    %v3048 = vadd.f32 %v2980, %v3041
    %v3049 = vld [vmem:[%s1331] ss:$2 sm:$0xff]
    %v3050 = vld [vmem:[%s1333] ss:$2 sm:$0xff]
    %v3051 = vld [vmem:[%s1335] ss:$2 sm:$0xff]
    %v3052 = vld [vmem:[%s1337] ss:$2 sm:$0xff]
    %v3053 = vld [vmem:[%s1339] ss:$2 sm:$0xff]
    %v3054 = vld [vmem:[%s1341] ss:$2 sm:$0x1f]
    %v3055 = vld [vmem:[%s1343] sm:$0xff]
    %v3056 = vld [vmem:[%s1343 + $0x8] sm:$0xff]
    %v3058 = vsel %vm1107, %v3049, 0
    %v3061 = vsel %vm1107, %v3050, 0
    %v3064 = vsel %vm1107, %v3051, 0
    %v3067 = vsel %vm1107, %v3052, 0
    %v3070 = vsel %vm1107, %v3053, 0
    %v3073 = vsel %vm1107, %v3054, 0
    %3075 = vmatpush.msra.mxu0 0.0
    %3076 = vmatpush.msra.mxu0 0.0
    %3077 = vmatpush.msra.mxu0 0.0
    %3078 = vmatpush.msra.mxu0 0.0
    %3079 = vmatpush.msra.mxu0 0.0
    %3080 = vmatpush.msra.mxu0 0.0
    %3081 = vmatpush.msra.mxu0 0.0
    %3082 = vmatpush.msra.mxu0 0.0
    %3083 = vmatpush.msra.mxu0 0.0
    %3084 = vmatpush.msra.mxu0 0.0
    %3085 = vmatpush.msra.mxu0 0.0
    %3086 = vmatpush.msra.mxu0 0.0
    %3087 = vmatpush.msra.mxu0 0.0
    %3088 = vmatpush.msra.mxu0 0.0
    %3089 = vmatpush.msra.mxu0 %v3056
    %3090 = vmatpush.msra.mxu0 %v3055
    %3091 = vmatmul.f32.gmra.mxu0 %v3058
    %v3092 = vpop.f32.mrf.mxu0
    %v3093 = vadd.f32 0.0, %v3092
    %3094 = vmatmul.f32.gmra.mxu0 %v3061
    %v3095 = vpop.f32.mrf.mxu0
    %v3096 = vadd.f32 0.0, %v3095
    %3097 = vmatmul.f32.gmra.mxu0 %v3064
    %v3098 = vpop.f32.mrf.mxu0
    %v3099 = vadd.f32 0.0, %v3098
    %3100 = vmatmul.f32.gmra.mxu0 %v3067
    %v3101 = vpop.f32.mrf.mxu0
    %v3102 = vadd.f32 0.0, %v3101
    %3103 = vmatmul.f32.gmra.mxu0 %v3070
    %v3104 = vpop.f32.mrf.mxu0
    %v3105 = vadd.f32 0.0, %v3104
    %3106 = vmatmul.f32.gmra.mxu0 %v3073
    %v3107 = vpop.f32.mrf.mxu0
    %v3108 = vadd.f32 0.0, %v3107
    %3109 = vdwg.mxu0
    %v3110 = vadd.f32 %v3043, %v3093
    %v3111 = vadd.f32 %v3044, %v3096
    %v3112 = vadd.f32 %v3045, %v3099
    %v3113 = vadd.f32 %v3046, %v3102
    %v3114 = vadd.f32 %v3047, %v3105
    %v3115 = vadd.f32 %v3048, %v3108
    %v3116 = vld [vmem:[%s1405] ss:$2 sm:$0xff]
    %v3117 = vld [vmem:[%s1407] ss:$2 sm:$0xff]
    %v3118 = vld [vmem:[%s1409] ss:$2 sm:$0xff]
    %v3119 = vld [vmem:[%s1411] ss:$2 sm:$0xff]
    %v3120 = vld [vmem:[%s1413] ss:$2 sm:$0xff]
    %v3121 = vld [vmem:[%s1415] ss:$2 sm:$0x1f]
    %v3122 = vld [vmem:[%s1417] sm:$0xff]
    %v3123 = vld [vmem:[%s1417 + $0x8] sm:$0xff]
    %v3125 = vsel %vm1107, %v3116, 0
    %v3128 = vsel %vm1107, %v3117, 0
    %v3131 = vsel %vm1107, %v3118, 0
    %v3134 = vsel %vm1107, %v3119, 0
    %v3137 = vsel %vm1107, %v3120, 0
    %v3140 = vsel %vm1107, %v3121, 0
    %3142 = vmatpush.msra.mxu0 0.0
    %3143 = vmatpush.msra.mxu0 0.0
    %3144 = vmatpush.msra.mxu0 0.0
    %3145 = vmatpush.msra.mxu0 0.0
    %3146 = vmatpush.msra.mxu0 0.0
    %3147 = vmatpush.msra.mxu0 0.0
    %3148 = vmatpush.msra.mxu0 0.0
    %3149 = vmatpush.msra.mxu0 0.0
    %3150 = vmatpush.msra.mxu0 0.0
    %3151 = vmatpush.msra.mxu0 0.0
    %3152 = vmatpush.msra.mxu0 0.0
    %3153 = vmatpush.msra.mxu0 0.0
    %3154 = vmatpush.msra.mxu0 0.0
    %3155 = vmatpush.msra.mxu0 0.0
    %3156 = vmatpush.msra.mxu0 %v3123
    %3157 = vmatpush.msra.mxu0 %v3122
    %3158 = vmatmul.f32.gmra.mxu0 %v3125
    %v3159 = vpop.f32.mrf.mxu0
    %v3160 = vadd.f32 0.0, %v3159
    %3161 = vmatmul.f32.gmra.mxu0 %v3128
    %v3162 = vpop.f32.mrf.mxu0
    %v3163 = vadd.f32 0.0, %v3162
    %3164 = vmatmul.f32.gmra.mxu0 %v3131
    %v3165 = vpop.f32.mrf.mxu0
    %v3166 = vadd.f32 0.0, %v3165
    %3167 = vmatmul.f32.gmra.mxu0 %v3134
    %v3168 = vpop.f32.mrf.mxu0
    %v3169 = vadd.f32 0.0, %v3168
    %3170 = vmatmul.f32.gmra.mxu0 %v3137
    %v3171 = vpop.f32.mrf.mxu0
    %v3172 = vadd.f32 0.0, %v3171
    %3173 = vmatmul.f32.gmra.mxu0 %v3140
    %v3174 = vpop.f32.mrf.mxu0
    %v3175 = vadd.f32 0.0, %v3174
    %3176 = vdwg.mxu0
    %v3177 = vadd.f32 %v3110, %v3160
    %v3178 = vadd.f32 %v3111, %v3163
    %v3179 = vadd.f32 %v3112, %v3166
    %v3180 = vadd.f32 %v3113, %v3169
    %v3181 = vadd.f32 %v3114, %v3172
    %v3182 = vadd.f32 %v3115, %v3175
    %v3183 = vld [vmem:[%s4] sm:$0x1]
    %v3185 = vperm.slane %v3183, 0
    %v3187 = vadd.f32 %v3177, %v3185
    %v3188 = vadd.f32 %v3178, %v3185
    %v3189 = vadd.f32 %v3179, %v3185
    %v3190 = vadd.f32 %v3180, %v3185
    %v3191 = vadd.f32 %v3181, %v3185
    %v3192 = vadd.f32 %v3182, %v3185
    %v3193 = vmax.f32 %v3187, 0.0
    %v3194 = vmax.f32 %v3188, 0.0
    %v3195 = vmax.f32 %v3189, 0.0
    %v3196 = vmax.f32 %v3190, 0.0
    %v3197 = vmax.f32 %v3191, 0.0
    %v3198 = vmax.f32 %v3192, 0.0
    %3199 = vst.msk [vmem:[#allocation4 + $0x2] sm:$0xff] %vm1495, %v3193
    %3200 = vst.msk [vmem:[#allocation4 + $0xa] sm:$0xff] %vm1495, %v3194
    %3201 = vst.msk [vmem:[#allocation4 + $0x12] sm:$0xff] %vm1495, %v3195
    %3202 = vst.msk [vmem:[#allocation4 + $0x1a] sm:$0xff] %vm1495, %v3196
    %3203 = vst.msk [vmem:[#allocation4 + $0x22] sm:$0xff] %vm1495, %v3197
    %3204 = vst.msk [vmem:[#allocation4 + $0x2a] sm:$0x1f] %vm1501, %v3198
    %3205 = vst.msk [vmem:[#allocation4 - $0x3] sm:$0x18] %vm1503, %v3198
    %3206 = vst.msk [vmem:[#allocation4 + $0x2f] sm:$0x3] %vm1505, %v3193
    %v3207 = vld [vmem:[#allocation4] sm:$0xff]
    %v3208 = vld [vmem:[#allocation4 + $0x8] sm:$0xff]
    %v3209 = vld [vmem:[#allocation4 + $0x10] sm:$0xff]
    %v3210 = vld [vmem:[#allocation4 + $0x18] sm:$0xff]
    %v3211 = vld [vmem:[#allocation4 + $0x20] sm:$0xff]
    %v3212 = vld [vmem:[#allocation4 + $0x28] sm:$0x1f]
    %v3213 = vld [vmem:[%s5] sm:$0xff]
    %v3214 = vld [vmem:[%s5 + $0x8] sm:$0xff]
    %v3215 = vld [vmem:[%s5 + $0x10] sm:$0xff]
    %v3216 = vld [vmem:[%s5 + $0x18] sm:$0xff]
    %v3217 = vld [vmem:[#allocation4 + $0x1] sm:$0xff]
    %v3218 = vld [vmem:[#allocation4 + $0x9] sm:$0xff]
    %v3219 = vld [vmem:[#allocation4 + $0x11] sm:$0xff]
    %v3220 = vld [vmem:[#allocation4 + $0x19] sm:$0xff]
    %v3221 = vld [vmem:[#allocation4 + $0x21] sm:$0xff]
    %v3222 = vld [vmem:[#allocation4 + $0x29] sm:$0x1f]
    %v3223 = vld [vmem:[%s1523] sm:$0xff]
    %v3224 = vld [vmem:[%s1523 + $0x8] sm:$0xff]
    %v3225 = vld [vmem:[%s1523 + $0x10] sm:$0xff]
    %v3226 = vld [vmem:[%s1523 + $0x18] sm:$0xff]
    %v3228 = vsel %vm1495, %v3217, 0
    %v3231 = vsel %vm1495, %v3218, 0
    %v3234 = vsel %vm1495, %v3219, 0
    %v3237 = vsel %vm1495, %v3220, 0
    %v3240 = vsel %vm1495, %v3221, 0
    %v3243 = vsel %vm1495, %v3222, 0
    %3245 = vmatpush.msra.mxu0 0.0
    %3246 = vmatpush.msra.mxu0 0.0
    %3247 = vmatpush.msra.mxu0 0.0
    %3248 = vmatpush.msra.mxu0 0.0
    %3249 = vmatpush.msra.mxu0 0.0
    %3250 = vmatpush.msra.mxu0 0.0
    %3251 = vmatpush.msra.mxu0 0.0
    %3252 = vmatpush.msra.mxu0 0.0
    %3253 = vmatpush.msra.mxu0 0.0
    %3254 = vmatpush.msra.mxu0 0.0
    %3255 = vmatpush.msra.mxu0 0.0
    %3256 = vmatpush.msra.mxu0 0.0
    %3257 = vmatpush.msra.mxu0 %v3226
    %3258 = vmatpush.msra.mxu0 %v3225
    %3259 = vmatpush.msra.mxu0 %v3224
    %3260 = vmatpush.msra.mxu0 %v3223
    %3261 = vmatmul.f32.gmra.mxu0 %v3228
    %v3262 = vpop.f32.mrf.mxu0
    %v3263 = vadd.f32 0.0, %v3262
    %3264 = vmatmul.f32.gmra.mxu0 %v3231
    %v3265 = vpop.f32.mrf.mxu0
    %v3266 = vadd.f32 0.0, %v3265
    %3267 = vmatmul.f32.gmra.mxu0 %v3234
    %v3268 = vpop.f32.mrf.mxu0
    %v3269 = vadd.f32 0.0, %v3268
    %3270 = vmatmul.f32.gmra.mxu0 %v3237
    %v3271 = vpop.f32.mrf.mxu0
    %v3272 = vadd.f32 0.0, %v3271
    %3273 = vmatmul.f32.gmra.mxu0 %v3240
    %v3274 = vpop.f32.mrf.mxu0
    %v3275 = vadd.f32 0.0, %v3274
    %3276 = vmatmul.f32.gmra.mxu0 %v3243
    %v3277 = vpop.f32.mrf.mxu0
    %v3278 = vadd.f32 0.0, %v3277
    %3279 = vdwg.mxu0
    %v3281 = vsel %vm1495, %v3207, 0
    %v3284 = vsel %vm1495, %v3208, 0
    %v3287 = vsel %vm1495, %v3209, 0
    %v3290 = vsel %vm1495, %v3210, 0
    %v3293 = vsel %vm1495, %v3211, 0
    %v3296 = vsel %vm1495, %v3212, 0
    %3298 = vmatpush.msra.mxu0 0.0
    %3299 = vmatpush.msra.mxu0 0.0
    %3300 = vmatpush.msra.mxu0 0.0
    %3301 = vmatpush.msra.mxu0 0.0
    %3302 = vmatpush.msra.mxu0 0.0
    %3303 = vmatpush.msra.mxu0 0.0
    %3304 = vmatpush.msra.mxu0 0.0
    %3305 = vmatpush.msra.mxu0 0.0
    %3306 = vmatpush.msra.mxu0 0.0
    %3307 = vmatpush.msra.mxu0 0.0
    %3308 = vmatpush.msra.mxu0 0.0
    %3309 = vmatpush.msra.mxu0 0.0
    %3310 = vmatpush.msra.mxu0 %v3216
    %3311 = vmatpush.msra.mxu0 %v3215
    %3312 = vmatpush.msra.mxu0 %v3214
    %3313 = vmatpush.msra.mxu0 %v3213
    %3314 = vmatmul.f32.gmra.mxu0 %v3281
    %v3315 = vpop.f32.mrf.mxu0
    %v3316 = vadd.f32 %v3263, %v3315
    %3317 = vmatmul.f32.gmra.mxu0 %v3284
    %v3318 = vpop.f32.mrf.mxu0
    %v3319 = vadd.f32 %v3266, %v3318
    %3320 = vmatmul.f32.gmra.mxu0 %v3287
    %v3321 = vpop.f32.mrf.mxu0
    %v3322 = vadd.f32 %v3269, %v3321
    %3323 = vmatmul.f32.gmra.mxu0 %v3290
    %v3324 = vpop.f32.mrf.mxu0
    %v3325 = vadd.f32 %v3272, %v3324
    %3326 = vmatmul.f32.gmra.mxu0 %v3293
    %v3327 = vpop.f32.mrf.mxu0
    %v3328 = vadd.f32 %v3275, %v3327
    %3329 = vmatmul.f32.gmra.mxu0 %v3296
    %v3330 = vpop.f32.mrf.mxu0
    %v3331 = vadd.f32 %v3278, %v3330
    %3332 = vdwg.mxu0
    %v3333 = vld [vmem:[#allocation4 + $0x2] sm:$0xff]
    %v3334 = vld [vmem:[#allocation4 + $0xa] sm:$0xff]
    %v3335 = vld [vmem:[#allocation4 + $0x12] sm:$0xff]
    %v3336 = vld [vmem:[#allocation4 + $0x1a] sm:$0xff]
    %v3337 = vld [vmem:[#allocation4 + $0x22] sm:$0xff]
    %v3338 = vld [vmem:[#allocation4 + $0x2a] sm:$0x1f]
    %v3339 = vld [vmem:[%s1640] sm:$0xff]
    %v3340 = vld [vmem:[%s1640 + $0x8] sm:$0xff]
    %v3341 = vld [vmem:[%s1640 + $0x10] sm:$0xff]
    %v3342 = vld [vmem:[%s1640 + $0x18] sm:$0xff]
    %v3344 = vsel %vm1495, %v3333, 0
    %v3347 = vsel %vm1495, %v3334, 0
    %v3350 = vsel %vm1495, %v3335, 0
    %v3353 = vsel %vm1495, %v3336, 0
    %v3356 = vsel %vm1495, %v3337, 0
    %v3359 = vsel %vm1495, %v3338, 0
    %3361 = vmatpush.msra.mxu0 0.0
    %3362 = vmatpush.msra.mxu0 0.0
    %3363 = vmatpush.msra.mxu0 0.0
    %3364 = vmatpush.msra.mxu0 0.0
    %3365 = vmatpush.msra.mxu0 0.0
    %3366 = vmatpush.msra.mxu0 0.0
    %3367 = vmatpush.msra.mxu0 0.0
    %3368 = vmatpush.msra.mxu0 0.0
    %3369 = vmatpush.msra.mxu0 0.0
    %3370 = vmatpush.msra.mxu0 0.0
    %3371 = vmatpush.msra.mxu0 0.0
    %3372 = vmatpush.msra.mxu0 0.0
    %3373 = vmatpush.msra.mxu0 %v3342
    %3374 = vmatpush.msra.mxu0 %v3341
    %3375 = vmatpush.msra.mxu0 %v3340
    %3376 = vmatpush.msra.mxu0 %v3339
    %3377 = vmatmul.f32.gmra.mxu0 %v3344
    %v3378 = vpop.f32.mrf.mxu0
    %v3379 = vadd.f32 0.0, %v3378
    %3380 = vmatmul.f32.gmra.mxu0 %v3347
    %v3381 = vpop.f32.mrf.mxu0
    %v3382 = vadd.f32 0.0, %v3381
    %3383 = vmatmul.f32.gmra.mxu0 %v3350
    %v3384 = vpop.f32.mrf.mxu0
    %v3385 = vadd.f32 0.0, %v3384
    %3386 = vmatmul.f32.gmra.mxu0 %v3353
    %v3387 = vpop.f32.mrf.mxu0
    %v3388 = vadd.f32 0.0, %v3387
    %3389 = vmatmul.f32.gmra.mxu0 %v3356
    %v3390 = vpop.f32.mrf.mxu0
    %v3391 = vadd.f32 0.0, %v3390
    %3392 = vmatmul.f32.gmra.mxu0 %v3359
    %v3393 = vpop.f32.mrf.mxu0
    %v3394 = vadd.f32 0.0, %v3393
    %3395 = vdwg.mxu0
    %v3396 = vadd.f32 %v3316, %v3379
    %v3397 = vadd.f32 %v3319, %v3382
    %v3398 = vadd.f32 %v3322, %v3385
    %v3399 = vadd.f32 %v3325, %v3388
    %v3400 = vadd.f32 %v3328, %v3391
    %v3401 = vadd.f32 %v3331, %v3394
    %v3402 = vld [vmem:[#allocation4 + $0x3] sm:$0xff]
    %v3403 = vld [vmem:[#allocation4 + $0xb] sm:$0xff]
    %v3404 = vld [vmem:[#allocation4 + $0x13] sm:$0xff]
    %v3405 = vld [vmem:[#allocation4 + $0x1b] sm:$0xff]
    %v3406 = vld [vmem:[#allocation4 + $0x23] sm:$0xff]
    %v3407 = vld [vmem:[#allocation4 + $0x2b] sm:$0x1f]
    %v3408 = vld [vmem:[%s1710] sm:$0xff]
    %v3409 = vld [vmem:[%s1710 + $0x8] sm:$0xff]
    %v3410 = vld [vmem:[%s1710 + $0x10] sm:$0xff]
    %v3411 = vld [vmem:[%s1710 + $0x18] sm:$0xff]
    %v3413 = vsel %vm1495, %v3402, 0
    %v3416 = vsel %vm1495, %v3403, 0
    %v3419 = vsel %vm1495, %v3404, 0
    %v3422 = vsel %vm1495, %v3405, 0
    %v3425 = vsel %vm1495, %v3406, 0
    %v3428 = vsel %vm1495, %v3407, 0
    %3430 = vmatpush.msra.mxu0 0.0
    %3431 = vmatpush.msra.mxu0 0.0
    %3432 = vmatpush.msra.mxu0 0.0
    %3433 = vmatpush.msra.mxu0 0.0
    %3434 = vmatpush.msra.mxu0 0.0
    %3435 = vmatpush.msra.mxu0 0.0
    %3436 = vmatpush.msra.mxu0 0.0
    %3437 = vmatpush.msra.mxu0 0.0
    %3438 = vmatpush.msra.mxu0 0.0
    %3439 = vmatpush.msra.mxu0 0.0
    %3440 = vmatpush.msra.mxu0 0.0
    %3441 = vmatpush.msra.mxu0 0.0
    %3442 = vmatpush.msra.mxu0 %v3411
    %3443 = vmatpush.msra.mxu0 %v3410
    %3444 = vmatpush.msra.mxu0 %v3409
    %3445 = vmatpush.msra.mxu0 %v3408
    %3446 = vmatmul.f32.gmra.mxu0 %v3413
    %v3447 = vpop.f32.mrf.mxu0
    %v3448 = vadd.f32 0.0, %v3447
    %3449 = vmatmul.f32.gmra.mxu0 %v3416
    %v3450 = vpop.f32.mrf.mxu0
    %v3451 = vadd.f32 0.0, %v3450
    %3452 = vmatmul.f32.gmra.mxu0 %v3419
    %v3453 = vpop.f32.mrf.mxu0
    %v3454 = vadd.f32 0.0, %v3453
    %3455 = vmatmul.f32.gmra.mxu0 %v3422
    %v3456 = vpop.f32.mrf.mxu0
    %v3457 = vadd.f32 0.0, %v3456
    %3458 = vmatmul.f32.gmra.mxu0 %v3425
    %v3459 = vpop.f32.mrf.mxu0
    %v3460 = vadd.f32 0.0, %v3459
    %3461 = vmatmul.f32.gmra.mxu0 %v3428
    %v3462 = vpop.f32.mrf.mxu0
    %v3463 = vadd.f32 0.0, %v3462
    %3464 = vdwg.mxu0
    %v3465 = vadd.f32 %v3396, %v3448
    %v3466 = vadd.f32 %v3397, %v3451
    %v3467 = vadd.f32 %v3398, %v3454
    %v3468 = vadd.f32 %v3399, %v3457
    %v3469 = vadd.f32 %v3400, %v3460
    %v3470 = vadd.f32 %v3401, %v3463
    %v3471 = vld [vmem:[#allocation4 + $0x4] sm:$0xff]
    %v3472 = vld [vmem:[#allocation4 + $0xc] sm:$0xff]
    %v3473 = vld [vmem:[#allocation4 + $0x14] sm:$0xff]
    %v3474 = vld [vmem:[#allocation4 + $0x1c] sm:$0xff]
    %v3475 = vld [vmem:[#allocation4 + $0x24] sm:$0xff]
    %v3476 = vld [vmem:[#allocation4 + $0x2c] sm:$0x1f]
    %v3477 = vld [vmem:[%s1780] sm:$0xff]
    %v3478 = vld [vmem:[%s1780 + $0x8] sm:$0xff]
    %v3479 = vld [vmem:[%s1780 + $0x10] sm:$0xff]
    %v3480 = vld [vmem:[%s1780 + $0x18] sm:$0xff]
    %v3482 = vsel %vm1495, %v3471, 0
    %v3485 = vsel %vm1495, %v3472, 0
    %v3488 = vsel %vm1495, %v3473, 0
    %v3491 = vsel %vm1495, %v3474, 0
    %v3494 = vsel %vm1495, %v3475, 0
    %v3497 = vsel %vm1495, %v3476, 0
    %3499 = vmatpush.msra.mxu0 0.0
    %3500 = vmatpush.msra.mxu0 0.0
    %3501 = vmatpush.msra.mxu0 0.0
    %3502 = vmatpush.msra.mxu0 0.0
    %3503 = vmatpush.msra.mxu0 0.0
    %3504 = vmatpush.msra.mxu0 0.0
    %3505 = vmatpush.msra.mxu0 0.0
    %3506 = vmatpush.msra.mxu0 0.0
    %3507 = vmatpush.msra.mxu0 0.0
    %3508 = vmatpush.msra.mxu0 0.0
    %3509 = vmatpush.msra.mxu0 0.0
    %3510 = vmatpush.msra.mxu0 0.0
    %3511 = vmatpush.msra.mxu0 %v3480
    %3512 = vmatpush.msra.mxu0 %v3479
    %3513 = vmatpush.msra.mxu0 %v3478
    %3514 = vmatpush.msra.mxu0 %v3477
    %3515 = vmatmul.f32.gmra.mxu0 %v3482
    %v3516 = vpop.f32.mrf.mxu0
    %v3517 = vadd.f32 0.0, %v3516
    %3518 = vmatmul.f32.gmra.mxu0 %v3485
    %v3519 = vpop.f32.mrf.mxu0
    %v3520 = vadd.f32 0.0, %v3519
    %3521 = vmatmul.f32.gmra.mxu0 %v3488
    %v3522 = vpop.f32.mrf.mxu0
    %v3523 = vadd.f32 0.0, %v3522
    %3524 = vmatmul.f32.gmra.mxu0 %v3491
    %v3525 = vpop.f32.mrf.mxu0
    %v3526 = vadd.f32 0.0, %v3525
    %3527 = vmatmul.f32.gmra.mxu0 %v3494
    %v3528 = vpop.f32.mrf.mxu0
    %v3529 = vadd.f32 0.0, %v3528
    %3530 = vmatmul.f32.gmra.mxu0 %v3497
    %v3531 = vpop.f32.mrf.mxu0
    %v3532 = vadd.f32 0.0, %v3531
    %3533 = vdwg.mxu0
    %v3534 = vadd.f32 %v3465, %v3517
    %v3535 = vadd.f32 %v3466, %v3520
    %v3536 = vadd.f32 %v3467, %v3523
    %v3537 = vadd.f32 %v3468, %v3526
    %v3538 = vadd.f32 %v3469, %v3529
    %v3539 = vadd.f32 %v3470, %v3532
    %v3540 = vld [vmem:[%s6] sm:$0x1]
    %v3542 = vperm.slane %v3540, 0
    %v3544 = vadd.f32 %v3534, %v3542
    %v3545 = vadd.f32 %v3535, %v3542
    %v3546 = vadd.f32 %v3536, %v3542
    %v3547 = vadd.f32 %v3537, %v3542
    %v3548 = vadd.f32 %v3538, %v3542
    %v3549 = vadd.f32 %v3539, %v3542
    %v3550 = vmax.f32 %v3544, 0.0
    %v3551 = vmax.f32 %v3545, 0.0
    %v3552 = vmax.f32 %v3546, 0.0
    %v3553 = vmax.f32 %v3547, 0.0
    %v3554 = vmax.f32 %v3548, 0.0
    %v3555 = vmax.f32 %v3549, 0.0
    %3556 = vst.msk [vmem:[#allocation5 + $0x1] sm:$0x1] %vm1860, %v3550
    %v3558 = vrot.slane %v3550, 7
    %v3559 = vrot.slane %v3558, 2
    %3560 = vrot.lane.b32.xlu0 %v3559, 32
    %v3561 = vpop.permute.xlu0 %3560
    %3563 = vst.msk [vmem:[#allocation5 + $0x1] sm:$0x1] %vm1868, %v3561
    %3564 = vst.sshfl [vmem:[#allocation1] sm:$0xff pattern:$0x73625140] %v3550
    %s3565 = scalar_lea.vmem [#allocation1], 1
    %v3566 = vld [vmem:[%s3565] ss:$4 sm:$0xff]
    %3567 = vrot.lane.b32.xlu0 %v3566, 64
    %v3568 = vpop.permute.xlu0 %3567
    %3570 = vst.msk [vmem:[#allocation5 + $0x1] sm:$0x1] %vm1876, %v3568
    %3571 = vst.sshfl [vmem:[#allocation1] sm:$0xff pattern:$0x73625140] %v3550
    %s3572 = scalar_lea.vmem [#allocation1], 1
    %v3573 = vld [vmem:[%s3572] ss:$4 sm:$0xff]
    %v3574 = vrot.slane %v3573, 7
    %v3575 = vrot.slane %v3574, 2
    %3576 = vrot.lane.b32.xlu0 %v3575, 96
    %v3577 = vpop.permute.xlu0 %3576
    %3579 = vst.msk [vmem:[#allocation5 + $0x1] sm:$0x1] %vm1886, %v3577
    %3580 = vst.sshfl [vmem:[#allocation1] sm:$0xff pattern:$0x73625140] %v3550
    %s3581 = scalar_lea.vmem [#allocation1], 2
    %v3582 = vld [vmem:[%s3581] ss:$4 sm:$0xff]
    %3584 = vst.msk [vmem:[#allocation5 + $0x3] sm:$0x1] %vm1860, %v3582
    %3585 = vst.sshfl [vmem:[#allocation1] sm:$0xff pattern:$0x73625140] %v3550
    %s3586 = scalar_lea.vmem [#allocation1], 2
    %v3587 = vld [vmem:[%s3586] ss:$4 sm:$0xff]
    %v3588 = vrot.slane %v3587, 7
    %v3589 = vrot.slane %v3588, 2
    %3590 = vrot.lane.b32.xlu0 %v3589, 32
    %v3591 = vpop.permute.xlu0 %3590
    %3593 = vst.msk [vmem:[#allocation5 + $0x3] sm:$0x1] %vm1868, %v3591
    %3594 = vst.sshfl [vmem:[#allocation1] sm:$0xff pattern:$0x73625140] %v3550
    %s3595 = scalar_lea.vmem [#allocation1], 3
    %v3596 = vld [vmem:[%s3595] ss:$4 sm:$0xff]
    %3597 = vrot.lane.b32.xlu0 %v3596, 64
    %v3598 = vpop.permute.xlu0 %3597
    %3600 = vst.msk [vmem:[#allocation5 + $0x3] sm:$0x1] %vm1876, %v3598
    %3601 = vst.sshfl [vmem:[#allocation1] sm:$0xff pattern:$0x73625140] %v3550
    %s3602 = scalar_lea.vmem [#allocation1], 3
    %v3603 = vld [vmem:[%s3602] ss:$4 sm:$0xff]
    %v3604 = vrot.slane %v3603, 7
    %v3605 = vrot.slane %v3604, 2
    %3606 = vrot.lane.b32.xlu0 %v3605, 96
    %v3607 = vpop.permute.xlu0 %3606
    %3609 = vst.msk [vmem:[#allocation5 + $0x3] sm:$0x1] %vm1886, %v3607
    %3610 = vst.msk [vmem:[#allocation5 + $0x5] sm:$0x1] %vm1860, %v3551
    %v3612 = vrot.slane %v3551, 7
    %v3613 = vrot.slane %v3612, 2
    %3614 = vrot.lane.b32.xlu0 %v3613, 32
    %v3615 = vpop.permute.xlu0 %3614
    %3617 = vst.msk [vmem:[#allocation5 + $0x5] sm:$0x1] %vm1868, %v3615
    %3618 = vst.sshfl [vmem:[#allocation1] sm:$0xff pattern:$0x73625140] %v3551
    %s3619 = scalar_lea.vmem [#allocation1], 1
    %v3620 = vld [vmem:[%s3619] ss:$4 sm:$0xff]
    %3621 = vrot.lane.b32.xlu0 %v3620, 64
    %v3622 = vpop.permute.xlu0 %3621
    %3624 = vst.msk [vmem:[#allocation5 + $0x5] sm:$0x1] %vm1876, %v3622
    %3625 = vst.sshfl [vmem:[#allocation1] sm:$0xff pattern:$0x73625140] %v3551
    %s3626 = scalar_lea.vmem [#allocation1], 1
    %v3627 = vld [vmem:[%s3626] ss:$4 sm:$0xff]
    %v3628 = vrot.slane %v3627, 7
    %v3629 = vrot.slane %v3628, 2
    %3630 = vrot.lane.b32.xlu0 %v3629, 96
    %v3631 = vpop.permute.xlu0 %3630
    %3633 = vst.msk [vmem:[#allocation5 + $0x5] sm:$0x1] %vm1886, %v3631
    %3634 = vst.sshfl [vmem:[#allocation1] sm:$0xff pattern:$0x73625140] %v3551
    %s3635 = scalar_lea.vmem [#allocation1], 2
    %v3636 = vld [vmem:[%s3635] ss:$4 sm:$0xff]
    %3638 = vst.msk [vmem:[#allocation5 + $0x7] sm:$0x1] %vm1860, %v3636
    %3639 = vst.sshfl [vmem:[#allocation1] sm:$0xff pattern:$0x73625140] %v3551
    %s3640 = scalar_lea.vmem [#allocation1], 2
    %v3641 = vld [vmem:[%s3640] ss:$4 sm:$0xff]
    %v3642 = vrot.slane %v3641, 7
    %v3643 = vrot.slane %v3642, 2
    %3644 = vrot.lane.b32.xlu0 %v3643, 32
    %v3645 = vpop.permute.xlu0 %3644
    %3647 = vst.msk [vmem:[#allocation5 + $0x7] sm:$0x1] %vm1868, %v3645
    %3648 = vst.sshfl [vmem:[#allocation1] sm:$0xff pattern:$0x73625140] %v3551
    %s3649 = scalar_lea.vmem [#allocation1], 3
    %v3650 = vld [vmem:[%s3649] ss:$4 sm:$0xff]
    %3651 = vrot.lane.b32.xlu0 %v3650, 64
    %v3652 = vpop.permute.xlu0 %3651
    %3654 = vst.msk [vmem:[#allocation5 + $0x7] sm:$0x1] %vm1876, %v3652
    %3655 = vst.sshfl [vmem:[#allocation1] sm:$0xff pattern:$0x73625140] %v3551
    %s3656 = scalar_lea.vmem [#allocation1], 3
    %v3657 = vld [vmem:[%s3656] ss:$4 sm:$0xff]
    %v3658 = vrot.slane %v3657, 7
    %v3659 = vrot.slane %v3658, 2
    %3660 = vrot.lane.b32.xlu0 %v3659, 96
    %v3661 = vpop.permute.xlu0 %3660
    %3663 = vst.msk [vmem:[#allocation5 + $0x7] sm:$0x1] %vm1886, %v3661
    %3664 = vst.msk [vmem:[#allocation5 + $0x9] sm:$0x1] %vm1860, %v3552
    %v3666 = vrot.slane %v3552, 7
    %v3667 = vrot.slane %v3666, 2
    %3668 = vrot.lane.b32.xlu0 %v3667, 32
    %v3669 = vpop.permute.xlu0 %3668
    %3671 = vst.msk [vmem:[#allocation5 + $0x9] sm:$0x1] %vm1868, %v3669
    %3672 = vst.sshfl [vmem:[#allocation1] sm:$0xff pattern:$0x73625140] %v3552
    %s3673 = scalar_lea.vmem [#allocation1], 1
    %v3674 = vld [vmem:[%s3673] ss:$4 sm:$0xff]
    %3675 = vrot.lane.b32.xlu0 %v3674, 64
    %v3676 = vpop.permute.xlu0 %3675
    %3678 = vst.msk [vmem:[#allocation5 + $0x9] sm:$0x1] %vm1876, %v3676
    %3679 = vst.sshfl [vmem:[#allocation1] sm:$0xff pattern:$0x73625140] %v3552
    %s3680 = scalar_lea.vmem [#allocation1], 1
    %v3681 = vld [vmem:[%s3680] ss:$4 sm:$0xff]
    %v3682 = vrot.slane %v3681, 7
    %v3683 = vrot.slane %v3682, 2
    %3684 = vrot.lane.b32.xlu0 %v3683, 96
    %v3685 = vpop.permute.xlu0 %3684
    %3687 = vst.msk [vmem:[#allocation5 + $0x9] sm:$0x1] %vm1886, %v3685
    %3688 = vst.sshfl [vmem:[#allocation1] sm:$0xff pattern:$0x73625140] %v3552
    %s3689 = scalar_lea.vmem [#allocation1], 2
    %v3690 = vld [vmem:[%s3689] ss:$4 sm:$0xff]
    %3692 = vst.msk [vmem:[#allocation5 + $0xb] sm:$0x1] %vm1860, %v3690
    %3693 = vst.sshfl [vmem:[#allocation1] sm:$0xff pattern:$0x73625140] %v3552
    %s3694 = scalar_lea.vmem [#allocation1], 2
    %v3695 = vld [vmem:[%s3694] ss:$4 sm:$0xff]
    %v3696 = vrot.slane %v3695, 7
    %v3697 = vrot.slane %v3696, 2
    %3698 = vrot.lane.b32.xlu0 %v3697, 32
    %v3699 = vpop.permute.xlu0 %3698
    %3701 = vst.msk [vmem:[#allocation5 + $0xb] sm:$0x1] %vm1868, %v3699
    %3702 = vst.sshfl [vmem:[#allocation1] sm:$0xff pattern:$0x73625140] %v3552
    %s3703 = scalar_lea.vmem [#allocation1], 3
    %v3704 = vld [vmem:[%s3703] ss:$4 sm:$0xff]
    %3705 = vrot.lane.b32.xlu0 %v3704, 64
    %v3706 = vpop.permute.xlu0 %3705
    %3708 = vst.msk [vmem:[#allocation5 + $0xb] sm:$0x1] %vm1876, %v3706
    %3709 = vst.sshfl [vmem:[#allocation1] sm:$0xff pattern:$0x73625140] %v3552
    %s3710 = scalar_lea.vmem [#allocation1], 3
    %v3711 = vld [vmem:[%s3710] ss:$4 sm:$0xff]
    %v3712 = vrot.slane %v3711, 7
    %v3713 = vrot.slane %v3712, 2
    %3714 = vrot.lane.b32.xlu0 %v3713, 96
    %v3715 = vpop.permute.xlu0 %3714
    %3717 = vst.msk [vmem:[#allocation5 + $0xb] sm:$0x1] %vm1886, %v3715
    %3718 = vst.msk [vmem:[#allocation5 + $0xd] sm:$0x1] %vm1860, %v3553
    %v3720 = vrot.slane %v3553, 7
    %v3721 = vrot.slane %v3720, 2
    %3722 = vrot.lane.b32.xlu0 %v3721, 32
    %v3723 = vpop.permute.xlu0 %3722
    %3725 = vst.msk [vmem:[#allocation5 + $0xd] sm:$0x1] %vm1868, %v3723
    %3726 = vst.sshfl [vmem:[#allocation1] sm:$0xff pattern:$0x73625140] %v3553
    %s3727 = scalar_lea.vmem [#allocation1], 1
    %v3728 = vld [vmem:[%s3727] ss:$4 sm:$0xff]
    %3729 = vrot.lane.b32.xlu0 %v3728, 64
    %v3730 = vpop.permute.xlu0 %3729
    %3732 = vst.msk [vmem:[#allocation5 + $0xd] sm:$0x1] %vm1876, %v3730
    %3733 = vst.sshfl [vmem:[#allocation1] sm:$0xff pattern:$0x73625140] %v3553
    %s3734 = scalar_lea.vmem [#allocation1], 1
    %v3735 = vld [vmem:[%s3734] ss:$4 sm:$0xff]
    %v3736 = vrot.slane %v3735, 7
    %v3737 = vrot.slane %v3736, 2
    %3738 = vrot.lane.b32.xlu0 %v3737, 96
    %v3739 = vpop.permute.xlu0 %3738
    %3741 = vst.msk [vmem:[#allocation5 + $0xd] sm:$0x1] %vm1886, %v3739
    %3742 = vst.sshfl [vmem:[#allocation1] sm:$0xff pattern:$0x73625140] %v3553
    %s3743 = scalar_lea.vmem [#allocation1], 2
    %v3744 = vld [vmem:[%s3743] ss:$4 sm:$0xff]
    %3746 = vst.msk [vmem:[#allocation5 + $0xf] sm:$0x1] %vm1860, %v3744
    %3747 = vst.sshfl [vmem:[#allocation1] sm:$0xff pattern:$0x73625140] %v3553
    %s3748 = scalar_lea.vmem [#allocation1], 2
    %v3749 = vld [vmem:[%s3748] ss:$4 sm:$0xff]
    %v3750 = vrot.slane %v3749, 7
    %v3751 = vrot.slane %v3750, 2
    %3752 = vrot.lane.b32.xlu0 %v3751, 32
    %v3753 = vpop.permute.xlu0 %3752
    %3755 = vst.msk [vmem:[#allocation5 + $0xf] sm:$0x1] %vm1868, %v3753
    %3756 = vst.sshfl [vmem:[#allocation1] sm:$0xff pattern:$0x73625140] %v3553
    %s3757 = scalar_lea.vmem [#allocation1], 3
    %v3758 = vld [vmem:[%s3757] ss:$4 sm:$0xff]
    %3759 = vrot.lane.b32.xlu0 %v3758, 64
    %v3760 = vpop.permute.xlu0 %3759
    %3762 = vst.msk [vmem:[#allocation5 + $0xf] sm:$0x1] %vm1876, %v3760
    %3763 = vst.sshfl [vmem:[#allocation1] sm:$0xff pattern:$0x73625140] %v3553
    %s3764 = scalar_lea.vmem [#allocation1], 3
    %v3765 = vld [vmem:[%s3764] ss:$4 sm:$0xff]
    %v3766 = vrot.slane %v3765, 7
    %v3767 = vrot.slane %v3766, 2
    %3768 = vrot.lane.b32.xlu0 %v3767, 96
    %v3769 = vpop.permute.xlu0 %3768
    %3771 = vst.msk [vmem:[#allocation5 + $0xf] sm:$0x1] %vm1886, %v3769
    %3772 = vst.msk [vmem:[#allocation5 + $0x11] sm:$0x1] %vm1860, %v3554
    %v3774 = vrot.slane %v3554, 7
    %v3775 = vrot.slane %v3774, 2
    %3776 = vrot.lane.b32.xlu0 %v3775, 32
    %v3777 = vpop.permute.xlu0 %3776
    %3779 = vst.msk [vmem:[#allocation5 + $0x11] sm:$0x1] %vm1868, %v3777
    %3780 = vst.sshfl [vmem:[#allocation1] sm:$0xff pattern:$0x73625140] %v3554
    %s3781 = scalar_lea.vmem [#allocation1], 1
    %v3782 = vld [vmem:[%s3781] ss:$4 sm:$0xff]
    %3783 = vrot.lane.b32.xlu0 %v3782, 64
    %v3784 = vpop.permute.xlu0 %3783
    %3786 = vst.msk [vmem:[#allocation5 + $0x11] sm:$0x1] %vm1876, %v3784
    %3787 = vst.sshfl [vmem:[#allocation1] sm:$0xff pattern:$0x73625140] %v3554
    %s3788 = scalar_lea.vmem [#allocation1], 1
    %v3789 = vld [vmem:[%s3788] ss:$4 sm:$0xff]
    %v3790 = vrot.slane %v3789, 7
    %v3791 = vrot.slane %v3790, 2
    %3792 = vrot.lane.b32.xlu0 %v3791, 96
    %v3793 = vpop.permute.xlu0 %3792
    %3795 = vst.msk [vmem:[#allocation5 + $0x11] sm:$0x1] %vm1886, %v3793
    %3796 = vst.sshfl [vmem:[#allocation1] sm:$0xff pattern:$0x73625140] %v3554
    %s3797 = scalar_lea.vmem [#allocation1], 2
    %v3798 = vld [vmem:[%s3797] ss:$4 sm:$0xff]
    %3800 = vst.msk [vmem:[#allocation5 + $0x13] sm:$0x1] %vm1860, %v3798
    %3801 = vst.sshfl [vmem:[#allocation1] sm:$0xff pattern:$0x73625140] %v3554
    %s3802 = scalar_lea.vmem [#allocation1], 2
    %v3803 = vld [vmem:[%s3802] ss:$4 sm:$0xff]
    %v3804 = vrot.slane %v3803, 7
    %v3805 = vrot.slane %v3804, 2
    %3806 = vrot.lane.b32.xlu0 %v3805, 32
    %v3807 = vpop.permute.xlu0 %3806
    %3809 = vst.msk [vmem:[#allocation5 + $0x13] sm:$0x1] %vm1868, %v3807
    %3810 = vst.sshfl [vmem:[#allocation1] sm:$0xff pattern:$0x73625140] %v3554
    %s3811 = scalar_lea.vmem [#allocation1], 3
    %v3812 = vld [vmem:[%s3811] ss:$4 sm:$0xff]
    %3813 = vrot.lane.b32.xlu0 %v3812, 64
    %v3814 = vpop.permute.xlu0 %3813
    %3816 = vst.msk [vmem:[#allocation5 + $0x13] sm:$0x1] %vm1876, %v3814
    %3817 = vst.sshfl [vmem:[#allocation1] sm:$0xff pattern:$0x73625140] %v3554
    %s3818 = scalar_lea.vmem [#allocation1], 3
    %v3819 = vld [vmem:[%s3818] ss:$4 sm:$0xff]
    %v3820 = vrot.slane %v3819, 7
    %v3821 = vrot.slane %v3820, 2
    %3822 = vrot.lane.b32.xlu0 %v3821, 96
    %v3823 = vpop.permute.xlu0 %3822
    %3825 = vst.msk [vmem:[#allocation5 + $0x13] sm:$0x1] %vm1886, %v3823
    %3826 = vst.msk [vmem:[#allocation5 + $0x15] sm:$0x1] %vm1860, %v3555
    %v3828 = vrot.slane %v3555, 7
    %v3829 = vrot.slane %v3828, 2
    %3830 = vrot.lane.b32.xlu0 %v3829, 32
    %v3831 = vpop.permute.xlu0 %3830
    %3833 = vst.msk [vmem:[#allocation5 + $0x15] sm:$0x1] %vm1868, %v3831
    %3834 = vst.sshfl [vmem:[#allocation1] sm:$0xff pattern:$0x73625140] %v3555
    %s3835 = scalar_lea.vmem [#allocation1], 1
    %v3836 = vld [vmem:[%s3835] ss:$4 sm:$0xff]
    %3837 = vrot.lane.b32.xlu0 %v3836, 64
    %v3838 = vpop.permute.xlu0 %3837
    %3840 = vst.msk [vmem:[#allocation5 + $0x15] sm:$0x1] %vm1876, %v3838
    %3841 = vst.sshfl [vmem:[#allocation1] sm:$0xff pattern:$0x73625140] %v3555
    %s3842 = scalar_lea.vmem [#allocation1], 1
    %v3843 = vld [vmem:[%s3842] ss:$4 sm:$0xff]
    %v3844 = vrot.slane %v3843, 7
    %v3845 = vrot.slane %v3844, 2
    %3846 = vrot.lane.b32.xlu0 %v3845, 96
    %v3847 = vpop.permute.xlu0 %3846
    %3849 = vst.msk [vmem:[#allocation5 + $0x15] sm:$0x1] %vm1886, %v3847
    %3850 = vst.sshfl [vmem:[#allocation1] sm:$0xff pattern:$0x73625140] %v3555
    %s3851 = scalar_lea.vmem [#allocation1], 2
    %v3852 = vld [vmem:[%s3851] ss:$4 sm:$0xff]
    %3854 = vst.msk [vmem:[#allocation5 + $0x17] sm:$0x1] %vm1860, %v3852
    %v3855 = vld [vmem:[#allocation5] sm:$0xff]
    %v3856 = vld [vmem:[#allocation5 + $0x8] sm:$0xff]
    %v3857 = vld [vmem:[#allocation5 + $0x10] sm:$0xff]
    %3861 = vst [vmem:[#allocation1] ss:$4 sm:$0xff] %v3855
    %s3862 = scalar_lea.vmem [#allocation1], 32
    %3863 = vst [vmem:[%s3862] ss:$4 sm:$0xff] %v3856
    %v3864 = vld.sshfl [vmem:[#allocation1] sm:$0xff pattern:$0x73625140]
    %v3865 = vld.sshfl [vmem:[#allocation1 + $0x8] sm:$0xff pattern:$0x73625140]
    %v3866 = vld.sshfl [vmem:[#allocation1 + $0x10] sm:$0xff pattern:$0x73625140]
    %v3867 = vld.sshfl [vmem:[#allocation1 + $0x18] sm:$0xff pattern:$0x73625140]
    %v3868 = vld.sshfl [vmem:[#allocation1 + $0x20] sm:$0xff pattern:$0x73625140]
    %v3869 = vld.sshfl [vmem:[#allocation1 + $0x28] sm:$0xff pattern:$0x73625140]
    %v3870 = vld.sshfl [vmem:[#allocation1 + $0x30] sm:$0xff pattern:$0x73625140]
    %v3871 = vld.sshfl [vmem:[#allocation1 + $0x38] sm:$0xff pattern:$0x73625140]
    %3872 = vst [vmem:[#allocation1] ss:$4 sm:$0xff] %v3857
    %v3873 = vld.sshfl [vmem:[#allocation1] sm:$0xff pattern:$0x73625140]
    %v3874 = vld.sshfl [vmem:[#allocation1 + $0x8] sm:$0xff pattern:$0x73625140]
    %v3875 = vld.sshfl [vmem:[#allocation1 + $0x10] sm:$0xff pattern:$0x73625140]
    %v3876 = vld.sshfl [vmem:[#allocation1 + $0x18] sm:$0xff pattern:$0x73625140]
    %v3889 = vpack.c.bf16 %v3864, %v3864
    %v3890 = vpack.c.bf16 %v3865, %v3865
    %v3891 = vpack.c.bf16 %v3866, %v3866
    %v3892 = vpack.c.bf16 %v3867, %v3867
    %v3893 = vpack.c.bf16 %v3868, %v3868
    %v3894 = vpack.c.bf16 %v3869, %v3869
    %v3895 = vpack.c.bf16 %v3870, %v3870
    %v3896 = vpack.c.bf16 %v3871, %v3871
    %v3897 = vpack.c.bf16 %v3873, %v3873
    %v3898 = vpack.c.bf16 %v3874, %v3874
    %v3899 = vpack.c.bf16 %v3875, %v3875
    %v3900 = vpack.c.bf16 %v3876, %v3876
    %v3901 = vld [vmem:[#allocation6] sm:$0xf]
    %v3902 = vld [vmem:[#allocation6 + $0x4] sm:$0xf]
    %v3903 = vld [vmem:[#allocation6 + $0x8] sm:$0xf]
    %v3904 = vld [vmem:[#allocation6 + $0xc] sm:$0xf]
    %v3905 = vld [vmem:[#allocation6 + $0x10] sm:$0xf]
    %v3906 = vld [vmem:[#allocation6 + $0x14] sm:$0xf]
    %v3907 = vld [vmem:[#allocation6 + $0x18] sm:$0xf]
    %v3908 = vld [vmem:[#allocation6 + $0x1c] sm:$0xf]
    %v3909 = vld [vmem:[#allocation6 + $0x20] sm:$0xf]
    %v3910 = vld [vmem:[#allocation6 + $0x24] sm:$0xf]
    %v3911 = vld [vmem:[#allocation6 + $0x28] sm:$0xf]
    %v3912 = vld [vmem:[#allocation6 + $0x2c] sm:$0xf]
    %v3913 = vld [vmem:[#allocation6 + $0x30] sm:$0xf]
    %v3914 = vld [vmem:[#allocation6 + $0x34] sm:$0xf]
    %v3915 = vld [vmem:[#allocation6 + $0x38] sm:$0xf]
    %v3916 = vld [vmem:[#allocation6 + $0x3c] sm:$0xf]
    %v3917 = vld [vmem:[#allocation6 + $0x40] sm:$0xf]
    %v3918 = vld [vmem:[#allocation6 + $0x44] sm:$0xf]
    %v3919 = vld [vmem:[#allocation6 + $0x48] sm:$0xf]
    %v3920 = vld [vmem:[#allocation6 + $0x4c] sm:$0xf]
    %v3921 = vld [vmem:[#allocation6 + $0x50] sm:$0xf]
    %v3922 = vld [vmem:[#allocation6 + $0x54] sm:$0xf]
    %v3923 = vld [vmem:[#allocation6 + $0x58] sm:$0xf]
    %v3924 = vld [vmem:[#allocation6 + $0x5c] sm:$0xf]
    %v3925 = vld [vmem:[#allocation6 + $0x60] sm:$0xf]
    %v3926 = vld [vmem:[#allocation6 + $0x64] sm:$0xf]
    %v3927 = vld [vmem:[#allocation6 + $0x68] sm:$0xf]
    %v3928 = vld [vmem:[#allocation6 + $0x6c] sm:$0xf]
    %v3929 = vld [vmem:[#allocation6 + $0x70] sm:$0xf]
    %v3930 = vld [vmem:[#allocation6 + $0x74] sm:$0xf]
    %v3931 = vld [vmem:[#allocation6 + $0x78] sm:$0xf]
    %v3932 = vld [vmem:[#allocation6 + $0x7c] sm:$0xf]
    %v3933 = vld [vmem:[#allocation6 + $0x80] sm:$0xf]
    %v3934 = vld [vmem:[#allocation6 + $0x84] sm:$0xf]
    %v3935 = vld [vmem:[#allocation6 + $0x88] sm:$0xf]
    %v3936 = vld [vmem:[#allocation6 + $0x8c] sm:$0xf]
    %v3937 = vld [vmem:[#allocation6 + $0x90] sm:$0xf]
    %v3938 = vld [vmem:[#allocation6 + $0x94] sm:$0xf]
    %v3939 = vld [vmem:[#allocation6 + $0x98] sm:$0xf]
    %v3940 = vld [vmem:[#allocation6 + $0x9c] sm:$0xf]
    %v3941 = vld [vmem:[#allocation6 + $0xa0] sm:$0xf]
    %v3942 = vld [vmem:[#allocation6 + $0xa4] sm:$0xf]
    %v3943 = vld [vmem:[#allocation6 + $0xa8] sm:$0xf]
    %v3944 = vld [vmem:[#allocation6 + $0xac] sm:$0xf]
    %v3945 = vld [vmem:[#allocation6 + $0xb0] sm:$0xf]
    %v3946 = vld [vmem:[#allocation6 + $0xb4] sm:$0xf]
    %v3947 = vld [vmem:[#allocation6 + $0xb8] sm:$0xf]
    %v3948 = vld [vmem:[#allocation6 + $0xbc] sm:$0xf]
    %v3949 = vld [vmem:[#allocation6 + $0xc0] sm:$0xf]
    %v3950 = vld [vmem:[#allocation6 + $0xc4] sm:$0xf]
    %v3951 = vld [vmem:[#allocation6 + $0xc8] sm:$0xf]
    %v3952 = vld [vmem:[#allocation6 + $0xcc] sm:$0xf]
    %v3953 = vld [vmem:[#allocation6 + $0xd0] sm:$0xf]
    %v3954 = vld [vmem:[#allocation6 + $0xd4] sm:$0xf]
    %v3955 = vld [vmem:[#allocation6 + $0xd8] sm:$0xf]
    %v3956 = vld [vmem:[#allocation6 + $0xdc] sm:$0xf]
    %v3957 = vld [vmem:[#allocation6 + $0xe0] sm:$0xf]
    %v3958 = vld [vmem:[#allocation6 + $0xe4] sm:$0xf]
    %v3959 = vld [vmem:[#allocation6 + $0xe8] sm:$0xf]
    %v3960 = vld [vmem:[#allocation6 + $0xec] sm:$0xf]
    %v3961 = vld [vmem:[#allocation6 + $0xf0] sm:$0xf]
    %v3962 = vld [vmem:[#allocation6 + $0xf4] sm:$0xf]
    %v3963 = vld [vmem:[#allocation6 + $0xf8] sm:$0xf]
    %v3964 = vld [vmem:[#allocation6 + $0xfc] sm:$0xf]
    %v3965 = vld [vmem:[#allocation6 + $0x100] sm:$0xf]
    %v3966 = vld [vmem:[#allocation6 + $0x104] sm:$0xf]
    %v3967 = vld [vmem:[#allocation6 + $0x108] sm:$0xf]
    %v3968 = vld [vmem:[#allocation6 + $0x10c] sm:$0xf]
    %v3969 = vld [vmem:[#allocation6 + $0x110] sm:$0xf]
    %v3970 = vld [vmem:[#allocation6 + $0x114] sm:$0xf]
    %v3971 = vld [vmem:[#allocation6 + $0x118] sm:$0xf]
    %v3972 = vld [vmem:[#allocation6 + $0x11c] sm:$0xf]
    %v3973 = vld [vmem:[#allocation6 + $0x120] sm:$0xf]
    %v3974 = vld [vmem:[#allocation6 + $0x124] sm:$0xf]
    %v3975 = vld [vmem:[#allocation6 + $0x128] sm:$0xf]
    %v3976 = vld [vmem:[#allocation6 + $0x12c] sm:$0xf]
    %v3977 = vld [vmem:[#allocation6 + $0x130] sm:$0xf]
    %v3978 = vld [vmem:[#allocation6 + $0x134] sm:$0xf]
    %v3979 = vld [vmem:[#allocation6 + $0x138] sm:$0xf]
    %v3980 = vld [vmem:[#allocation6 + $0x13c] sm:$0xf]
    %v3981 = vld [vmem:[#allocation6 + $0x140] sm:$0xf]
    %v3982 = vld [vmem:[#allocation6 + $0x144] sm:$0xf]
    %v3983 = vld [vmem:[#allocation6 + $0x148] sm:$0xf]
    %v3984 = vld [vmem:[#allocation6 + $0x14c] sm:$0xf]
    %v3985 = vld [vmem:[#allocation6 + $0x150] sm:$0xf]
    %v3986 = vld [vmem:[#allocation6 + $0x154] sm:$0xf]
    %v3987 = vld [vmem:[#allocation6 + $0x158] sm:$0xf]
    %v3988 = vld [vmem:[#allocation6 + $0x15c] sm:$0xf]
    %v3989 = vld [vmem:[#allocation6 + $0x160] sm:$0xf]
    %v3990 = vld [vmem:[#allocation6 + $0x164] sm:$0xf]
    %v3991 = vld [vmem:[#allocation6 + $0x168] sm:$0xf]
    %v3992 = vld [vmem:[#allocation6 + $0x16c] sm:$0xf]
    %v3993 = vld [vmem:[#allocation6 + $0x170] sm:$0xf]
    %v3994 = vld [vmem:[#allocation6 + $0x174] sm:$0xf]
    %v3995 = vld [vmem:[#allocation6 + $0x178] sm:$0xf]
    %v3996 = vld [vmem:[#allocation6 + $0x17c] sm:$0xf]
    %v3997 = vld [vmem:[#allocation6 + $0x180] sm:$0xf]
    %v3998 = vld [vmem:[#allocation6 + $0x184] sm:$0xf]
    %v3999 = vld [vmem:[#allocation6 + $0x188] sm:$0xf]
    %v4000 = vld [vmem:[#allocation6 + $0x18c] sm:$0xf]
    %v4001 = vld [vmem:[#allocation6 + $0x190] sm:$0xf]
    %v4002 = vld [vmem:[#allocation6 + $0x194] sm:$0xf]
    %v4003 = vld [vmem:[#allocation6 + $0x198] sm:$0xf]
    %v4004 = vld [vmem:[#allocation6 + $0x19c] sm:$0xf]
    %v4005 = vld [vmem:[#allocation6 + $0x1a0] sm:$0xf]
    %v4006 = vld [vmem:[#allocation6 + $0x1a4] sm:$0xf]
    %v4007 = vld [vmem:[#allocation6 + $0x1a8] sm:$0xf]
    %v4008 = vld [vmem:[#allocation6 + $0x1ac] sm:$0xf]
    %v4009 = vld [vmem:[#allocation6 + $0x1b0] sm:$0xf]
    %v4010 = vld [vmem:[#allocation6 + $0x1b4] sm:$0xf]
    %v4011 = vld [vmem:[#allocation6 + $0x1b8] sm:$0xf]
    %v4012 = vld [vmem:[#allocation6 + $0x1bc] sm:$0xf]
    %v4013 = vld [vmem:[#allocation6 + $0x1c0] sm:$0xf]
    %v4014 = vld [vmem:[#allocation6 + $0x1c4] sm:$0xf]
    %v4015 = vld [vmem:[#allocation6 + $0x1c8] sm:$0xf]
    %v4016 = vld [vmem:[#allocation6 + $0x1cc] sm:$0xf]
    %v4017 = vld [vmem:[#allocation6 + $0x1d0] sm:$0xf]
    %v4018 = vld [vmem:[#allocation6 + $0x1d4] sm:$0xf]
    %v4019 = vld [vmem:[#allocation6 + $0x1d8] sm:$0xf]
    %v4020 = vld [vmem:[#allocation6 + $0x1dc] sm:$0xf]
    %v4021 = vld [vmem:[#allocation6 + $0x1e0] sm:$0xf]
    %v4022 = vld [vmem:[#allocation6 + $0x1e4] sm:$0xf]
    %v4023 = vld [vmem:[#allocation6 + $0x1e8] sm:$0xf]
    %v4024 = vld [vmem:[#allocation6 + $0x1ec] sm:$0xf]
    %v4025 = vld [vmem:[#allocation6 + $0x1f0] sm:$0xf]
    %v4026 = vld [vmem:[#allocation6 + $0x1f4] sm:$0xf]
    %v4027 = vld [vmem:[#allocation6 + $0x1f8] sm:$0xf]
    %v4028 = vld [vmem:[#allocation6 + $0x1fc] sm:$0xf]
    %v4029 = vld [vmem:[#allocation6 + $0x200] sm:$0xf]
    %v4030 = vld [vmem:[#allocation6 + $0x204] sm:$0xf]
    %v4031 = vld [vmem:[#allocation6 + $0x208] sm:$0xf]
    %v4032 = vld [vmem:[#allocation6 + $0x20c] sm:$0xf]
    %v4033 = vld [vmem:[#allocation6 + $0x210] sm:$0xf]
    %v4034 = vld [vmem:[#allocation6 + $0x214] sm:$0xf]
    %v4035 = vld [vmem:[#allocation6 + $0x218] sm:$0xf]
    %v4036 = vld [vmem:[#allocation6 + $0x21c] sm:$0xf]
    %v4037 = vld [vmem:[#allocation6 + $0x220] sm:$0xf]
    %v4038 = vld [vmem:[#allocation6 + $0x224] sm:$0xf]
    %v4039 = vld [vmem:[#allocation6 + $0x228] sm:$0xf]
    %v4040 = vld [vmem:[#allocation6 + $0x22c] sm:$0xf]
    %v4041 = vld [vmem:[#allocation6 + $0x230] sm:$0xf]
    %v4042 = vld [vmem:[#allocation6 + $0x234] sm:$0xf]
    %v4043 = vld [vmem:[#allocation6 + $0x238] sm:$0xf]
    %v4044 = vld [vmem:[#allocation6 + $0x23c] sm:$0xf]
    %v4045 = vld [vmem:[#allocation6 + $0x240] sm:$0xf]
    %v4046 = vld [vmem:[#allocation6 + $0x244] sm:$0xf]
    %v4047 = vld [vmem:[#allocation6 + $0x248] sm:$0xf]
    %v4048 = vld [vmem:[#allocation6 + $0x24c] sm:$0xf]
    %v4049 = vld [vmem:[#allocation6 + $0x250] sm:$0xf]
    %v4050 = vld [vmem:[#allocation6 + $0x254] sm:$0xf]
    %v4051 = vld [vmem:[#allocation6 + $0x258] sm:$0xf]
    %v4052 = vld [vmem:[#allocation6 + $0x25c] sm:$0xf]
    %v4053 = vld [vmem:[#allocation6 + $0x260] sm:$0xf]
    %v4054 = vld [vmem:[#allocation6 + $0x264] sm:$0xf]
    %v4055 = vld [vmem:[#allocation6 + $0x268] sm:$0xf]
    %v4056 = vld [vmem:[#allocation6 + $0x26c] sm:$0xf]
    %v4057 = vld [vmem:[#allocation6 + $0x270] sm:$0xf]
    %v4058 = vld [vmem:[#allocation6 + $0x274] sm:$0xf]
    %v4059 = vld [vmem:[#allocation6 + $0x278] sm:$0xf]
    %v4060 = vld [vmem:[#allocation6 + $0x27c] sm:$0xf]
    %v4061 = vld [vmem:[#allocation6 + $0x280] sm:$0xf]
    %v4062 = vld [vmem:[#allocation6 + $0x284] sm:$0xf]
    %v4063 = vld [vmem:[#allocation6 + $0x288] sm:$0xf]
    %v4064 = vld [vmem:[#allocation6 + $0x28c] sm:$0xf]
    %v4065 = vld [vmem:[#allocation6 + $0x290] sm:$0xf]
    %v4066 = vld [vmem:[#allocation6 + $0x294] sm:$0xf]
    %v4067 = vld [vmem:[#allocation6 + $0x298] sm:$0xf]
    %v4068 = vld [vmem:[#allocation6 + $0x29c] sm:$0xf]
    %v4069 = vld [vmem:[#allocation6 + $0x2a0] sm:$0xf]
    %v4070 = vld [vmem:[#allocation6 + $0x2a4] sm:$0xf]
    %v4071 = vld [vmem:[#allocation6 + $0x2a8] sm:$0xf]
    %v4072 = vld [vmem:[#allocation6 + $0x2ac] sm:$0xf]
    %v4073 = vld [vmem:[#allocation6 + $0x2b0] sm:$0xf]
    %v4074 = vld [vmem:[#allocation6 + $0x2b4] sm:$0xf]
    %v4075 = vld [vmem:[#allocation6 + $0x2b8] sm:$0xf]
    %v4076 = vld [vmem:[#allocation6 + $0x2bc] sm:$0xf]
    %v4077 = vld [vmem:[#allocation6 + $0x2c0] sm:$0xf]
    %v4078 = vld [vmem:[#allocation6 + $0x2c4] sm:$0xf]
    %v4079 = vld [vmem:[#allocation6 + $0x2c8] sm:$0xf]
    %v4080 = vld [vmem:[#allocation6 + $0x2cc] sm:$0xf]
    %v4081 = vld [vmem:[%s8] sm:$0x1]
    %v4083 = vperm.slane %v4081, 0
    %v4265 = vunpack.c.l.b16 %v3901
    %v4266 = vunpack.c.l.b16 %v3902
    %v4267 = vunpack.c.l.b16 %v3903
    %v4268 = vunpack.c.l.b16 %v3904
    %v4269 = vunpack.c.l.b16 %v3905
    %v4270 = vunpack.c.l.b16 %v3906
    %v4271 = vunpack.c.l.b16 %v3907
    %v4272 = vunpack.c.l.b16 %v3908
    %v4273 = vunpack.c.l.b16 %v3909
    %v4274 = vunpack.c.l.b16 %v3910
    %v4275 = vunpack.c.l.b16 %v3911
    %v4276 = vunpack.c.l.b16 %v3912
    %v4277 = vunpack.c.l.b16 %v3913
    %v4278 = vunpack.c.l.b16 %v3914
    %v4279 = vunpack.c.l.b16 %v3915
    %v4280 = vunpack.c.l.b16 %v3916
    %v4281 = vunpack.c.l.b16 %v3917
    %v4282 = vunpack.c.l.b16 %v3918
    %v4283 = vunpack.c.l.b16 %v3919
    %v4284 = vunpack.c.l.b16 %v3920
    %v4285 = vunpack.c.l.b16 %v3921
    %v4286 = vunpack.c.l.b16 %v3922
    %v4287 = vunpack.c.l.b16 %v3923
    %v4288 = vunpack.c.l.b16 %v3924
    %v4289 = vunpack.c.l.b16 %v3925
    %v4290 = vunpack.c.l.b16 %v3926
    %v4291 = vunpack.c.l.b16 %v3927
    %v4292 = vunpack.c.l.b16 %v3928
    %v4293 = vunpack.c.l.b16 %v3929
    %v4294 = vunpack.c.l.b16 %v3930
    %v4295 = vunpack.c.l.b16 %v3931
    %v4296 = vunpack.c.l.b16 %v3932
    %v4297 = vunpack.c.l.b16 %v3933
    %v4298 = vunpack.c.l.b16 %v3934
    %v4299 = vunpack.c.l.b16 %v3935
    %v4300 = vunpack.c.l.b16 %v3936
    %v4301 = vunpack.c.l.b16 %v3937
    %v4302 = vunpack.c.l.b16 %v3938
    %v4303 = vunpack.c.l.b16 %v3939
    %v4304 = vunpack.c.l.b16 %v3940
    %v4305 = vunpack.c.l.b16 %v3941
    %v4306 = vunpack.c.l.b16 %v3942
    %v4307 = vunpack.c.l.b16 %v3943
    %v4308 = vunpack.c.l.b16 %v3944
    %v4309 = vunpack.c.l.b16 %v3945
    %v4310 = vunpack.c.l.b16 %v3946
    %v4311 = vunpack.c.l.b16 %v3947
    %v4312 = vunpack.c.l.b16 %v3948
    %v4313 = vunpack.c.l.b16 %v3949
    %v4314 = vunpack.c.l.b16 %v3950
    %v4315 = vunpack.c.l.b16 %v3951
    %v4316 = vunpack.c.l.b16 %v3952
    %v4317 = vunpack.c.l.b16 %v3953
    %v4318 = vunpack.c.l.b16 %v3954
    %v4319 = vunpack.c.l.b16 %v3955
    %v4320 = vunpack.c.l.b16 %v3956
    %v4321 = vunpack.c.l.b16 %v3957
    %v4322 = vunpack.c.l.b16 %v3958
    %v4323 = vunpack.c.l.b16 %v3959
    %v4324 = vunpack.c.l.b16 %v3960
    %v4325 = vunpack.c.l.b16 %v3961
    %v4326 = vunpack.c.l.b16 %v3962
    %v4327 = vunpack.c.l.b16 %v3963
    %v4328 = vunpack.c.l.b16 %v3964
    %v4329 = vunpack.c.l.b16 %v3965
    %v4330 = vunpack.c.l.b16 %v3966
    %v4331 = vunpack.c.l.b16 %v3967
    %v4332 = vunpack.c.l.b16 %v3968
    %v4333 = vunpack.c.l.b16 %v3969
    %v4334 = vunpack.c.l.b16 %v3970
    %v4335 = vunpack.c.l.b16 %v3971
    %v4336 = vunpack.c.l.b16 %v3972
    %v4337 = vunpack.c.l.b16 %v3973
    %v4338 = vunpack.c.l.b16 %v3974
    %v4339 = vunpack.c.l.b16 %v3975
    %v4340 = vunpack.c.l.b16 %v3976
    %v4341 = vunpack.c.l.b16 %v3977
    %v4342 = vunpack.c.l.b16 %v3978
    %v4343 = vunpack.c.l.b16 %v3979
    %v4344 = vunpack.c.l.b16 %v3980
    %v4345 = vunpack.c.l.b16 %v3981
    %v4346 = vunpack.c.l.b16 %v3982
    %v4347 = vunpack.c.l.b16 %v3983
    %v4348 = vunpack.c.l.b16 %v3984
    %v4349 = vunpack.c.l.b16 %v3985
    %v4350 = vunpack.c.l.b16 %v3986
    %v4351 = vunpack.c.l.b16 %v3987
    %v4352 = vunpack.c.l.b16 %v3988
    %v4353 = vunpack.c.l.b16 %v3989
    %v4354 = vunpack.c.l.b16 %v3990
    %v4355 = vunpack.c.l.b16 %v3991
    %v4356 = vunpack.c.l.b16 %v3992
    %v4357 = vunpack.c.l.b16 %v3993
    %v4358 = vunpack.c.l.b16 %v3994
    %v4359 = vunpack.c.l.b16 %v3995
    %v4360 = vunpack.c.l.b16 %v3996
    %v4361 = vunpack.c.l.b16 %v3997
    %v4362 = vunpack.c.l.b16 %v3998
    %v4363 = vunpack.c.l.b16 %v3999
    %v4364 = vunpack.c.l.b16 %v4000
    %v4365 = vunpack.c.l.b16 %v4001
    %v4366 = vunpack.c.l.b16 %v4002
    %v4367 = vunpack.c.l.b16 %v4003
    %v4368 = vunpack.c.l.b16 %v4004
    %v4369 = vunpack.c.l.b16 %v4005
    %v4370 = vunpack.c.l.b16 %v4006
    %v4371 = vunpack.c.l.b16 %v4007
    %v4372 = vunpack.c.l.b16 %v4008
    %v4373 = vunpack.c.l.b16 %v4009
    %v4374 = vunpack.c.l.b16 %v4010
    %v4375 = vunpack.c.l.b16 %v4011
    %v4376 = vunpack.c.l.b16 %v4012
    %v4377 = vunpack.c.l.b16 %v4013
    %v4378 = vunpack.c.l.b16 %v4014
    %v4379 = vunpack.c.l.b16 %v4015
    %v4380 = vunpack.c.l.b16 %v4016
    %v4381 = vunpack.c.l.b16 %v4017
    %v4382 = vunpack.c.l.b16 %v4018
    %v4383 = vunpack.c.l.b16 %v4019
    %v4384 = vunpack.c.l.b16 %v4020
    %v4385 = vunpack.c.l.b16 %v4021
    %v4386 = vunpack.c.l.b16 %v4022
    %v4387 = vunpack.c.l.b16 %v4023
    %v4388 = vunpack.c.l.b16 %v4024
    %v4389 = vunpack.c.l.b16 %v4025
    %v4390 = vunpack.c.l.b16 %v4026
    %v4391 = vunpack.c.l.b16 %v4027
    %v4392 = vunpack.c.l.b16 %v4028
    %v4393 = vunpack.c.l.b16 %v4029
    %v4394 = vunpack.c.l.b16 %v4030
    %v4395 = vunpack.c.l.b16 %v4031
    %v4396 = vunpack.c.l.b16 %v4032
    %v4397 = vunpack.c.l.b16 %v4033
    %v4398 = vunpack.c.l.b16 %v4034
    %v4399 = vunpack.c.l.b16 %v4035
    %v4400 = vunpack.c.l.b16 %v4036
    %v4401 = vunpack.c.l.b16 %v4037
    %v4402 = vunpack.c.l.b16 %v4038
    %v4403 = vunpack.c.l.b16 %v4039
    %v4404 = vunpack.c.l.b16 %v4040
    %v4405 = vunpack.c.l.b16 %v4041
    %v4406 = vunpack.c.l.b16 %v4042
    %v4407 = vunpack.c.l.b16 %v4043
    %v4408 = vunpack.c.l.b16 %v4044
    %v4409 = vunpack.c.l.b16 %v4045
    %v4410 = vunpack.c.l.b16 %v4046
    %v4411 = vunpack.c.l.b16 %v4047
    %v4412 = vunpack.c.l.b16 %v4048
    %v4413 = vunpack.c.l.b16 %v4049
    %v4414 = vunpack.c.l.b16 %v4050
    %v4415 = vunpack.c.l.b16 %v4051
    %v4416 = vunpack.c.l.b16 %v4052
    %v4417 = vunpack.c.l.b16 %v4053
    %v4418 = vunpack.c.l.b16 %v4054
    %v4419 = vunpack.c.l.b16 %v4055
    %v4420 = vunpack.c.l.b16 %v4056
    %v4421 = vunpack.c.l.b16 %v4057
    %v4422 = vunpack.c.l.b16 %v4058
    %v4423 = vunpack.c.l.b16 %v4059
    %v4424 = vunpack.c.l.b16 %v4060
    %v4425 = vunpack.c.l.b16 %v4061
    %v4426 = vunpack.c.l.b16 %v4062
    %v4427 = vunpack.c.l.b16 %v4063
    %v4428 = vunpack.c.l.b16 %v4064
    %v4429 = vunpack.c.l.b16 %v4065
    %v4430 = vunpack.c.l.b16 %v4066
    %v4431 = vunpack.c.l.b16 %v4067
    %v4432 = vunpack.c.l.b16 %v4068
    %v4433 = vunpack.c.l.b16 %v4069
    %v4434 = vunpack.c.l.b16 %v4070
    %v4435 = vunpack.c.l.b16 %v4071
    %v4436 = vunpack.c.l.b16 %v4072
    %v4437 = vunpack.c.l.b16 %v4073
    %v4438 = vunpack.c.l.b16 %v4074
    %v4439 = vunpack.c.l.b16 %v4075
    %v4440 = vunpack.c.l.b16 %v4076
    %v4441 = vunpack.c.l.b16 %v4077
    %v4442 = vunpack.c.l.b16 %v4078
    %v4443 = vunpack.c.l.b16 %v4079
    %v4444 = vunpack.c.l.b16 %v4080
    %v4445 = vpack.c.b16 %v4266, %v4265
    %v4446 = vpack.c.b16 %v4268, %v4267
    %v4447 = vpack.c.b16 %v4270, %v4269
    %v4448 = vpack.c.b16 %v4272, %v4271
    %v4449 = vpack.c.b16 %v4274, %v4273
    %v4450 = vpack.c.b16 %v4276, %v4275
    %v4451 = vpack.c.b16 %v4278, %v4277
    %v4452 = vpack.c.b16 %v4280, %v4279
    %v4453 = vpack.c.b16 %v4282, %v4281
    %v4454 = vpack.c.b16 %v4284, %v4283
    %v4455 = vpack.c.b16 %v4286, %v4285
    %v4456 = vpack.c.b16 %v4288, %v4287
    %v4457 = vpack.c.b16 %v4290, %v4289
    %v4458 = vpack.c.b16 %v4292, %v4291
    %v4459 = vpack.c.b16 %v4294, %v4293
    %v4460 = vpack.c.b16 %v4296, %v4295
    %v4461 = vpack.c.b16 %v4298, %v4297
    %v4462 = vpack.c.b16 %v4300, %v4299
    %v4463 = vpack.c.b16 %v4302, %v4301
    %v4464 = vpack.c.b16 %v4304, %v4303
    %v4465 = vpack.c.b16 %v4306, %v4305
    %v4466 = vpack.c.b16 %v4308, %v4307
    %v4467 = vpack.c.b16 %v4310, %v4309
    %v4468 = vpack.c.b16 %v4312, %v4311
    %v4469 = vpack.c.b16 %v4314, %v4313
    %v4470 = vpack.c.b16 %v4316, %v4315
    %v4471 = vpack.c.b16 %v4318, %v4317
    %v4472 = vpack.c.b16 %v4320, %v4319
    %v4473 = vpack.c.b16 %v4322, %v4321
    %v4474 = vpack.c.b16 %v4324, %v4323
    %v4475 = vpack.c.b16 %v4326, %v4325
    %v4476 = vpack.c.b16 %v4328, %v4327
    %v4477 = vpack.c.b16 %v4330, %v4329
    %v4478 = vpack.c.b16 %v4332, %v4331
    %v4479 = vpack.c.b16 %v4334, %v4333
    %v4480 = vpack.c.b16 %v4336, %v4335
    %v4481 = vpack.c.b16 %v4338, %v4337
    %v4482 = vpack.c.b16 %v4340, %v4339
    %v4483 = vpack.c.b16 %v4342, %v4341
    %v4484 = vpack.c.b16 %v4344, %v4343
    %v4485 = vpack.c.b16 %v4346, %v4345
    %v4486 = vpack.c.b16 %v4348, %v4347
    %v4487 = vpack.c.b16 %v4350, %v4349
    %v4488 = vpack.c.b16 %v4352, %v4351
    %v4489 = vpack.c.b16 %v4354, %v4353
    %v4490 = vpack.c.b16 %v4356, %v4355
    %v4491 = vpack.c.b16 %v4358, %v4357
    %v4492 = vpack.c.b16 %v4360, %v4359
    %v4493 = vpack.c.b16 %v4362, %v4361
    %v4494 = vpack.c.b16 %v4364, %v4363
    %v4495 = vpack.c.b16 %v4366, %v4365
    %v4496 = vpack.c.b16 %v4368, %v4367
    %v4497 = vpack.c.b16 %v4370, %v4369
    %v4498 = vpack.c.b16 %v4372, %v4371
    %v4499 = vpack.c.b16 %v4374, %v4373
    %v4500 = vpack.c.b16 %v4376, %v4375
    %v4501 = vpack.c.b16 %v4378, %v4377
    %v4502 = vpack.c.b16 %v4380, %v4379
    %v4503 = vpack.c.b16 %v4382, %v4381
    %v4504 = vpack.c.b16 %v4384, %v4383
    %v4505 = vpack.c.b16 %v4386, %v4385
    %v4506 = vpack.c.b16 %v4388, %v4387
    %v4507 = vpack.c.b16 %v4390, %v4389
    %v4508 = vpack.c.b16 %v4392, %v4391
    %v4509 = vpack.c.b16 %v4394, %v4393
    %v4510 = vpack.c.b16 %v4396, %v4395
    %v4511 = vpack.c.b16 %v4398, %v4397
    %v4512 = vpack.c.b16 %v4400, %v4399
    %v4513 = vpack.c.b16 %v4402, %v4401
    %v4514 = vpack.c.b16 %v4404, %v4403
    %v4515 = vpack.c.b16 %v4406, %v4405
    %v4516 = vpack.c.b16 %v4408, %v4407
    %v4517 = vpack.c.b16 %v4410, %v4409
    %v4518 = vpack.c.b16 %v4412, %v4411
    %v4519 = vpack.c.b16 %v4414, %v4413
    %v4520 = vpack.c.b16 %v4416, %v4415
    %v4521 = vpack.c.b16 %v4418, %v4417
    %v4522 = vpack.c.b16 %v4420, %v4419
    %v4523 = vpack.c.b16 %v4422, %v4421
    %v4524 = vpack.c.b16 %v4424, %v4423
    %v4525 = vpack.c.b16 %v4426, %v4425
    %v4526 = vpack.c.b16 %v4428, %v4427
    %v4527 = vpack.c.b16 %v4430, %v4429
    %v4528 = vpack.c.b16 %v4432, %v4431
    %v4529 = vpack.c.b16 %v4434, %v4433
    %v4530 = vpack.c.b16 %v4436, %v4435
    %v4531 = vpack.c.b16 %v4438, %v4437
    %v4532 = vpack.c.b16 %v4440, %v4439
    %v4533 = vpack.c.b16 %v4442, %v4441
    %v4534 = vpack.c.b16 %v4444, %v4443
    %v4626 = vsel %vm1495, %v3900, 0
    %4628 = vmatpush.bf16.msra.mxu0 %v4452
    %4629 = vmatpush.bf16.msra.mxu0 %v4451
    %4630 = vmatpush.bf16.msra.mxu0 %v4450
    %4631 = vmatpush.bf16.msra.mxu0 %v4449
    %4632 = vmatpush.bf16.msra.mxu0 %v4448
    %4633 = vmatpush.bf16.msra.mxu0 %v4447
    %4634 = vmatpush.bf16.msra.mxu0 %v4446
    %4635 = vmatpush.bf16.msra.mxu0 %v4445
    %4636 = vmatmul.bf16.gmra.mxu0 %v3889
    %v4637 = vpop.f32.mrf.mxu0
    %v4638 = vadd.f32 %v4083, %v4637
    %v4639 = vpop.f32.mrf.mxu0
    %4640 = vdwg.mxu0
    %4641 = vmatpush.bf16.msra.mxu0 %v4460
    %4642 = vmatpush.bf16.msra.mxu0 %v4459
    %4643 = vmatpush.bf16.msra.mxu0 %v4458
    %4644 = vmatpush.bf16.msra.mxu0 %v4457
    %4645 = vmatpush.bf16.msra.mxu0 %v4456
    %4646 = vmatpush.bf16.msra.mxu0 %v4455
    %4647 = vmatpush.bf16.msra.mxu0 %v4454
    %4648 = vmatpush.bf16.msra.mxu0 %v4453
    %4649 = vmatmul.bf16.gmra.mxu0 %v3890
    %v4650 = vpop.f32.mrf.mxu0
    %v4651 = vadd.f32 %v4638, %v4650
    %v4652 = vpop.f32.mrf.mxu0
    %4653 = vdwg.mxu0
    %4654 = vmatpush.bf16.msra.mxu0 %v4468
    %4655 = vmatpush.bf16.msra.mxu0 %v4467
    %4656 = vmatpush.bf16.msra.mxu0 %v4466
    %4657 = vmatpush.bf16.msra.mxu0 %v4465
    %4658 = vmatpush.bf16.msra.mxu0 %v4464
    %4659 = vmatpush.bf16.msra.mxu0 %v4463
    %4660 = vmatpush.bf16.msra.mxu0 %v4462
    %4661 = vmatpush.bf16.msra.mxu0 %v4461
    %4662 = vmatmul.bf16.gmra.mxu0 %v3891
    %v4663 = vpop.f32.mrf.mxu0
    %v4664 = vadd.f32 %v4651, %v4663
    %v4665 = vpop.f32.mrf.mxu0
    %4666 = vdwg.mxu0
    %4667 = vmatpush.bf16.msra.mxu0 %v4476
    %4668 = vmatpush.bf16.msra.mxu0 %v4475
    %4669 = vmatpush.bf16.msra.mxu0 %v4474
    %4670 = vmatpush.bf16.msra.mxu0 %v4473
    %4671 = vmatpush.bf16.msra.mxu0 %v4472
    %4672 = vmatpush.bf16.msra.mxu0 %v4471
    %4673 = vmatpush.bf16.msra.mxu0 %v4470
    %4674 = vmatpush.bf16.msra.mxu0 %v4469
    %4675 = vmatmul.bf16.gmra.mxu0 %v3892
    %v4676 = vpop.f32.mrf.mxu0
    %v4677 = vadd.f32 %v4664, %v4676
    %v4678 = vpop.f32.mrf.mxu0
    %4679 = vdwg.mxu0
    %4680 = vmatpush.bf16.msra.mxu0 %v4484
    %4681 = vmatpush.bf16.msra.mxu0 %v4483
    %4682 = vmatpush.bf16.msra.mxu0 %v4482
    %4683 = vmatpush.bf16.msra.mxu0 %v4481
    %4684 = vmatpush.bf16.msra.mxu0 %v4480
    %4685 = vmatpush.bf16.msra.mxu0 %v4479
    %4686 = vmatpush.bf16.msra.mxu0 %v4478
    %4687 = vmatpush.bf16.msra.mxu0 %v4477
    %4688 = vmatmul.bf16.gmra.mxu0 %v3893
    %v4689 = vpop.f32.mrf.mxu0
    %v4690 = vadd.f32 %v4677, %v4689
    %v4691 = vpop.f32.mrf.mxu0
    %4692 = vdwg.mxu0
    %4693 = vmatpush.bf16.msra.mxu0 %v4492
    %4694 = vmatpush.bf16.msra.mxu0 %v4491
    %4695 = vmatpush.bf16.msra.mxu0 %v4490
    %4696 = vmatpush.bf16.msra.mxu0 %v4489
    %4697 = vmatpush.bf16.msra.mxu0 %v4488
    %4698 = vmatpush.bf16.msra.mxu0 %v4487
    %4699 = vmatpush.bf16.msra.mxu0 %v4486
    %4700 = vmatpush.bf16.msra.mxu0 %v4485
    %4701 = vmatmul.bf16.gmra.mxu0 %v3894
    %v4702 = vpop.f32.mrf.mxu0
    %v4703 = vadd.f32 %v4690, %v4702
    %v4704 = vpop.f32.mrf.mxu0
    %4705 = vdwg.mxu0
    %4706 = vmatpush.bf16.msra.mxu0 %v4500
    %4707 = vmatpush.bf16.msra.mxu0 %v4499
    %4708 = vmatpush.bf16.msra.mxu0 %v4498
    %4709 = vmatpush.bf16.msra.mxu0 %v4497
    %4710 = vmatpush.bf16.msra.mxu0 %v4496
    %4711 = vmatpush.bf16.msra.mxu0 %v4495
    %4712 = vmatpush.bf16.msra.mxu0 %v4494
    %4713 = vmatpush.bf16.msra.mxu0 %v4493
    %4714 = vmatmul.bf16.gmra.mxu0 %v3895
    %v4715 = vpop.f32.mrf.mxu0
    %v4716 = vadd.f32 %v4703, %v4715
    %v4717 = vpop.f32.mrf.mxu0
    %4718 = vdwg.mxu0
    %4719 = vmatpush.bf16.msra.mxu0 %v4508
    %4720 = vmatpush.bf16.msra.mxu0 %v4507
    %4721 = vmatpush.bf16.msra.mxu0 %v4506
    %4722 = vmatpush.bf16.msra.mxu0 %v4505
    %4723 = vmatpush.bf16.msra.mxu0 %v4504
    %4724 = vmatpush.bf16.msra.mxu0 %v4503
    %4725 = vmatpush.bf16.msra.mxu0 %v4502
    %4726 = vmatpush.bf16.msra.mxu0 %v4501
    %4727 = vmatmul.bf16.gmra.mxu0 %v3896
    %v4728 = vpop.f32.mrf.mxu0
    %v4729 = vadd.f32 %v4716, %v4728
    %v4730 = vpop.f32.mrf.mxu0
    %4731 = vdwg.mxu0
    %4732 = vmatpush.bf16.msra.mxu0 %v4516
    %4733 = vmatpush.bf16.msra.mxu0 %v4515
    %4734 = vmatpush.bf16.msra.mxu0 %v4514
    %4735 = vmatpush.bf16.msra.mxu0 %v4513
    %4736 = vmatpush.bf16.msra.mxu0 %v4512
    %4737 = vmatpush.bf16.msra.mxu0 %v4511
    %4738 = vmatpush.bf16.msra.mxu0 %v4510
    %4739 = vmatpush.bf16.msra.mxu0 %v4509
    %4740 = vmatmul.bf16.gmra.mxu0 %v3897
    %v4741 = vpop.f32.mrf.mxu0
    %v4742 = vadd.f32 %v4729, %v4741
    %v4743 = vpop.f32.mrf.mxu0
    %4744 = vdwg.mxu0
    %4745 = vmatpush.bf16.msra.mxu0 %v4524
    %4746 = vmatpush.bf16.msra.mxu0 %v4523
    %4747 = vmatpush.bf16.msra.mxu0 %v4522
    %4748 = vmatpush.bf16.msra.mxu0 %v4521
    %4749 = vmatpush.bf16.msra.mxu0 %v4520
    %4750 = vmatpush.bf16.msra.mxu0 %v4519
    %4751 = vmatpush.bf16.msra.mxu0 %v4518
    %4752 = vmatpush.bf16.msra.mxu0 %v4517
    %4753 = vmatmul.bf16.gmra.mxu0 %v3898
    %v4754 = vpop.f32.mrf.mxu0
    %v4755 = vadd.f32 %v4742, %v4754
    %v4756 = vpop.f32.mrf.mxu0
    %4757 = vdwg.mxu0
    %4758 = vmatpush.bf16.msra.mxu0 %v4532
    %4759 = vmatpush.bf16.msra.mxu0 %v4531
    %4760 = vmatpush.bf16.msra.mxu0 %v4530
    %4761 = vmatpush.bf16.msra.mxu0 %v4529
    %4762 = vmatpush.bf16.msra.mxu0 %v4528
    %4763 = vmatpush.bf16.msra.mxu0 %v4527
    %4764 = vmatpush.bf16.msra.mxu0 %v4526
    %4765 = vmatpush.bf16.msra.mxu0 %v4525
    %4766 = vmatmul.bf16.gmra.mxu0 %v3899
    %v4767 = vpop.f32.mrf.mxu0
    %v4768 = vadd.f32 %v4755, %v4767
    %v4769 = vpop.f32.mrf.mxu0
    %4770 = vdwg.mxu0
    %4771 = vmatpush.bf16.msra.mxu0 0
    %4772 = vmatpush.bf16.msra.mxu0 0
    %4773 = vmatpush.bf16.msra.mxu0 0
    %4774 = vmatpush.bf16.msra.mxu0 0
    %4775 = vmatpush.bf16.msra.mxu0 0
    %4776 = vmatpush.bf16.msra.mxu0 0
    %4777 = vmatpush.bf16.msra.mxu0 %v4534
    %4778 = vmatpush.bf16.msra.mxu0 %v4533
    %4779 = vmatmul.bf16.gmra.mxu0 %v4626
    %v4780 = vpop.f32.mrf.mxu0
    %v4781 = vadd.f32 %v4768, %v4780
    %v4782 = vpop.f32.mrf.mxu0
    %4783 = vdwg.mxu0
    %v4784 = vmax.f32 %v4781, 0.0
    %v4785 = vpack.c.bf16 %v4784, %v4784
    %v4786 = vld [vmem:[%s9] sm:$0xf]
    %v4787 = vld [vmem:[%s9 + $0x4] sm:$0xf]
    %v4788 = vld [vmem:[%s9 + $0x8] sm:$0xf]
    %v4789 = vld [vmem:[%s9 + $0xc] sm:$0xf]
    %v4790 = vld [vmem:[%s9 + $0x10] sm:$0xf]
    %v4791 = vld [vmem:[%s9 + $0x14] sm:$0xf]
    %v4792 = vld [vmem:[%s9 + $0x18] sm:$0xf]
    %v4793 = vld [vmem:[%s9 + $0x1c] sm:$0xf]
    %v4794 = vld [vmem:[%s9 + $0x20] sm:$0xf]
    %v4795 = vld [vmem:[%s9 + $0x24] sm:$0xf]
    %v4796 = vld [vmem:[%s9 + $0x28] sm:$0xf]
    %v4797 = vld [vmem:[%s9 + $0x2c] sm:$0xf]
    %v4798 = vld [vmem:[%s9 + $0x30] sm:$0xf]
    %v4799 = vld [vmem:[%s9 + $0x34] sm:$0xf]
    %v4800 = vld [vmem:[%s9 + $0x38] sm:$0xf]
    %v4801 = vld [vmem:[%s9 + $0x3c] sm:$0xf]
    %v4802 = vld [vmem:[%s10] sm:$0x1]
    %v4804 = vperm.slane %v4802, 0
    %v4822 = vunpack.c.l.b16 %v4786
    %v4823 = vunpack.c.l.b16 %v4787
    %v4824 = vunpack.c.l.b16 %v4788
    %v4825 = vunpack.c.l.b16 %v4789
    %v4826 = vunpack.c.l.b16 %v4790
    %v4827 = vunpack.c.l.b16 %v4791
    %v4828 = vunpack.c.l.b16 %v4792
    %v4829 = vunpack.c.l.b16 %v4793
    %v4830 = vunpack.c.l.b16 %v4794
    %v4831 = vunpack.c.l.b16 %v4795
    %v4832 = vunpack.c.l.b16 %v4796
    %v4833 = vunpack.c.l.b16 %v4797
    %v4834 = vunpack.c.l.b16 %v4798
    %v4835 = vunpack.c.l.b16 %v4799
    %v4836 = vunpack.c.l.b16 %v4800
    %v4837 = vunpack.c.l.b16 %v4801
    %v4838 = vpack.c.b16 %v4823, %v4822
    %v4839 = vpack.c.b16 %v4825, %v4824
    %v4840 = vpack.c.b16 %v4827, %v4826
    %v4841 = vpack.c.b16 %v4829, %v4828
    %v4842 = vpack.c.b16 %v4831, %v4830
    %v4843 = vpack.c.b16 %v4833, %v4832
    %v4844 = vpack.c.b16 %v4835, %v4834
    %v4845 = vpack.c.b16 %v4837, %v4836
    %4854 = vmatpush.bf16.msra.mxu0 %v4845
    %4855 = vmatpush.bf16.msra.mxu0 %v4844
    %4856 = vmatpush.bf16.msra.mxu0 %v4843
    %4857 = vmatpush.bf16.msra.mxu0 %v4842
    %4858 = vmatpush.bf16.msra.mxu0 %v4841
    %4859 = vmatpush.bf16.msra.mxu0 %v4840
    %4860 = vmatpush.bf16.msra.mxu0 %v4839
    %4861 = vmatpush.bf16.msra.mxu0 %v4838
    %4862 = vmatmul.bf16.gmra.mxu0 %v4785
    %v4863 = vpop.f32.mrf.mxu0
    %v4864 = vadd.f32 %v4804, %v4863
    %v4865 = vpop.f32.mrf.mxu0
    %4866 = vdwg.mxu0
    %v4867 = vmax.f32 %v4864, 0.0
    %v4868 = vpack.c.bf16 %v4867, %v4867
    %v4869 = vld [vmem:[%s11] sm:$0xf]
    %v4870 = vld [vmem:[%s11 + $0x4] sm:$0xf]
    %v4871 = vld [vmem:[%s11 + $0x8] sm:$0xf]
    %v4872 = vld [vmem:[%s11 + $0xc] sm:$0xf]
    %v4873 = vld [vmem:[%s11 + $0x10] sm:$0xf]
    %v4874 = vld [vmem:[%s11 + $0x14] sm:$0xf]
    %v4875 = vld [vmem:[%s11 + $0x18] sm:$0xf]
    %v4876 = vld [vmem:[%s11 + $0x1c] sm:$0xf]
    %v4877 = vld [vmem:[%s11 + $0x20] sm:$0xf]
    %v4878 = vld [vmem:[%s11 + $0x24] sm:$0xf]
    %v4879 = vld [vmem:[%s11 + $0x28] sm:$0xf]
    %v4880 = vld [vmem:[%s11 + $0x2c] sm:$0xf]
    %v4881 = vld [vmem:[%s11 + $0x30] sm:$0xf]
    %v4882 = vld [vmem:[%s11 + $0x34] sm:$0xf]
    %v4883 = vld [vmem:[%s11 + $0x38] sm:$0xf]
    %v4884 = vld [vmem:[%s11 + $0x3c] sm:$0xf]
    %v4885 = vld [vmem:[%s12] sm:$0x1]
    %v4887 = vperm.slane %v4885, 0
    %v4905 = vunpack.c.l.b16 %v4869
    %v4906 = vunpack.c.l.b16 %v4870
    %v4907 = vunpack.c.l.b16 %v4871
    %v4908 = vunpack.c.l.b16 %v4872
    %v4909 = vunpack.c.l.b16 %v4873
    %v4910 = vunpack.c.l.b16 %v4874
    %v4911 = vunpack.c.l.b16 %v4875
    %v4912 = vunpack.c.l.b16 %v4876
    %v4913 = vunpack.c.l.b16 %v4877
    %v4914 = vunpack.c.l.b16 %v4878
    %v4915 = vunpack.c.l.b16 %v4879
    %v4916 = vunpack.c.l.b16 %v4880
    %v4917 = vunpack.c.l.b16 %v4881
    %v4918 = vunpack.c.l.b16 %v4882
    %v4919 = vunpack.c.l.b16 %v4883
    %v4920 = vunpack.c.l.b16 %v4884
    %v4921 = vpack.c.b16 %v4906, %v4905
    %v4922 = vpack.c.b16 %v4908, %v4907
    %v4923 = vpack.c.b16 %v4910, %v4909
    %v4924 = vpack.c.b16 %v4912, %v4911
    %v4925 = vpack.c.b16 %v4914, %v4913
    %v4926 = vpack.c.b16 %v4916, %v4915
    %v4927 = vpack.c.b16 %v4918, %v4917
    %v4928 = vpack.c.b16 %v4920, %v4919
    %4937 = vmatpush.bf16.msra.mxu0 %v4928
    %4938 = vmatpush.bf16.msra.mxu0 %v4927
    %4939 = vmatpush.bf16.msra.mxu0 %v4926
    %4940 = vmatpush.bf16.msra.mxu0 %v4925
    %4941 = vmatpush.bf16.msra.mxu0 %v4924
    %4942 = vmatpush.bf16.msra.mxu0 %v4923
    %4943 = vmatpush.bf16.msra.mxu0 %v4922
    %4944 = vmatpush.bf16.msra.mxu0 %v4921
    %4945 = vmatmul.bf16.gmra.mxu0 %v4868
    %v4946 = vpop.f32.mrf.mxu0
    %v4947 = vadd.f32 %v4887, %v4946
    %v4948 = vpop.f32.mrf.mxu0
    %4949 = vdwg.mxu0
    %vm4950 = vcmask 9216
    %4951 = vst.msk [vmem:[#allocation9] sm:$0x3] %vm4950, %v4947
    // Predicated region
    $region58: #{convnet_forward.1} parent=1 // pred_check
      _
    $region59: #{convnet_forward.1} parent=1 // pred_check_branch
      %4953 = sbr.rel (0) target = $region61
    $region60: #{convnet_forward.1} parent=1 // pred_region
      %4955 = vsyncadd [#allocation8], 0
      %s4957 = sshll.u32 [#allocation9], 4
      %s4958 = int_to_ptr.vmem [resolvable:$true] %s4957
      %s4959 = sshll.u32 %s13, 4
      %s4960 = int_to_ptr.hbm [resolvable:$true] %s4959
      %4962 = dma.vmem_to_hbm [thread:$0]  %s4958, 32, %s4960, [#allocation8]
    $region61: #{convnet_forward.1} parent=1 // pred_fallthru
      _
    // Predicated region
    $region62: #{convnet_forward.1} parent=1 // pred_check
      _
    $region63: #{convnet_forward.1} parent=1 // pred_check_branch
      %4964 = sbr.rel (0) target = $region65
    $region64: #{convnet_forward.1} parent=1 // pred_region
      %4966 = dma.done [#allocation8], 32
    $region65: #{convnet_forward.1} parent=1 // pred_fallthru
      _
    %4967 = vsyncpa [#allocation7], 1
    %4968 = vsyncpa [#allocation8], 1

</llo_original>
